<compile_context>
chip_gen: v7x
topology: tpu7x:2x2x1
jax: 0.10.0
libtpu: 0.0.40
codegen_flags: <defaults>
</compile_context>

<pallas_src>
import functools
import math

import numpy as np
import jax
import jax.numpy as jnp
from jax.experimental import pallas as pl
from jax.experimental.pallas import tpu as pltpu


def _pick_vmem_limit():
    # Generation-aware scoped-VMEM budget: ~60% of physical, capped at 64 MiB
    # (v5e/v6e have 128 MiB, v7x only 64 MiB per TensorCore).
    try:
        cap = int(pltpu.get_tpu_info().vmem_capacity_bytes)
        if cap <= 0:
            raise ValueError
        return max(32 * 1024 * 1024, min(64 * 1024 * 1024, int(cap * 0.6)))
    except Exception:
        return 40 * 1024 * 1024


VMEM_LIMIT = _pick_vmem_limit()
_SQRT_HALF = 0.7071067811865476
MLP_HIDDEN_CHUNK = 512   # lanes of the MLP hidden dim processed per inner step


def _gelu_f32(y):
    # exact (erf) GELU, matching torch.nn.GELU default; done in f32 vregs
    return 0.5 * y * (1.0 + jax.lax.erf(y * _SQRT_HALF))


def _round_up(v, m):
    return ((v + m - 1) // m) * m


def _tile(dim, max_tile, align):
    """Pick a tile size and padded extent.  Either tile == padded dim (full) or the
    tile is the aligned cap, so (8,128)/(16,128) BlockSpec constraints always hold."""
    t = min(max_tile, _round_up(dim, align))
    return t, _round_up(dim, t)


def _pad2(a, rows, cols, dtype):
    a = a.astype(dtype)
    r, c = a.shape
    if r == rows and c == cols:
        return a
    return jnp.pad(a, ((0, rows - r), (0, cols - c)))


# ----------------------------------------------------------------------------
# Kernel 1: tiled matmul (+ optional bias) with f32 VMEM accumulator
#   Used for the standalone patch-embed linear.
# ----------------------------------------------------------------------------
def _mm_kernel(*refs, has_bias):
    if has_bias:
        x_ref, w_ref, b_ref, o_ref, acc_ref = refs
    else:
        x_ref, w_ref, o_ref, acc_ref = refs
        b_ref = None
    k = pl.program_id(2)

    @pl.when(k == 0)
    def _():
        acc_ref[...] = jnp.zeros_like(acc_ref)

    acc_ref[...] += jnp.dot(x_ref[...], w_ref[...],
                            preferred_element_type=jnp.float32)

    @pl.when(k == pl.num_programs(2) - 1)
    def _():
        y = acc_ref[...]
        if b_ref is not None:
            y = y + b_ref[...]
        o_ref[...] = y.astype(o_ref.dtype)


def linear(x, w, b=None, out_dtype=jnp.bfloat16):
    """x: (..., K) -> (..., N).  bf16 operands, f32 accumulation, tiled over (M,N,K)."""
    shp = x.shape
    K = shp[-1]
    N = w.shape[1]
    M = int(np.prod(shp[:-1]))

    tm, Mp = _tile(M, 512, 16)
    tk, Kp = _tile(K, 256, 128)
    tn, Npad = _tile(N, 512, 128)

    x2 = _pad2(x.reshape(M, K), Mp, Kp, jnp.bfloat16)
    w2 = _pad2(w, Kp, Npad, jnp.bfloat16)

    in_specs = [pl.BlockSpec((tm, tk), lambda i, j, k: (i, k)),
                pl.BlockSpec((tk, tn), lambda i, j, k: (k, j))]
    args = [x2, w2]
    if b is not None:
        in_specs.append(pl.BlockSpec((1, tn), lambda i, j, k: (0, j)))
        args.append(_pad2(b.reshape(1, N), 1, Npad, jnp.float32))

    out = pl.pallas_call(
        functools.partial(_mm_kernel, has_bias=b is not None),
        out_shape=jax.ShapeDtypeStruct((Mp, Npad), out_dtype),
        grid=(Mp // tm, Npad // tn, Kp // tk),
        in_specs=in_specs,
        out_specs=pl.BlockSpec((tm, tn), lambda i, j, k: (i, j)),
        scratch_shapes=[pltpu.VMEM((tm, tn), jnp.float32)],
        compiler_params=pltpu.CompilerParams(
            dimension_semantics=("parallel", "parallel", "arbitrary"),
            vmem_limit_bytes=VMEM_LIMIT),
    )(*args)
    return out[:M, :N].reshape(*shp[:-1], N)


# ----------------------------------------------------------------------------
# Kernel 2: fused LayerNorm + matmul (+ optional bias)
#   Used for enc_norm->encoder_to_decoder and dec_norm->head.
#   Grid tiles rows AND the output (N) axis; LN stats are recomputed per N-tile
#   (trivial VPU cost), keeping the per-step weight block bounded and the output
#   stores lane-dense.
# ----------------------------------------------------------------------------
def _ln_mm_kernel(*refs, eps, has_bias):
    if has_bias:
        x_ref, g_ref, bt_ref, w_ref, bias_ref, o_ref = refs
    else:
        x_ref, g_ref, bt_ref, w_ref, o_ref = refs
        bias_ref = None
    x = x_ref[...].astype(jnp.float32)
    mu = jnp.mean(x, axis=-1, keepdims=True)
    cen = x - mu
    var = jnp.mean(cen * cen, axis=-1, keepdims=True)
    xn = cen * jax.lax.rsqrt(var + eps) * g_ref[...] + bt_ref[...]
    y = jnp.dot(xn.astype(jnp.bfloat16), w_ref[...],
                preferred_element_type=jnp.float32)
    if bias_ref is not None:
        y = y + bias_ref[...]
    o_ref[...] = y.astype(o_ref.dtype)


def ln_linear(x2, g, bt, w, b=None, eps=1e-6, out_dtype=jnp.bfloat16):
    """x2: (M, K) -> LN over K, then @ w (K, N) (+ b)."""
    M, K = x2.shape
    N = w.shape[1]
    tm, Mp = _tile(M, 256, 16)
    tn, Npad = _tile(N, 512, 128)
    x2p = _pad2(x2, Mp, K, jnp.bfloat16)
    wp = _pad2(w, K, Npad, jnp.bfloat16)

    in_specs = [pl.BlockSpec((tm, K), lambda i, j: (i, 0)),
                pl.BlockSpec((1, K), lambda i, j: (0, 0)),
                pl.BlockSpec((1, K), lambda i, j: (0, 0)),
                pl.BlockSpec((K, tn), lambda i, j: (0, j))]
    args = [x2p,
            g.reshape(1, K).astype(jnp.float32),
            bt.reshape(1, K).astype(jnp.float32),
            wp]
    if b is not None:
        in_specs.append(pl.BlockSpec((1, tn), lambda i, j: (0, j)))
        args.append(_pad2(b.reshape(1, N), 1, Npad, jnp.float32))

    out = pl.pallas_call(
        functools.partial(_ln_mm_kernel, eps=eps, has_bias=b is not None),
        out_shape=jax.ShapeDtypeStruct((Mp, Npad), out_dtype),
        grid=(Mp // tm, Npad // tn),
        in_specs=in_specs,
        out_specs=pl.BlockSpec((tm, tn), lambda i, j: (i, j)),
        compiler_params=pltpu.CompilerParams(
            dimension_semantics=("parallel", "parallel"),
            vmem_limit_bytes=VMEM_LIMIT),
    )(*args)
    return out[:M, :N]


# ----------------------------------------------------------------------------
# Kernel 3: fused LN1 + QKV + multi-head attention + projection + bias + residual.
#   One batch element per grid step.  The qkv slab lives only in a bf16 VMEM
#   scratch; per-head attention outputs are concatenated into a bf16 (N, D) VMEM
#   scratch, then projected with a single K=D matmul.  Padded key tokens are
#   masked once per grid step (hoisted out of the head loop).
# ----------------------------------------------------------------------------
def _attn_block_kernel(x_ref, g_ref, bt_ref, qkvw_ref, pw_ref, pb_ref, o_ref,
                       qkv_scr, attn_scr, *, num_heads, dh, n_valid, scale, eps):
    x = x_ref[0].astype(jnp.float32)                       # (N, D)
    n_tok = x.shape[0]
    d = num_heads * dh

    # LayerNorm (f32 stats)
    mu = jnp.mean(x, axis=-1, keepdims=True)
    cen = x - mu
    var = jnp.mean(cen * cen, axis=-1, keepdims=True)
    xn = (cen * jax.lax.rsqrt(var + eps) * g_ref[...] + bt_ref[...]).astype(jnp.bfloat16)

    # QKV slab computed directly into VMEM scratch (never written to HBM)
    qkv_scr[...] = jnp.dot(xn, qkvw_ref[...],
                           preferred_element_type=jnp.float32).astype(jnp.bfloat16)

    # key-padding mask, hoisted out of the head loop (static no-op when no padding)
    need_mask = n_valid < n_tok
    if need_mask:
        kmask = jax.lax.broadcasted_iota(jnp.int32, (n_tok, n_tok), 1) < n_valid

    for h in range(num_heads):
        q = qkv_scr[:, h * dh:(h + 1) * dh]
        k = qkv_scr[:, d + h * dh:d + (h + 1) * dh]
        v = qkv_scr[:, 2 * d + h * dh:2 * d + (h + 1) * dh]
        # q @ k^T without transposing k (contract the last dims on the MXU)
        s = jax.lax.dot_general(q, k, (((1,), (1,)), ((), ())),
                                preferred_element_type=jnp.float32) * scale
        if need_mask:
            s = jnp.where(kmask, s, -1e30)
        s = s - jnp.max(s, axis=-1, keepdims=True)
        p = jnp.exp(s)
        inv = 1.0 / jnp.sum(p, axis=-1, keepdims=True)     # exact (PyTorch parity)
        attn_scr[:, h * dh:(h + 1) * dh] = jnp.dot(
            (p * inv).astype(jnp.bfloat16), v,
            preferred_element_type=jnp.float32).astype(jnp.bfloat16)

    # single full-depth (K = D) projection + bias + residual; the residual is re-read
    # here so no f32 (N, D) copy of x is live across the softmax loop.
    y = jnp.dot(attn_scr[...], pw_ref[...], preferred_element_type=jnp.float32)
    o_ref[0] = (y + pb_ref[...] + x_ref[0].astype(jnp.float32)).astype(o_ref.dtype)


def attn_block_fused(x_pad, p, num_heads, n_valid, ln_eps):
    B, Npad, D = x_pad.shape
    dh = D // num_heads
    return pl.pallas_call(
        functools.partial(_attn_block_kernel, num_heads=num_heads, dh=dh,
                          n_valid=n_valid, scale=float(dh) ** -0.5, eps=ln_eps),
        out_shape=jax.ShapeDtypeStruct((B, Npad, D), jnp.bfloat16),
        grid=(B,),
        in_specs=[pl.BlockSpec((1, Npad, D), lambda b: (b, 0, 0)),
                  pl.BlockSpec((1, D), lambda b: (0, 0)),
                  pl.BlockSpec((1, D), lambda b: (0, 0)),
                  pl.BlockSpec((D, 3 * D), lambda b: (0, 0)),
                  pl.BlockSpec((D, D), lambda b: (0, 0)),
                  pl.BlockSpec((1, D), lambda b: (0, 0))],
        out_specs=pl.BlockSpec((1, Npad, D), lambda b: (b, 0, 0)),
        scratch_shapes=[pltpu.VMEM((Npad, 3 * D), jnp.bfloat16),
                        pltpu.VMEM((Npad, D), jnp.bfloat16)],
        compiler_params=pltpu.CompilerParams(
            dimension_semantics=("parallel",), vmem_limit_bytes=VMEM_LIMIT),
    )(x_pad,
      p["ln1_w"].reshape(1, D).astype(jnp.float32),
      p["ln1_b"].reshape(1, D).astype(jnp.float32),
      p["qkv_w"].astype(jnp.bfloat16),
      p["proj_w"].astype(jnp.bfloat16),
      p["proj_b"].reshape(1, D).astype(jnp.float32))


# ----------------------------------------------------------------------------
# Kernel 4: fused LayerNorm + MLP (fc1 -> GELU -> fc2) + residual.
#   The hidden activation never leaves VMEM; the hidden dim is processed in
#   chunks so the live f32 intermediate stays small, with an f32 VMEM
#   accumulator for the fc2 partial sums.
# ----------------------------------------------------------------------------
def _ln_mlp_kernel(x_ref, g_ref, bt_ref, w1_ref, b1_ref, w2_ref, b2_ref, o_ref,
                   acc_ref, *, eps, hd_chunk):
    x = x_ref[...].astype(jnp.float32)
    mu = jnp.mean(x, axis=-1, keepdims=True)
    cen = x - mu
    var = jnp.mean(cen * cen, axis=-1, keepdims=True)
    xn = (cen * jax.lax.rsqrt(var + eps) * g_ref[...] + bt_ref[...]).astype(jnp.bfloat16)

    # accumulator seeded with residual + fc2 bias
    acc_ref[...] = x + b2_ref[...]

    hd = w1_ref.shape[1]
    for c0 in range(0, hd, hd_chunk):
        c1 = min(c0 + hd_chunk, hd)
        h = jnp.dot(xn, w1_ref[:, c0:c1],
                    preferred_element_type=jnp.float32) + b1_ref[:, c0:c1]
        h = _gelu_f32(h)
        acc_ref[...] += jnp.dot(h.astype(jnp.bfloat16), w2_ref[c0:c1, :],
                                preferred_element_type=jnp.float32)

    o_ref[...] = acc_ref[...].astype(o_ref.dtype)


def ln_mlp_residual(x2, g, bt, w1, b1, w2, b2, eps=1e-6):
    M, D = x2.shape
    Hd = w1.shape[1]
    tm, Mp = _tile(M, 256, 16)
    x2p = _pad2(x2, Mp, D, jnp.bfloat16)
    out = pl.pallas_call(
        functools.partial(_ln_mlp_kernel, eps=eps, hd_chunk=MLP_HIDDEN_CHUNK),
        out_shape=jax.ShapeDtypeStruct((Mp, D), jnp.bfloat16),
        grid=(Mp // tm,),
        in_specs=[pl.BlockSpec((tm, D), lambda i: (i, 0)),
                  pl.BlockSpec((1, D), lambda i: (0, 0)),
                  pl.BlockSpec((1, D), lambda i: (0, 0)),
                  pl.BlockSpec((D, Hd), lambda i: (0, 0)),
                  pl.BlockSpec((1, Hd), lambda i: (0, 0)),
                  pl.BlockSpec((Hd, D), lambda i: (0, 0)),
                  pl.BlockSpec((1, D), lambda i: (0, 0))],
        out_specs=pl.BlockSpec((tm, D), lambda i: (i, 0)),
        scratch_shapes=[pltpu.VMEM((tm, D), jnp.float32)],
        compiler_params=pltpu.CompilerParams(
            dimension_semantics=("parallel",), vmem_limit_bytes=VMEM_LIMIT),
    )(x2p,
      g.reshape(1, D).astype(jnp.float32), bt.reshape(1, D).astype(jnp.float32),
      w1.astype(jnp.bfloat16), b1.reshape(1, Hd).astype(jnp.float32),
      w2.astype(jnp.bfloat16), b2.reshape(1, D).astype(jnp.float32))
    return out[:M]


# ----------------------------------------------------------------------------
# Transformer block (pre-norm, init_values=0.0 -> no layer-scale, drop*=0)
# Only 2 pallas_calls per block.
# ----------------------------------------------------------------------------
def transformer_block(x_pad, p, num_heads, n_valid, ln_eps):
    B, Npad, D = x_pad.shape
    x_pad = attn_block_fused(x_pad, p, num_heads, n_valid, ln_eps)   # (B, Npad, D)
    x2 = ln_mlp_residual(x_pad.reshape(B * Npad, D), p["ln2_w"], p["ln2_b"],
                         p["fc1_w"], p["fc1_b"], p["fc2_w"], p["fc2_b"],
                         eps=ln_eps)
    return x2.reshape(B, Npad, D)


# ----------------------------------------------------------------------------
# Non-kernel glue: sin-cos position embedding (identical to the PyTorch code)
# ----------------------------------------------------------------------------
def build_2d_sincos_position_embedding(patch_shape, embed_dim, temperature=10000.0):
    h, w = patch_shape
    grid_w = np.arange(w, dtype=np.float32)
    grid_h = np.arange(h, dtype=np.float32)
    gw, gh = np.meshgrid(grid_w, grid_h, indexing="ij")   # matches torch.meshgrid default
    assert embed_dim % 4 == 0
    pos_dim = embed_dim // 4
    omega = np.arange(pos_dim, dtype=np.float32) / pos_dim
    omega = 1.0 / (temperature ** omega)
    out_w = np.einsum("m,d->md", gw.flatten(), omega)
    out_h = np.einsum("m,d->md", gh.flatten(), omega)
    pos_emb = np.concatenate(
        [np.sin(out_w), np.cos(out_w), np.sin(out_h), np.cos(out_h)], axis=1)[None]
    pe_token = np.zeros([1, 1, embed_dim], dtype=np.float32)
    return jnp.asarray(np.concatenate([pe_token, pos_emb], axis=1))


# ----------------------------------------------------------------------------
# Deterministic parameter init (shapes follow the module's __init__)
# ----------------------------------------------------------------------------
class KeyGen:
    def __init__(self, seed=0):
        self.key = jax.random.PRNGKey(seed)

    def __call__(self):
        self.key, sub = jax.random.split(self.key)
        return sub


def xavier_uniform(kg, fan_in, fan_out):
    val = math.sqrt(6.0 / (fan_in + fan_out))
    return jax.random.uniform(kg(), (fan_in, fan_out), jnp.float32, -val, val)


def qkv_uniform(kg, dim):
    val = math.sqrt(6.0 / float(dim + dim))          # out//3 + in
    return jax.random.uniform(kg(), (dim, 3 * dim), jnp.float32, -val, val)


def init_block_params(kg, dim, mlp_ratio):
    hidden = int(dim * mlp_ratio)
    return {
        "ln1_w": jnp.ones((dim,), jnp.float32),
        "ln1_b": jnp.zeros((dim,), jnp.float32),
        "qkv_w": qkv_uniform(kg, dim).astype(jnp.bfloat16),   # qkv_bias=False (module default)
        "proj_w": xavier_uniform(kg, dim, dim).astype(jnp.bfloat16),
        "proj_b": jnp.zeros((dim,), jnp.float32),
        "ln2_w": jnp.ones((dim,), jnp.float32),
        "ln2_b": jnp.zeros((dim,), jnp.float32),
        "fc1_w": xavier_uniform(kg, dim, hidden).astype(jnp.bfloat16),
        "fc1_b": jnp.zeros((hidden,), jnp.float32),
        "fc2_w": xavier_uniform(kg, hidden, dim).astype(jnp.bfloat16),
        "fc2_b": jnp.zeros((dim,), jnp.float32),
    }


def init_model_params(kg, cfg):
    p = cfg["patch_size"]
    C = cfg["in_chans"]
    gh = gw = cfg["img_size"] // p
    enc_dim, dec_dim = cfg["enc_dim"], cfg["dec_dim"]

    patch_val = math.sqrt(6.0 / float(3 * p * p + enc_dim))
    return {
        "patch_w": jax.random.uniform(kg(), (C * p * p, enc_dim), jnp.float32,
                                      -patch_val, patch_val).astype(jnp.bfloat16),
        "patch_b": jnp.zeros((enc_dim,), jnp.float32),
        "cls_token": jnp.clip(0.02 * jax.random.normal(kg(), (1, 1, enc_dim)),
                              -0.02, 0.02).astype(jnp.float32),
        "pos_embed_enc": build_2d_sincos_position_embedding((gh, gw), enc_dim),
        "enc_blocks": [init_block_params(kg, enc_dim, cfg["mlp_ratio"])
                       for _ in range(cfg["enc_depth"])],
        "enc_norm_w": jnp.ones((enc_dim,), jnp.float32),
        "enc_norm_b": jnp.zeros((enc_dim,), jnp.float32),
        "e2d_w": xavier_uniform(kg, enc_dim, dec_dim).astype(jnp.bfloat16),
        "e2d_b": jnp.zeros((dec_dim,), jnp.float32),
        "mask_token": jnp.clip(0.02 * jax.random.normal(kg(), (1, 1, dec_dim)),
                               -0.02, 0.02).astype(jnp.float32),
        "pos_embed_dec": build_2d_sincos_position_embedding((gh, gw), dec_dim),
        "dec_blocks": [init_block_params(kg, dec_dim, cfg["mlp_ratio"])
                       for _ in range(cfg["dec_depth"])],
        "dec_norm_w": jnp.ones((dec_dim,), jnp.float32),
        "dec_norm_b": jnp.zeros((dec_dim,), jnp.float32),
        "head_w": xavier_uniform(kg, dec_dim, 3 * p * p).astype(jnp.bfloat16),
        "head_b": jnp.zeros((3 * p * p,), jnp.float32),
    }


# ----------------------------------------------------------------------------
# Full forward pass (mirrors PretrainVisionTransformer.forward)
# ----------------------------------------------------------------------------
def pretrain_vit_forward(x_nchw, mask_np, params, cfg):
    B, C, H, W = x_nchw.shape
    p = cfg["patch_size"]
    gh, gw = H // p, W // p
    Np = gh * gw
    enc_dim, dec_dim = cfg["enc_dim"], cfg["dec_dim"]
    ln_eps = cfg["ln_eps"]

    # ---- encoder: patch embed (Conv2d stride=kernel -> patch-flatten + tiled matmul) ----
    patches = (x_nchw.reshape(B, C, gh, p, gw, p)
               .transpose(0, 2, 4, 1, 3, 5)                       # (B, gh, gw, C, p, p)
               .reshape(B, Np, C * p * p))
    x = linear(patches, params["patch_w"], params["patch_b"])      # (B, Np, enc_dim) bf16

    cls = jnp.broadcast_to(params["cls_token"], (B, 1, enc_dim))
    x = jnp.concatenate([cls, x.astype(jnp.float32)], axis=1) + params["pos_embed_enc"]

    # boolean masking with a static (host) mask -> static gather indices
    # (assumes every batch row masks the same number of patches, like the PyTorch reshape)
    vis_idx = np.stack([np.where(~mask_np[b])[0] for b in range(B)])   # (B, Nvis)
    msk_idx = np.stack([np.where(mask_np[b])[0] for b in range(B)])    # (B, Nmask)
    n_vis, n_mask = vis_idx.shape[1], msk_idx.shape[1]
    vis_idx_j = jnp.asarray(vis_idx)
    msk_idx_j = jnp.asarray(msk_idx)
    # TODO(synk): fuse this gather + pos-embed add into the first encoder block's kernel
    #             via PrefetchScalarGridSpec row index maps.

    x_vis = jnp.take_along_axis(x[:, 1:], vis_idx_j[:, :, None], axis=1)
    x = jnp.concatenate([x[:, :1], x_vis], axis=1)                 # (B, 1+Nvis, enc_dim)

    # pad token axis to a multiple of 16 (bf16 sublane packing); padded keys masked in attn
    n_enc = 1 + n_vis
    n_enc_pad = _round_up(n_enc, 16)
    x = jnp.pad(x, ((0, 0), (0, n_enc_pad - n_enc), (0, 0))).astype(jnp.bfloat16)

    for blk in params["enc_blocks"]:
        x = transformer_block(x, blk, cfg["enc_heads"], n_valid=n_enc, ln_eps=ln_eps)

    # ---- fused encoder-final-LN + encoder_to_decoder linear (encoder head = Identity) ----
    x = ln_linear(x.reshape(B * n_enc_pad, enc_dim),
                  params["enc_norm_w"], params["enc_norm_b"],
                  params["e2d_w"], b=params["e2d_b"], eps=ln_eps)
    x = x.reshape(B, n_enc_pad, dec_dim)
    x_vis = x[:, 1:n_enc].astype(jnp.float32)                      # drop cls + padding

    pe = jnp.broadcast_to(params["pos_embed_dec"][:, 1:], (B, Np, dec_dim))
    pe_vis = jnp.take_along_axis(pe, vis_idx_j[:, :, None], axis=1)
    pe_msk = jnp.take_along_axis(pe, msk_idx_j[:, :, None], axis=1)

    x_full = jnp.concatenate(
        [x_vis + pe_vis, params["mask_token"] + pe_msk], axis=1)   # (B, Np, dec_dim)

    # ---- decoder ----
    n_dec_pad = _round_up(Np, 16)
    y = jnp.pad(x_full, ((0, 0), (0, n_dec_pad - Np), (0, 0))).astype(jnp.bfloat16)
    for blk in params["dec_blocks"]:
        y = transformer_block(y, blk, cfg["dec_heads"], n_valid=Np, ln_eps=ln_eps)

    y = y[:, :Np][:, -n_mask:]                                     # (B, Nmask, dec_dim)

    # ---- fused decoder-final-LN + prediction head ----
    out = ln_linear(y.reshape(B * n_mask, dec_dim),
                    params["dec_norm_w"], params["dec_norm_b"],
                    params["head_w"], b=params["head_b"], eps=ln_eps,
                    out_dtype=jnp.float32)
    return out.reshape(B, n_mask, 3 * p * p)


# ----------------------------------------------------------------------------
if __name__ == "__main__":
    cfg = dict(
        img_size=16,
        patch_size=8,       # -> 2x2 = 4 patches, decoder_num_classes = 3*8*8 = 192
        in_chans=3,
        enc_dim=32,
        enc_depth=2,
        enc_heads=4,
        dec_dim=32,
        dec_depth=2,
        dec_heads=4,
        mlp_ratio=4.0,
        ln_eps=1e-6,        # VideoMAE factories use partial(nn.LayerNorm, eps=1e-6)
    )

    kg = KeyGen(seed=0)
    params = init_model_params(kg, cfg)

    key = jax.random.PRNGKey(0)
    x = jax.random.normal(key, (2, cfg["in_chans"], cfg["img_size"], cfg["img_size"]),
                          dtype=jnp.float32)
    # boolean mask over patches (B, Np); same number of masked patches per row
    mask_np = np.array([[True, False, True, False],
                        [False, True, False, True]], dtype=bool)

    fwd = jax.jit(lambda xx, pp: pretrain_vit_forward(xx, mask_np, pp, cfg))
    out = jax.block_until_ready(fwd(x, params))
    assert out.shape == (2, 2, 3 * cfg["patch_size"] ** 2)
    assert bool(jnp.all(jnp.isfinite(out)))
    print("KERNEL_OK")
</pallas_src>

<mosaic_0001>
module attributes {stable_mosaic.version = 11 : i64} {
  func.func @_mm_kernel(%arg0: i32, %arg1: i32, %arg2: i32, %arg3: memref<16x256xbf16, #tpu.memory_space<vmem>>, %arg4: memref<256x128xbf16, #tpu.memory_space<vmem>>, %arg5: memref<1x128xf32, #tpu.memory_space<vmem>>, %arg6: memref<16x128xbf16, #tpu.memory_space<vmem>>, %arg7: memref<16x128xf32, #tpu.memory_space<vmem>>) attributes {dimension_semantics = [#tpu.dimension_semantics<parallel>, #tpu.dimension_semantics<parallel>, #tpu.dimension_semantics<arbitrary>], iteration_bounds = array<i64: 1, 1, 1>, scalar_prefetch = 0 : i64, scratch_operands = 1 : i64, tpu.core_type = #tpu.core_type<tc>, window_params = [{transform_indices = @transform_0, window_bounds = array<i64: 16, 256>}, {transform_indices = @transform_1, window_bounds = array<i64: 256, 128>}, {transform_indices = @transform_2, window_bounds = array<i64: 1, 128>}, {transform_indices = @transform_3, window_bounds = array<i64: 16, 128>}]} {
    %c0_i32 = arith.constant 0 : i32
    %0 = arith.cmpi eq, %arg2, %c0_i32 : i32
    %1 = arith.extui %0 : i1 to i32
    %c0_i32_0 = arith.constant 0 : i32
    %2 = arith.cmpi ne, %1, %c0_i32_0 : i32
    scf.if %2 {
      %cst_10 = arith.constant 0.000000e+00 : f32
      %12 = vector.broadcast %cst_10 : f32 to vector<16x128xf32>
      %c0_11 = arith.constant 0 : index
      %c0_12 = arith.constant 0 : index
      %13 = vector.load %arg7[%c0_11, %c0_12] : memref<16x128xf32, #tpu.memory_space<vmem>>, vector<16x128xf32>
      tpu.vector_store %arg7[%c0_11, %c0_12], %12 {strides = array<i32>} : memref<16x128xf32, #tpu.memory_space<vmem>>, vector<16x128xf32>,
    } else {
    }
    %c0 = arith.constant 0 : index
    %c0_1 = arith.constant 0 : index
    %3 = vector.load %arg7[%c0, %c0_1] : memref<16x128xf32, #tpu.memory_space<vmem>>, vector<16x128xf32>
    %c0_2 = arith.constant 0 : index
    %c0_3 = arith.constant 0 : index
    %4 = vector.load %arg3[%c0_2, %c0_3] : memref<16x256xbf16, #tpu.memory_space<vmem>>, vector<16x256xbf16>
    %c0_4 = arith.constant 0 : index
    %c0_5 = arith.constant 0 : index
    %5 = vector.load %arg4[%c0_4, %c0_5] : memref<256x128xbf16, #tpu.memory_space<vmem>>, vector<256x128xbf16>
    %cst = arith.constant dense<0.000000e+00> : vector<16x128xf32>
    %6 = tpu.matmul %4, %5, %cst {dimension_numbers = #tpu.dot_dimension_numbers<[1], [0], [0], [1], [0, 0, 1, 1], [], []>} : vector<16x256xbf16>, vector<256x128xbf16>, vector<16x128xf32> -> vector<16x128xf32>
    %7 = arith.addf %3, %6 : vector<16x128xf32>
    %c0_6 = arith.constant 0 : index
    %c0_7 = arith.constant 0 : index
    %8 = vector.load %arg7[%c0_6, %c0_7] : memref<16x128xf32, #tpu.memory_space<vmem>>, vector<16x128xf32>
    tpu.vector_store %arg7[%c0_6, %c0_7], %7 {strides = array<i32>} : memref<16x128xf32, #tpu.memory_space<vmem>>, vector<16x128xf32>,
    %c0_i32_8 = arith.constant 0 : i32
    %9 = arith.cmpi eq, %arg2, %c0_i32_8 : i32
    %10 = arith.extui %9 : i1 to i32
    %c0_i32_9 = arith.constant 0 : i32
    %11 = arith.cmpi ne, %10, %c0_i32_9 : i32
    scf.if %11 {
      %c0_10 = arith.constant 0 : index
      %c0_11 = arith.constant 0 : index
      %12 = vector.load %arg7[%c0_10, %c0_11] : memref<16x128xf32, #tpu.memory_space<vmem>>, vector<16x128xf32>
      %c0_12 = arith.constant 0 : index
      %c0_13 = arith.constant 0 : index
      %13 = vector.load %arg5[%c0_12, %c0_13] : memref<1x128xf32, #tpu.memory_space<vmem>>, vector<1x128xf32>
      %14 = vector.broadcast %13 : vector<1x128xf32> to vector<16x128xf32>
      %15 = arith.addf %12, %14 : vector<16x128xf32>
      %16 = arith.truncf %15 : vector<16x128xf32> to vector<16x128xbf16>
      %c0_14 = arith.constant 0 : index
      %c0_15 = arith.constant 0 : index
      %17 = vector.load %arg6[%c0_14, %c0_15] : memref<16x128xbf16, #tpu.memory_space<vmem>>, vector<16x128xbf16>
      tpu.vector_store %arg6[%c0_14, %c0_15], %16 {strides = array<i32>} : memref<16x128xbf16, #tpu.memory_space<vmem>>, vector<16x128xbf16>,
    } else {
    }
    return
  }
  func.func @transform_0(%arg0: i32, %arg1: i32, %arg2: i32) -> (i32, i32) {
    %c0_i32 = arith.constant 0 : i32
    return %arg0, %arg2 : i32, i32
  }
  func.func @transform_1(%arg0: i32, %arg1: i32, %arg2: i32) -> (i32, i32) {
    %c0_i32 = arith.constant 0 : i32
    return %arg2, %arg1 : i32, i32
  }
  func.func @transform_2(%arg0: i32, %arg1: i32, %arg2: i32) -> (i32, i32) {
    %c0_i32 = arith.constant 0 : i32
    %c0_i32_0 = arith.constant 0 : i32
    return %c0_i32, %arg1 : i32, i32
  }
  func.func @transform_3(%arg0: i32, %arg1: i32, %arg2: i32) -> (i32, i32) {
    %c0_i32 = arith.constant 0 : i32
    return %arg0, %arg1 : i32, i32
  }
}

module attributes {stable_mosaic.version = 11 : i64} {
  func.func @_attn_block_kernel(%arg0: i32, %arg1: memref<1x16x32xbf16, #tpu.memory_space<vmem>>, %arg2: memref<1x32xf32, #tpu.memory_space<vmem>>, %arg3: memref<1x32xf32, #tpu.memory_space<vmem>>, %arg4: memref<32x96xbf16, #tpu.memory_space<vmem>>, %arg5: memref<32x32xbf16, #tpu.memory_space<vmem>>, %arg6: memref<1x32xf32, #tpu.memory_space<vmem>>, %arg7: memref<1x16x32xbf16, #tpu.memory_space<vmem>>, %arg8: memref<16x96xbf16, #tpu.memory_space<vmem>>, %arg9: memref<16x32xbf16, #tpu.memory_space<vmem>>) attributes {dimension_semantics = [#tpu.dimension_semantics<parallel>], iteration_bounds = array<i64: 2>, scalar_prefetch = 0 : i64, scratch_operands = 2 : i64, tpu.core_type = #tpu.core_type<tc>, window_params = [{transform_indices = @transform_0, window_bounds = array<i64: 1, 16, 32>}, {pipeline_mode = #tpu.pipeline_mode<synchronous>, transform_indices = @transform_1, window_bounds = array<i64: 1, 32>}, {pipeline_mode = #tpu.pipeline_mode<synchronous>, transform_indices = @transform_2, window_bounds = array<i64: 1, 32>}, {pipeline_mode = #tpu.pipeline_mode<synchronous>, transform_indices = @transform_3, window_bounds = array<i64: 32, 96>}, {pipeline_mode = #tpu.pipeline_mode<synchronous>, transform_indices = @transform_4, window_bounds = array<i64: 32, 32>}, {pipeline_mode = #tpu.pipeline_mode<synchronous>, transform_indices = @transform_5, window_bounds = array<i64: 1, 32>}, {transform_indices = @transform_6, window_bounds = array<i64: 1, 16, 32>}]} {
    %c0 = arith.constant 0 : index
    %c0_0 = arith.constant 0 : index
    %c0_1 = arith.constant 0 : index
    %0 = vector.load %arg1[%c0, %c0_0, %c0_1] : memref<1x16x32xbf16, #tpu.memory_space<vmem>>, vector<1x16x32xbf16>
    %1 = vector.shape_cast %0 : vector<1x16x32xbf16> to vector<16x32xbf16>
    %2 = arith.extf %1 : vector<16x32xbf16> to vector<16x32xf32>
    %cst = arith.constant dense<0.000000e+00> : vector<16xf32>
    %3 = vector.multi_reduction <add>, %2, %cst [1] : vector<16x32xf32> to vector<16xf32>
    %4 = vector.shape_cast %3 : vector<16xf32> to vector<16x1xf32>
    %cst_2 = arith.constant 3.200000e+01 : f32
    %5 = vector.broadcast %cst_2 : f32 to vector<16x1xf32>
    %6 = arith.divf %4, %5 : vector<16x1xf32>
    %7 = vector.broadcast %6 : vector<16x1xf32> to vector<16x32xf32>
    %8 = arith.subf %2, %7 : vector<16x32xf32>
    %9 = arith.mulf %8, %8 : vector<16x32xf32>
    %cst_3 = arith.constant dense<0.000000e+00> : vector<16xf32>
    %10 = vector.multi_reduction <add>, %9, %cst_3 [1] : vector<16x32xf32> to vector<16xf32>
    %11 = vector.shape_cast %10 : vector<16xf32> to vector<16x1xf32>
    %cst_4 = arith.constant 3.200000e+01 : f32
    %12 = vector.broadcast %cst_4 : f32 to vector<16x1xf32>
    %13 = arith.divf %11, %12 : vector<16x1xf32>
    %cst_5 = arith.constant 9.99999997E-7 : f32
    %14 = vector.broadcast %cst_5 : f32 to vector<16x1xf32>
    %15 = arith.addf %13, %14 : vector<16x1xf32>
    %16 = math.rsqrt %15 : vector<16x1xf32>
    %17 = vector.broadcast %16 : vector<16x1xf32> to vector<16x32xf32>
    %18 = arith.mulf %8, %17 : vector<16x32xf32>
    %c0_6 = arith.constant 0 : index
    %c0_7 = arith.constant 0 : index
    %19 = vector.load %arg2[%c0_6, %c0_7] : memref<1x32xf32, #tpu.memory_space<vmem>>, vector<1x32xf32>
    %20 = vector.broadcast %19 : vector<1x32xf32> to vector<16x32xf32>
    %21 = arith.mulf %18, %20 : vector<16x32xf32>
    %c0_8 = arith.constant 0 : index
    %c0_9 = arith.constant 0 : index
    %22 = vector.load %arg3[%c0_8, %c0_9] : memref<1x32xf32, #tpu.memory_space<vmem>>, vector<1x32xf32>
    %23 = vector.broadcast %22 : vector<1x32xf32> to vector<16x32xf32>
    %24 = arith.addf %21, %23 : vector<16x32xf32>
    %25 = arith.truncf %24 : vector<16x32xf32> to vector<16x32xbf16>
    %c0_10 = arith.constant 0 : index
    %c0_11 = arith.constant 0 : index
    %26 = vector.load %arg4[%c0_10, %c0_11] : memref<32x96xbf16, #tpu.memory_space<vmem>>, vector<32x96xbf16>
    %cst_12 = arith.constant dense<0.000000e+00> : vector<16x96xf32>
    %27 = tpu.matmul %25, %26, %cst_12 {dimension_numbers = #tpu.dot_dimension_numbers<[1], [0], [0], [1], [0, 0, 1, 1], [], []>} : vector<16x32xbf16>, vector<32x96xbf16>, vector<16x96xf32> -> vector<16x96xf32>
    %28 = arith.truncf %27 : vector<16x96xf32> to vector<16x96xbf16>
    %c0_13 = arith.constant 0 : index
    %c0_14 = arith.constant 0 : index
    %29 = vector.load %arg8[%c0_13, %c0_14] : memref<16x96xbf16, #tpu.memory_space<vmem>>, vector<16x96xbf16>
    tpu.vector_store %arg8[%c0_13, %c0_14], %28 {strides = array<i32>} : memref<16x96xbf16, #tpu.memory_space<vmem>>, vector<16x96xbf16>,
    %30 = tpu.iota {dimensions = array<i32: 1>} : vector<16x16xi32>
    %c3_i32 = arith.constant 3 : i32
    %31 = vector.broadcast %c3_i32 : i32 to vector<16x16xi32>
    %32 = arith.cmpi slt, %30, %31 : vector<16x16xi32>
    %c0_15 = arith.constant 0 : index
    %c0_16 = arith.constant 0 : index
    %33 = vector.load %arg8[%c0_15, %c0_16] : memref<16x96xbf16, #tpu.memory_space<vmem>>, vector<16x8xbf16>
    %c0_17 = arith.constant 0 : index
    %c32 = arith.constant 32 : index
    %34 = vector.load %arg8[%c0_17, %c32] : memref<16x96xbf16, #tpu.memory_space<vmem>>, vector<16x8xbf16>
    %c0_18 = arith.constant 0 : index
    %c64 = arith.constant 64 : index
    %35 = vector.load %arg8[%c0_18, %c64] : memref<16x96xbf16, #tpu.memory_space<vmem>>, vector<16x8xbf16>
    %cst_19 = arith.constant dense<0.000000e+00> : vector<16x16xf32>
    %36 = tpu.matmul %33, %34, %cst_19 {dimension_numbers = #tpu.dot_dimension_numbers<[1], [1], [0], [0], [0, 0, 1, 0], [], []>} : vector<16x8xbf16>, vector<16x8xbf16>, vector<16x16xf32> -> vector<16x16xf32>
    %cst_20 = arith.constant 0.353553385 : f32
    %37 = vector.broadcast %cst_20 : f32 to vector<16x16xf32>
    %38 = arith.mulf %36, %37 : vector<16x16xf32>
    %cst_21 = arith.constant -1.000000e+30 : f32
    %39 = vector.broadcast %cst_21 : f32 to vector<16x16xf32>
    %40 = arith.select %32, %38, %39 : vector<16x16xi1>, vector<16x16xf32>
    %cst_22 = arith.constant dense<0xFF800000> : vector<16xf32>
    %41 = vector.multi_reduction <maximumf>, %40, %cst_22 [1] : vector<16x16xf32> to vector<16xf32>
    %42 = vector.shape_cast %41 : vector<16xf32> to vector<16x1xf32>
    %43 = vector.broadcast %42 : vector<16x1xf32> to vector<16x16xf32>
    %44 = arith.subf %40, %43 : vector<16x16xf32>
    %45 = math.exp %44 : vector<16x16xf32>
    %cst_23 = arith.constant dense<0.000000e+00> : vector<16xf32>
    %46 = vector.multi_reduction <add>, %45, %cst_23 [1] : vector<16x16xf32> to vector<16xf32>
    %47 = vector.shape_cast %46 : vector<16xf32> to vector<16x1xf32>
    %cst_24 = arith.constant 1.000000e+00 : f32
    %48 = vector.broadcast %cst_24 : f32 to vector<16x1xf32>
    %49 = arith.divf %48, %47 : vector<16x1xf32>
    %50 = vector.broadcast %49 : vector<16x1xf32> to vector<16x16xf32>
    %51 = arith.mulf %45, %50 : vector<16x16xf32>
    %52 = arith.truncf %51 : vector<16x16xf32> to vector<16x16xbf16>
    %cst_25 = arith.constant dense<0.000000e+00> : vector<16x8xf32>
    %53 = tpu.matmul %52, %35, %cst_25 {dimension_numbers = #tpu.dot_dimension_numbers<[1], [0], [0], [1], [0, 0, 1, 1], [], []>} : vector<16x16xbf16>, vector<16x8xbf16>, vector<16x8xf32> -> vector<16x8xf32>
    %54 = arith.truncf %53 : vector<16x8xf32> to vector<16x8xbf16>
    %c0_26 = arith.constant 0 : index
    %c0_27 = arith.constant 0 : index
    %55 = vector.load %arg9[%c0_26, %c0_27] : memref<16x32xbf16, #tpu.memory_space<vmem>>, vector<16x8xbf16>
    tpu.vector_store %arg9[%c0_26, %c0_27], %54 {strides = array<i32>} : memref<16x32xbf16, #tpu.memory_space<vmem>>, vector<16x8xbf16>,
    %c0_28 = arith.constant 0 : index
    %c8 = arith.constant 8 : index
    %56 = vector.load %arg8[%c0_28, %c8] : memref<16x96xbf16, #tpu.memory_space<vmem>>, vector<16x8xbf16>
    %c0_29 = arith.constant 0 : index
    %c40 = arith.constant 40 : index
    %57 = vector.load %arg8[%c0_29, %c40] : memref<16x96xbf16, #tpu.memory_space<vmem>>, vector<16x8xbf16>
    %c0_30 = arith.constant 0 : index
    %c72 = arith.constant 72 : index
    %58 = vector.load %arg8[%c0_30, %c72] : memref<16x96xbf16, #tpu.memory_space<vmem>>, vector<16x8xbf16>
    %cst_31 = arith.constant dense<0.000000e+00> : vector<16x16xf32>
    %59 = tpu.matmul %56, %57, %cst_31 {dimension_numbers = #tpu.dot_dimension_numbers<[1], [1], [0], [0], [0, 0, 1, 0], [], []>} : vector<16x8xbf16>, vector<16x8xbf16>, vector<16x16xf32> -> vector<16x16xf32>
    %cst_32 = arith.constant 0.353553385 : f32
    %60 = vector.broadcast %cst_32 : f32 to vector<16x16xf32>
    %61 = arith.mulf %59, %60 : vector<16x16xf32>
    %cst_33 = arith.constant -1.000000e+30 : f32
    %62 = vector.broadcast %cst_33 : f32 to vector<16x16xf32>
    %63 = arith.select %32, %61, %62 : vector<16x16xi1>, vector<16x16xf32>
    %cst_34 = arith.constant dense<0xFF800000> : vector<16xf32>
    %64 = vector.multi_reduction <maximumf>, %63, %cst_34 [1] : vector<16x16xf32> to vector<16xf32>
    %65 = vector.shape_cast %64 : vector<16xf32> to vector<16x1xf32>
    %66 = vector.broadcast %65 : vector<16x1xf32> to vector<16x16xf32>
    %67 = arith.subf %63, %66 : vector<16x16xf32>
    %68 = math.exp %67 : vector<16x16xf32>
    %cst_35 = arith.constant dense<0.000000e+00> : vector<16xf32>
    %69 = vector.multi_reduction <add>, %68, %cst_35 [1] : vector<16x16xf32> to vector<16xf32>
    %70 = vector.shape_cast %69 : vector<16xf32> to vector<16x1xf32>
    %cst_36 = arith.constant 1.000000e+00 : f32
    %71 = vector.broadcast %cst_36 : f32 to vector<16x1xf32>
    %72 = arith.divf %71, %70 : vector<16x1xf32>
    %73 = vector.broadcast %72 : vector<16x1xf32> to vector<16x16xf32>
    %74 = arith.mulf %68, %73 : vector<16x16xf32>
    %75 = arith.truncf %74 : vector<16x16xf32> to vector<16x16xbf16>
    %cst_37 = arith.constant dense<0.000000e+00> : vector<16x8xf32>
    %76 = tpu.matmul %75, %58, %cst_37 {dimension_numbers = #tpu.dot_dimension_numbers<[1], [0], [0], [1], [0, 0, 1, 1], [], []>} : vector<16x16xbf16>, vector<16x8xbf16>, vector<16x8xf32> -> vector<16x8xf32>
    %77 = arith.truncf %76 : vector<16x8xf32> to vector<16x8xbf16>
    %c0_38 = arith.constant 0 : index
    %c8_39 = arith.constant 8 : index
    %78 = vector.load %arg9[%c0_38, %c8_39] : memref<16x32xbf16, #tpu.memory_space<vmem>>, vector<16x8xbf16>
    tpu.vector_store %arg9[%c0_38, %c8_39], %77 {strides = array<i32>} : memref<16x32xbf16, #tpu.memory_space<vmem>>, vector<16x8xbf16>,
    %c0_40 = arith.constant 0 : index
    %c16 = arith.constant 16 : index
    %79 = vector.load %arg8[%c0_40, %c16] : memref<16x96xbf16, #tpu.memory_space<vmem>>, vector<16x8xbf16>
    %c0_41 = arith.constant 0 : index
    %c48 = arith.constant 48 : index
    %80 = vector.load %arg8[%c0_41, %c48] : memref<16x96xbf16, #tpu.memory_space<vmem>>, vector<16x8xbf16>
    %c0_42 = arith.constant 0 : index
    %c80 = arith.constant 80 : index
    %81 = vector.load %arg8[%c0_42, %c80] : memref<16x96xbf16, #tpu.memory_space<vmem>>, vector<16x8xbf16>
    %cst_43 = arith.constant dense<0.000000e+00> : vector<16x16xf32>
    %82 = tpu.matmul %79, %80, %cst_43 {dimension_numbers = #tpu.dot_dimension_numbers<[1], [1], [0], [0], [0, 0, 1, 0], [], []>} : vector<16x8xbf16>, vector<16x8xbf16>, vector<16x16xf32> -> vector<16x16xf32>
    %cst_44 = arith.constant 0.353553385 : f32
    %83 = vector.broadcast %cst_44 : f32 to vector<16x16xf32>
    %84 = arith.mulf %82, %83 : vector<16x16xf32>
    %cst_45 = arith.constant -1.000000e+30 : f32
    %85 = vector.broadcast %cst_45 : f32 to vector<16x16xf32>
    %86 = arith.select %32, %84, %85 : vector<16x16xi1>, vector<16x16xf32>
    %cst_46 = arith.constant dense<0xFF800000> : vector<16xf32>
    %87 = vector.multi_reduction <maximumf>, %86, %cst_46 [1] : vector<16x16xf32> to vector<16xf32>
    %88 = vector.shape_cast %87 : vector<16xf32> to vector<16x1xf32>
    %89 = vector.broadcast %88 : vector<16x1xf32> to vector<16x16xf32>
    %90 = arith.subf %86, %89 : vector<16x16xf32>
    %91 = math.exp %90 : vector<16x16xf32>
    %cst_47 = arith.constant dense<0.000000e+00> : vector<16xf32>
    %92 = vector.multi_reduction <add>, %91, %cst_47 [1] : vector<16x16xf32> to vector<16xf32>
    %93 = vector.shape_cast %92 : vector<16xf32> to vector<16x1xf32>
    %cst_48 = arith.constant 1.000000e+00 : f32
    %94 = vector.broadcast %cst_48 : f32 to vector<16x1xf32>
    %95 = arith.divf %94, %93 : vector<16x1xf32>
    %96 = vector.broadcast %95 : vector<16x1xf32> to vector<16x16xf32>
    %97 = arith.mulf %91, %96 : vector<16x16xf32>
    %98 = arith.truncf %97 : vector<16x16xf32> to vector<16x16xbf16>
    %cst_49 = arith.constant dense<0.000000e+00> : vector<16x8xf32>
    %99 = tpu.matmul %98, %81, %cst_49 {dimension_numbers = #tpu.dot_dimension_numbers<[1], [0], [0], [1], [0, 0, 1, 1], [], []>} : vector<16x16xbf16>, vector<16x8xbf16>, vector<16x8xf32> -> vector<16x8xf32>
    %100 = arith.truncf %99 : vector<16x8xf32> to vector<16x8xbf16>
    %c0_50 = arith.constant 0 : index
    %c16_51 = arith.constant 16 : index
    %101 = vector.load %arg9[%c0_50, %c16_51] : memref<16x32xbf16, #tpu.memory_space<vmem>>, vector<16x8xbf16>
    tpu.vector_store %arg9[%c0_50, %c16_51], %100 {strides = array<i32>} : memref<16x32xbf16, #tpu.memory_space<vmem>>, vector<16x8xbf16>,
    %c0_52 = arith.constant 0 : index
    %c24 = arith.constant 24 : index
    %102 = vector.load %arg8[%c0_52, %c24] : memref<16x96xbf16, #tpu.memory_space<vmem>>, vector<16x8xbf16>
    %c0_53 = arith.constant 0 : index
    %c56 = arith.constant 56 : index
    %103 = vector.load %arg8[%c0_53, %c56] : memref<16x96xbf16, #tpu.memory_space<vmem>>, vector<16x8xbf16>
    %c0_54 = arith.constant 0 : index
    %c88 = arith.constant 88 : index
    %104 = vector.load %arg8[%c0_54, %c88] : memref<16x96xbf16, #tpu.memory_space<vmem>>, vector<16x8xbf16>
    %cst_55 = arith.constant dense<0.000000e+00> : vector<16x16xf32>
    %105 = tpu.matmul %102, %103, %cst_55 {dimension_numbers = #tpu.dot_dimension_numbers<[1], [1], [0], [0], [0, 0, 1, 0], [], []>} : vector<16x8xbf16>, vector<16x8xbf16>, vector<16x16xf32> -> vector<16x16xf32>
    %cst_56 = arith.constant 0.353553385 : f32
    %106 = vector.broadcast %cst_56 : f32 to vector<16x16xf32>
    %107 = arith.mulf %105, %106 : vector<16x16xf32>
    %cst_57 = arith.constant -1.000000e+30 : f32
    %108 = vector.broadcast %cst_57 : f32 to vector<16x16xf32>
    %109 = arith.select %32, %107, %108 : vector<16x16xi1>, vector<16x16xf32>
    %cst_58 = arith.constant dense<0xFF800000> : vector<16xf32>
    %110 = vector.multi_reduction <maximumf>, %109, %cst_58 [1] : vector<16x16xf32> to vector<16xf32>
    %111 = vector.shape_cast %110 : vector<16xf32> to vector<16x1xf32>
    %112 = vector.broadcast %111 : vector<16x1xf32> to vector<16x16xf32>
    %113 = arith.subf %109, %112 : vector<16x16xf32>
    %114 = math.exp %113 : vector<16x16xf32>
    %cst_59 = arith.constant dense<0.000000e+00> : vector<16xf32>
    %115 = vector.multi_reduction <add>, %114, %cst_59 [1] : vector<16x16xf32> to vector<16xf32>
    %116 = vector.shape_cast %115 : vector<16xf32> to vector<16x1xf32>
    %cst_60 = arith.constant 1.000000e+00 : f32
    %117 = vector.broadcast %cst_60 : f32 to vector<16x1xf32>
    %118 = arith.divf %117, %116 : vector<16x1xf32>
    %119 = vector.broadcast %118 : vector<16x1xf32> to vector<16x16xf32>
    %120 = arith.mulf %114, %119 : vector<16x16xf32>
    %121 = arith.truncf %120 : vector<16x16xf32> to vector<16x16xbf16>
    %cst_61 = arith.constant dense<0.000000e+00> : vector<16x8xf32>
    %122 = tpu.matmul %121, %104, %cst_61 {dimension_numbers = #tpu.dot_dimension_numbers<[1], [0], [0], [1], [0, 0, 1, 1], [], []>} : vector<16x16xbf16>, vector<16x8xbf16>, vector<16x8xf32> -> vector<16x8xf32>
    %123 = arith.truncf %122 : vector<16x8xf32> to vector<16x8xbf16>
    %c0_62 = arith.constant 0 : index
    %c24_63 = arith.constant 24 : index
    %124 = vector.load %arg9[%c0_62, %c24_63] : memref<16x32xbf16, #tpu.memory_space<vmem>>, vector<16x8xbf16>
    tpu.vector_store %arg9[%c0_62, %c24_63], %123 {strides = array<i32>} : memref<16x32xbf16, #tpu.memory_space<vmem>>, vector<16x8xbf16>,
    %c0_64 = arith.constant 0 : index
    %c0_65 = arith.constant 0 : index
    %125 = vector.load %arg9[%c0_64, %c0_65] : memref<16x32xbf16, #tpu.memory_space<vmem>>, vector<16x32xbf16>
    %c0_66 = arith.constant 0 : index
    %c0_67 = arith.constant 0 : index
    %126 = vector.load %arg5[%c0_66, %c0_67] : memref<32x32xbf16, #tpu.memory_space<vmem>>, vector<32x32xbf16>
    %cst_68 = arith.constant dense<0.000000e+00> : vector<16x32xf32>
    %127 = tpu.matmul %125, %126, %cst_68 {dimension_numbers = #tpu.dot_dimension_numbers<[1], [0], [0], [1], [0, 0, 1, 1], [], []>} : vector<16x32xbf16>, vector<32x32xbf16>, vector<16x32xf32> -> vector<16x32xf32>
    %c0_69 = arith.constant 0 : index
    %c0_70 = arith.constant 0 : index
    %128 = vector.load %arg6[%c0_69, %c0_70] : memref<1x32xf32, #tpu.memory_space<vmem>>, vector<1x32xf32>
    %129 = vector.broadcast %128 : vector<1x32xf32> to vector<16x32xf32>
    %130 = arith.addf %127, %129 : vector<16x32xf32>
    %c0_71 = arith.constant 0 : index
    %c0_72 = arith.constant 0 : index
    %c0_73 = arith.constant 0 : index
    %131 = vector.load %arg1[%c0_71, %c0_72, %c0_73] : memref<1x16x32xbf16, #tpu.memory_space<vmem>>, vector<1x16x32xbf16>
    %132 = vector.shape_cast %131 : vector<1x16x32xbf16> to vector<16x32xbf16>
    %133 = arith.extf %132 : vector<16x32xbf16> to vector<16x32xf32>
    %134 = arith.addf %130, %133 : vector<16x32xf32>
    %135 = arith.truncf %134 : vector<16x32xf32> to vector<16x32xbf16>
    %c0_74 = arith.constant 0 : index
    %c0_75 = arith.constant 0 : index
    %c0_76 = arith.constant 0 : index
    %136 = vector.load %arg7[%c0_74, %c0_75, %c0_76] : memref<1x16x32xbf16, #tpu.memory_space<vmem>>, vector<1x16x32xbf16>
    %137 = vector.shape_cast %136 : vector<1x16x32xbf16> to vector<16x32xbf16>
    %138 = vector.shape_cast %135 : vector<16x32xbf16> to vector<1x16x32xbf16>
    tpu.vector_store %arg7[%c0_74, %c0_75, %c0_76], %138 {strides = array<i32>} : memref<1x16x32xbf16, #tpu.memory_space<vmem>>, vector<1x16x32xbf16>,
    return
  }
  func.func @transform_0(%arg0: i32) -> (i32, i32, i32) {
    %c0_i32 = arith.constant 0 : i32
    %c0_i32_0 = arith.constant 0 : i32
    %c0_i32_1 = arith.constant 0 : i32
    return %arg0, %c0_i32, %c0_i32_0 : i32, i32, i32
  }
  func.func @transform_1(%arg0: i32) -> (i32, i32) {
    %c0_i32 = arith.constant 0 : i32
    %c0_i32_0 = arith.constant 0 : i32
    %c0_i32_1 = arith.constant 0 : i32
    return %c0_i32, %c0_i32_0 : i32, i32
  }
  func.func @transform_2(%arg0: i32) -> (i32, i32) {
    %c0_i32 = arith.constant 0 : i32
    %c0_i32_0 = arith.constant 0 : i32
    %c0_i32_1 = arith.constant 0 : i32
    return %c0_i32, %c0_i32_0 : i32, i32
  }
  func.func @transform_3(%arg0: i32) -> (i32, i32) {
    %c0_i32 = arith.constant 0 : i32
    %c0_i32_0 = arith.constant 0 : i32
    %c0_i32_1 = arith.constant 0 : i32
    return %c0_i32, %c0_i32_0 : i32, i32
  }
  func.func @transform_4(%arg0: i32) -> (i32, i32) {
    %c0_i32 = arith.constant 0 : i32
    %c0_i32_0 = arith.constant 0 : i32
    %c0_i32_1 = arith.constant 0 : i32
    return %c0_i32, %c0_i32_0 : i32, i32
  }
  func.func @transform_5(%arg0: i32) -> (i32, i32) {
    %c0_i32 = arith.constant 0 : i32
    %c0_i32_0 = arith.constant 0 : i32
    %c0_i32_1 = arith.constant 0 : i32
    return %c0_i32, %c0_i32_0 : i32, i32
  }
  func.func @transform_6(%arg0: i32) -> (i32, i32, i32) {
    %c0_i32 = arith.constant 0 : i32
    %c0_i32_0 = arith.constant 0 : i32
    %c0_i32_1 = arith.constant 0 : i32
    return %arg0, %c0_i32, %c0_i32_0 : i32, i32, i32
  }
}

module attributes {stable_mosaic.version = 11 : i64} {
  func.func @_ln_mlp_kernel(%arg0: i32, %arg1: memref<32x32xbf16, #tpu.memory_space<vmem>>, %arg2: memref<1x32xf32, #tpu.memory_space<vmem>>, %arg3: memref<1x32xf32, #tpu.memory_space<vmem>>, %arg4: memref<32x128xbf16, #tpu.memory_space<vmem>>, %arg5: memref<1x128xf32, #tpu.memory_space<vmem>>, %arg6: memref<128x32xbf16, #tpu.memory_space<vmem>>, %arg7: memref<1x32xf32, #tpu.memory_space<vmem>>, %arg8: memref<32x32xbf16, #tpu.memory_space<vmem>>, %arg9: memref<32x32xf32, #tpu.memory_space<vmem>>) attributes {dimension_semantics = [#tpu.dimension_semantics<parallel>], iteration_bounds = array<i64: 1>, scalar_prefetch = 0 : i64, scratch_operands = 1 : i64, tpu.core_type = #tpu.core_type<tc>, window_params = [{transform_indices = @transform_0, window_bounds = array<i64: 32, 32>}, {pipeline_mode = #tpu.pipeline_mode<synchronous>, transform_indices = @transform_1, window_bounds = array<i64: 1, 32>}, {pipeline_mode = #tpu.pipeline_mode<synchronous>, transform_indices = @transform_2, window_bounds = array<i64: 1, 32>}, {pipeline_mode = #tpu.pipeline_mode<synchronous>, transform_indices = @transform_3, window_bounds = array<i64: 32, 128>}, {pipeline_mode = #tpu.pipeline_mode<synchronous>, transform_indices = @transform_4, window_bounds = array<i64: 1, 128>}, {pipeline_mode = #tpu.pipeline_mode<synchronous>, transform_indices = @transform_5, window_bounds = array<i64: 128, 32>}, {pipeline_mode = #tpu.pipeline_mode<synchronous>, transform_indices = @transform_6, window_bounds = array<i64: 1, 32>}, {transform_indices = @transform_7, window_bounds = array<i64: 32, 32>}]} {
    %c0 = arith.constant 0 : index
    %c0_0 = arith.constant 0 : index
    %0 = vector.load %arg1[%c0, %c0_0] : memref<32x32xbf16, #tpu.memory_space<vmem>>, vector<32x32xbf16>
    %1 = arith.extf %0 : vector<32x32xbf16> to vector<32x32xf32>
    %cst = arith.constant dense<0.000000e+00> : vector<32xf32>
    %2 = vector.multi_reduction <add>, %1, %cst [1] : vector<32x32xf32> to vector<32xf32>
    %3 = vector.shape_cast %2 : vector<32xf32> to vector<32x1xf32>
    %cst_1 = arith.constant 3.200000e+01 : f32
    %4 = vector.broadcast %cst_1 : f32 to vector<32x1xf32>
    %5 = arith.divf %3, %4 : vector<32x1xf32>
    %6 = vector.broadcast %5 : vector<32x1xf32> to vector<32x32xf32>
    %7 = arith.subf %1, %6 : vector<32x32xf32>
    %8 = arith.mulf %7, %7 : vector<32x32xf32>
    %cst_2 = arith.constant dense<0.000000e+00> : vector<32xf32>
    %9 = vector.multi_reduction <add>, %8, %cst_2 [1] : vector<32x32xf32> to vector<32xf32>
    %10 = vector.shape_cast %9 : vector<32xf32> to vector<32x1xf32>
    %cst_3 = arith.constant 3.200000e+01 : f32
    %11 = vector.broadcast %cst_3 : f32 to vector<32x1xf32>
    %12 = arith.divf %10, %11 : vector<32x1xf32>
    %cst_4 = arith.constant 9.99999997E-7 : f32
    %13 = vector.broadcast %cst_4 : f32 to vector<32x1xf32>
    %14 = arith.addf %12, %13 : vector<32x1xf32>
    %15 = math.rsqrt %14 : vector<32x1xf32>
    %16 = vector.broadcast %15 : vector<32x1xf32> to vector<32x32xf32>
    %17 = arith.mulf %7, %16 : vector<32x32xf32>
    %c0_5 = arith.constant 0 : index
    %c0_6 = arith.constant 0 : index
    %18 = vector.load %arg2[%c0_5, %c0_6] : memref<1x32xf32, #tpu.memory_space<vmem>>, vector<1x32xf32>
    %19 = vector.broadcast %18 : vector<1x32xf32> to vector<32x32xf32>
    %20 = arith.mulf %17, %19 : vector<32x32xf32>
    %c0_7 = arith.constant 0 : index
    %c0_8 = arith.constant 0 : index
    %21 = vector.load %arg3[%c0_7, %c0_8] : memref<1x32xf32, #tpu.memory_space<vmem>>, vector<1x32xf32>
    %22 = vector.broadcast %21 : vector<1x32xf32> to vector<32x32xf32>
    %23 = arith.addf %20, %22 : vector<32x32xf32>
    %24 = arith.truncf %23 : vector<32x32xf32> to vector<32x32xbf16>
    %c0_9 = arith.constant 0 : index
    %c0_10 = arith.constant 0 : index
    %25 = vector.load %arg7[%c0_9, %c0_10] : memref<1x32xf32, #tpu.memory_space<vmem>>, vector<1x32xf32>
    %26 = vector.broadcast %25 : vector<1x32xf32> to vector<32x32xf32>
    %27 = arith.addf %1, %26 : vector<32x32xf32>
    %c0_11 = arith.constant 0 : index
    %c0_12 = arith.constant 0 : index
    %28 = vector.load %arg9[%c0_11, %c0_12] : memref<32x32xf32, #tpu.memory_space<vmem>>, vector<32x32xf32>
    tpu.vector_store %arg9[%c0_11, %c0_12], %27 {strides = array<i32>} : memref<32x32xf32, #tpu.memory_space<vmem>>, vector<32x32xf32>,
    %c0_13 = arith.constant 0 : index
    %c0_14 = arith.constant 0 : index
    %29 = vector.load %arg4[%c0_13, %c0_14] : memref<32x128xbf16, #tpu.memory_space<vmem>>, vector<32x128xbf16>
    %cst_15 = arith.constant dense<0.000000e+00> : vector<32x128xf32>
    %30 = tpu.matmul %24, %29, %cst_15 {dimension_numbers = #tpu.dot_dimension_numbers<[1], [0], [0], [1], [0, 0, 1, 1], [], []>} : vector<32x32xbf16>, vector<32x128xbf16>, vector<32x128xf32> -> vector<32x128xf32>
    %c0_16 = arith.constant 0 : index
    %c0_17 = arith.constant 0 : index
    %31 = vector.load %arg5[%c0_16, %c0_17] : memref<1x128xf32, #tpu.memory_space<vmem>>, vector<1x128xf32>
    %32 = vector.broadcast %31 : vector<1x128xf32> to vector<32x128xf32>
    %33 = arith.addf %30, %32 : vector<32x128xf32>
    %cst_18 = arith.constant 5.000000e-01 : f32
    %34 = vector.broadcast %cst_18 : f32 to vector<32x128xf32>
    %35 = arith.mulf %34, %33 : vector<32x128xf32>
    %cst_19 = arith.constant 0.707106769 : f32
    %36 = vector.broadcast %cst_19 : f32 to vector<32x128xf32>
    %37 = arith.mulf %33, %36 : vector<32x128xf32>
    %38 = math.erf %37 : vector<32x128xf32>
    %cst_20 = arith.constant 1.000000e+00 : f32
    %39 = vector.broadcast %cst_20 : f32 to vector<32x128xf32>
    %40 = arith.addf %39, %38 : vector<32x128xf32>
    %41 = arith.mulf %35, %40 : vector<32x128xf32>
    %c0_21 = arith.constant 0 : index
    %c0_22 = arith.constant 0 : index
    %42 = vector.load %arg9[%c0_21, %c0_22] : memref<32x32xf32, #tpu.memory_space<vmem>>, vector<32x32xf32>
    %43 = arith.truncf %41 : vector<32x128xf32> to vector<32x128xbf16>
    %c0_23 = arith.constant 0 : index
    %c0_24 = arith.constant 0 : index
    %44 = vector.load %arg6[%c0_23, %c0_24] : memref<128x32xbf16, #tpu.memory_space<vmem>>, vector<128x32xbf16>
    %cst_25 = arith.constant dense<0.000000e+00> : vector<32x32xf32>
    %45 = tpu.matmul %43, %44, %cst_25 {dimension_numbers = #tpu.dot_dimension_numbers<[1], [0], [0], [1], [0, 0, 1, 1], [], []>} : vector<32x128xbf16>, vector<128x32xbf16>, vector<32x32xf32> -> vector<32x32xf32>
    %46 = arith.addf %42, %45 : vector<32x32xf32>
    %c0_26 = arith.constant 0 : index
    %c0_27 = arith.constant 0 : index
    %47 = vector.load %arg9[%c0_26, %c0_27] : memref<32x32xf32, #tpu.memory_space<vmem>>, vector<32x32xf32>
    tpu.vector_store %arg9[%c0_26, %c0_27], %46 {strides = array<i32>} : memref<32x32xf32, #tpu.memory_space<vmem>>, vector<32x32xf32>,
    %c0_28 = arith.constant 0 : index
    %c0_29 = arith.constant 0 : index
    %48 = vector.load %arg9[%c0_28, %c0_29] : memref<32x32xf32, #tpu.memory_space<vmem>>, vector<32x32xf32>
    %49 = arith.truncf %48 : vector<32x32xf32> to vector<32x32xbf16>
    %c0_30 = arith.constant 0 : index
    %c0_31 = arith.constant 0 : index
    %50 = vector.load %arg8[%c0_30, %c0_31] : memref<32x32xbf16, #tpu.memory_space<vmem>>, vector<32x32xbf16>
    tpu.vector_store %arg8[%c0_30, %c0_31], %49 {strides = array<i32>} : memref<32x32xbf16, #tpu.memory_space<vmem>>, vector<32x32xbf16>,
    return
  }
  func.func @transform_0(%arg0: i32) -> (i32, i32) {
    %c0_i32 = arith.constant 0 : i32
    %c0_i32_0 = arith.constant 0 : i32
    return %arg0, %c0_i32 : i32, i32
  }
  func.func @transform_1(%arg0: i32) -> (i32, i32) {
    %c0_i32 = arith.constant 0 : i32
    %c0_i32_0 = arith.constant 0 : i32
    %c0_i32_1 = arith.constant 0 : i32
    return %c0_i32, %c0_i32_0 : i32, i32
  }
  func.func @transform_2(%arg0: i32) -> (i32, i32) {
    %c0_i32 = arith.constant 0 : i32
    %c0_i32_0 = arith.constant 0 : i32
    %c0_i32_1 = arith.constant 0 : i32
    return %c0_i32, %c0_i32_0 : i32, i32
  }
  func.func @transform_3(%arg0: i32) -> (i32, i32) {
    %c0_i32 = arith.constant 0 : i32
    %c0_i32_0 = arith.constant 0 : i32
    %c0_i32_1 = arith.constant 0 : i32
    return %c0_i32, %c0_i32_0 : i32, i32
  }
  func.func @transform_4(%arg0: i32) -> (i32, i32) {
    %c0_i32 = arith.constant 0 : i32
    %c0_i32_0 = arith.constant 0 : i32
    %c0_i32_1 = arith.constant 0 : i32
    return %c0_i32, %c0_i32_0 : i32, i32
  }
  func.func @transform_5(%arg0: i32) -> (i32, i32) {
    %c0_i32 = arith.constant 0 : i32
    %c0_i32_0 = arith.constant 0 : i32
    %c0_i32_1 = arith.constant 0 : i32
    return %c0_i32, %c0_i32_0 : i32, i32
  }
  func.func @transform_6(%arg0: i32) -> (i32, i32) {
    %c0_i32 = arith.constant 0 : i32
    %c0_i32_0 = arith.constant 0 : i32
    %c0_i32_1 = arith.constant 0 : i32
    return %c0_i32, %c0_i32_0 : i32, i32
  }
  func.func @transform_7(%arg0: i32) -> (i32, i32) {
    %c0_i32 = arith.constant 0 : i32
    %c0_i32_0 = arith.constant 0 : i32
    return %arg0, %c0_i32 : i32, i32
  }
}

module attributes {stable_mosaic.version = 11 : i64} {
  func.func @_ln_mm_kernel(%arg0: i32, %arg1: i32, %arg2: memref<32x32xbf16, #tpu.memory_space<vmem>>, %arg3: memref<1x32xf32, #tpu.memory_space<vmem>>, %arg4: memref<1x32xf32, #tpu.memory_space<vmem>>, %arg5: memref<32x128xbf16, #tpu.memory_space<vmem>>, %arg6: memref<1x128xf32, #tpu.memory_space<vmem>>, %arg7: memref<32x128xbf16, #tpu.memory_space<vmem>>) attributes {dimension_semantics = [#tpu.dimension_semantics<parallel>, #tpu.dimension_semantics<parallel>], iteration_bounds = array<i64: 1, 1>, scalar_prefetch = 0 : i64, scratch_operands = 0 : i64, tpu.core_type = #tpu.core_type<tc>, window_params = [{transform_indices = @transform_0, window_bounds = array<i64: 32, 32>}, {pipeline_mode = #tpu.pipeline_mode<synchronous>, transform_indices = @transform_1, window_bounds = array<i64: 1, 32>}, {pipeline_mode = #tpu.pipeline_mode<synchronous>, transform_indices = @transform_2, window_bounds = array<i64: 1, 32>}, {transform_indices = @transform_3, window_bounds = array<i64: 32, 128>}, {transform_indices = @transform_4, window_bounds = array<i64: 1, 128>}, {transform_indices = @transform_5, window_bounds = array<i64: 32, 128>}]} {
    %c0 = arith.constant 0 : index
    %c0_0 = arith.constant 0 : index
    %0 = vector.load %arg2[%c0, %c0_0] : memref<32x32xbf16, #tpu.memory_space<vmem>>, vector<32x32xbf16>
    %1 = arith.extf %0 : vector<32x32xbf16> to vector<32x32xf32>
    %cst = arith.constant dense<0.000000e+00> : vector<32xf32>
    %2 = vector.multi_reduction <add>, %1, %cst [1] : vector<32x32xf32> to vector<32xf32>
    %3 = vector.shape_cast %2 : vector<32xf32> to vector<32x1xf32>
    %cst_1 = arith.constant 3.200000e+01 : f32
    %4 = vector.broadcast %cst_1 : f32 to vector<32x1xf32>
    %5 = arith.divf %3, %4 : vector<32x1xf32>
    %6 = vector.broadcast %5 : vector<32x1xf32> to vector<32x32xf32>
    %7 = arith.subf %1, %6 : vector<32x32xf32>
    %8 = arith.mulf %7, %7 : vector<32x32xf32>
    %cst_2 = arith.constant dense<0.000000e+00> : vector<32xf32>
    %9 = vector.multi_reduction <add>, %8, %cst_2 [1] : vector<32x32xf32> to vector<32xf32>
    %10 = vector.shape_cast %9 : vector<32xf32> to vector<32x1xf32>
    %cst_3 = arith.constant 3.200000e+01 : f32
    %11 = vector.broadcast %cst_3 : f32 to vector<32x1xf32>
    %12 = arith.divf %10, %11 : vector<32x1xf32>
    %cst_4 = arith.constant 9.99999997E-7 : f32
    %13 = vector.broadcast %cst_4 : f32 to vector<32x1xf32>
    %14 = arith.addf %12, %13 : vector<32x1xf32>
    %15 = math.rsqrt %14 : vector<32x1xf32>
    %16 = vector.broadcast %15 : vector<32x1xf32> to vector<32x32xf32>
    %17 = arith.mulf %7, %16 : vector<32x32xf32>
    %c0_5 = arith.constant 0 : index
    %c0_6 = arith.constant 0 : index
    %18 = vector.load %arg3[%c0_5, %c0_6] : memref<1x32xf32, #tpu.memory_space<vmem>>, vector<1x32xf32>
    %19 = vector.broadcast %18 : vector<1x32xf32> to vector<32x32xf32>
    %20 = arith.mulf %17, %19 : vector<32x32xf32>
    %c0_7 = arith.constant 0 : index
    %c0_8 = arith.constant 0 : index
    %21 = vector.load %arg4[%c0_7, %c0_8] : memref<1x32xf32, #tpu.memory_space<vmem>>, vector<1x32xf32>
    %22 = vector.broadcast %21 : vector<1x32xf32> to vector<32x32xf32>
    %23 = arith.addf %20, %22 : vector<32x32xf32>
    %24 = arith.truncf %23 : vector<32x32xf32> to vector<32x32xbf16>
    %c0_9 = arith.constant 0 : index
    %c0_10 = arith.constant 0 : index
    %25 = vector.load %arg5[%c0_9, %c0_10] : memref<32x128xbf16, #tpu.memory_space<vmem>>, vector<32x128xbf16>
    %cst_11 = arith.constant dense<0.000000e+00> : vector<32x128xf32>
    %26 = tpu.matmul %24, %25, %cst_11 {dimension_numbers = #tpu.dot_dimension_numbers<[1], [0], [0], [1], [0, 0, 1, 1], [], []>} : vector<32x32xbf16>, vector<32x128xbf16>, vector<32x128xf32> -> vector<32x128xf32>
    %c0_12 = arith.constant 0 : index
    %c0_13 = arith.constant 0 : index
    %27 = vector.load %arg6[%c0_12, %c0_13] : memref<1x128xf32, #tpu.memory_space<vmem>>, vector<1x128xf32>
    %28 = vector.broadcast %27 : vector<1x128xf32> to vector<32x128xf32>
    %29 = arith.addf %26, %28 : vector<32x128xf32>
    %30 = arith.truncf %29 : vector<32x128xf32> to vector<32x128xbf16>
    %c0_14 = arith.constant 0 : index
    %c0_15 = arith.constant 0 : index
    %31 = vector.load %arg7[%c0_14, %c0_15] : memref<32x128xbf16, #tpu.memory_space<vmem>>, vector<32x128xbf16>
    tpu.vector_store %arg7[%c0_14, %c0_15], %30 {strides = array<i32>} : memref<32x128xbf16, #tpu.memory_space<vmem>>, vector<32x128xbf16>,
    return
  }
  func.func @transform_0(%arg0: i32, %arg1: i32) -> (i32, i32) {
    %c0_i32 = arith.constant 0 : i32
    %c0_i32_0 = arith.constant 0 : i32
    return %arg0, %c0_i32 : i32, i32
  }
  func.func @transform_1(%arg0: i32, %arg1: i32) -> (i32, i32) {
    %c0_i32 = arith.constant 0 : i32
    %c0_i32_0 = arith.constant 0 : i32
    %c0_i32_1 = arith.constant 0 : i32
    return %c0_i32, %c0_i32_0 : i32, i32
  }
  func.func @transform_2(%arg0: i32, %arg1: i32) -> (i32, i32) {
    %c0_i32 = arith.constant 0 : i32
    %c0_i32_0 = arith.constant 0 : i32
    %c0_i32_1 = arith.constant 0 : i32
    return %c0_i32, %c0_i32_0 : i32, i32
  }
  func.func @transform_3(%arg0: i32, %arg1: i32) -> (i32, i32) {
    %c0_i32 = arith.constant 0 : i32
    %c0_i32_0 = arith.constant 0 : i32
    return %c0_i32, %arg1 : i32, i32
  }
  func.func @transform_4(%arg0: i32, %arg1: i32) -> (i32, i32) {
    %c0_i32 = arith.constant 0 : i32
    %c0_i32_0 = arith.constant 0 : i32
    return %c0_i32, %arg1 : i32, i32
  }
  func.func @transform_5(%arg0: i32, %arg1: i32) -> (i32, i32) {
    %c0_i32 = arith.constant 0 : i32
    return %arg0, %arg1 : i32, i32
  }
}

module attributes {stable_mosaic.version = 11 : i64} {
  func.func @_attn_block_kernel(%arg0: i32, %arg1: memref<1x16x32xbf16, #tpu.memory_space<vmem>>, %arg2: memref<1x32xf32, #tpu.memory_space<vmem>>, %arg3: memref<1x32xf32, #tpu.memory_space<vmem>>, %arg4: memref<32x96xbf16, #tpu.memory_space<vmem>>, %arg5: memref<32x32xbf16, #tpu.memory_space<vmem>>, %arg6: memref<1x32xf32, #tpu.memory_space<vmem>>, %arg7: memref<1x16x32xbf16, #tpu.memory_space<vmem>>, %arg8: memref<16x96xbf16, #tpu.memory_space<vmem>>, %arg9: memref<16x32xbf16, #tpu.memory_space<vmem>>) attributes {dimension_semantics = [#tpu.dimension_semantics<parallel>], iteration_bounds = array<i64: 2>, scalar_prefetch = 0 : i64, scratch_operands = 2 : i64, tpu.core_type = #tpu.core_type<tc>, window_params = [{transform_indices = @transform_0, window_bounds = array<i64: 1, 16, 32>}, {pipeline_mode = #tpu.pipeline_mode<synchronous>, transform_indices = @transform_1, window_bounds = array<i64: 1, 32>}, {pipeline_mode = #tpu.pipeline_mode<synchronous>, transform_indices = @transform_2, window_bounds = array<i64: 1, 32>}, {pipeline_mode = #tpu.pipeline_mode<synchronous>, transform_indices = @transform_3, window_bounds = array<i64: 32, 96>}, {pipeline_mode = #tpu.pipeline_mode<synchronous>, transform_indices = @transform_4, window_bounds = array<i64: 32, 32>}, {pipeline_mode = #tpu.pipeline_mode<synchronous>, transform_indices = @transform_5, window_bounds = array<i64: 1, 32>}, {transform_indices = @transform_6, window_bounds = array<i64: 1, 16, 32>}]} {
    %c0 = arith.constant 0 : index
    %c0_0 = arith.constant 0 : index
    %c0_1 = arith.constant 0 : index
    %0 = vector.load %arg1[%c0, %c0_0, %c0_1] : memref<1x16x32xbf16, #tpu.memory_space<vmem>>, vector<1x16x32xbf16>
    %1 = vector.shape_cast %0 : vector<1x16x32xbf16> to vector<16x32xbf16>
    %2 = arith.extf %1 : vector<16x32xbf16> to vector<16x32xf32>
    %cst = arith.constant dense<0.000000e+00> : vector<16xf32>
    %3 = vector.multi_reduction <add>, %2, %cst [1] : vector<16x32xf32> to vector<16xf32>
    %4 = vector.shape_cast %3 : vector<16xf32> to vector<16x1xf32>
    %cst_2 = arith.constant 3.200000e+01 : f32
    %5 = vector.broadcast %cst_2 : f32 to vector<16x1xf32>
    %6 = arith.divf %4, %5 : vector<16x1xf32>
    %7 = vector.broadcast %6 : vector<16x1xf32> to vector<16x32xf32>
    %8 = arith.subf %2, %7 : vector<16x32xf32>
    %9 = arith.mulf %8, %8 : vector<16x32xf32>
    %cst_3 = arith.constant dense<0.000000e+00> : vector<16xf32>
    %10 = vector.multi_reduction <add>, %9, %cst_3 [1] : vector<16x32xf32> to vector<16xf32>
    %11 = vector.shape_cast %10 : vector<16xf32> to vector<16x1xf32>
    %cst_4 = arith.constant 3.200000e+01 : f32
    %12 = vector.broadcast %cst_4 : f32 to vector<16x1xf32>
    %13 = arith.divf %11, %12 : vector<16x1xf32>
    %cst_5 = arith.constant 9.99999997E-7 : f32
    %14 = vector.broadcast %cst_5 : f32 to vector<16x1xf32>
    %15 = arith.addf %13, %14 : vector<16x1xf32>
    %16 = math.rsqrt %15 : vector<16x1xf32>
    %17 = vector.broadcast %16 : vector<16x1xf32> to vector<16x32xf32>
    %18 = arith.mulf %8, %17 : vector<16x32xf32>
    %c0_6 = arith.constant 0 : index
    %c0_7 = arith.constant 0 : index
    %19 = vector.load %arg2[%c0_6, %c0_7] : memref<1x32xf32, #tpu.memory_space<vmem>>, vector<1x32xf32>
    %20 = vector.broadcast %19 : vector<1x32xf32> to vector<16x32xf32>
    %21 = arith.mulf %18, %20 : vector<16x32xf32>
    %c0_8 = arith.constant 0 : index
    %c0_9 = arith.constant 0 : index
    %22 = vector.load %arg3[%c0_8, %c0_9] : memref<1x32xf32, #tpu.memory_space<vmem>>, vector<1x32xf32>
    %23 = vector.broadcast %22 : vector<1x32xf32> to vector<16x32xf32>
    %24 = arith.addf %21, %23 : vector<16x32xf32>
    %25 = arith.truncf %24 : vector<16x32xf32> to vector<16x32xbf16>
    %c0_10 = arith.constant 0 : index
    %c0_11 = arith.constant 0 : index
    %26 = vector.load %arg4[%c0_10, %c0_11] : memref<32x96xbf16, #tpu.memory_space<vmem>>, vector<32x96xbf16>
    %cst_12 = arith.constant dense<0.000000e+00> : vector<16x96xf32>
    %27 = tpu.matmul %25, %26, %cst_12 {dimension_numbers = #tpu.dot_dimension_numbers<[1], [0], [0], [1], [0, 0, 1, 1], [], []>} : vector<16x32xbf16>, vector<32x96xbf16>, vector<16x96xf32> -> vector<16x96xf32>
    %28 = arith.truncf %27 : vector<16x96xf32> to vector<16x96xbf16>
    %c0_13 = arith.constant 0 : index
    %c0_14 = arith.constant 0 : index
    %29 = vector.load %arg8[%c0_13, %c0_14] : memref<16x96xbf16, #tpu.memory_space<vmem>>, vector<16x96xbf16>
    tpu.vector_store %arg8[%c0_13, %c0_14], %28 {strides = array<i32>} : memref<16x96xbf16, #tpu.memory_space<vmem>>, vector<16x96xbf16>,
    %30 = tpu.iota {dimensions = array<i32: 1>} : vector<16x16xi32>
    %c4_i32 = arith.constant 4 : i32
    %31 = vector.broadcast %c4_i32 : i32 to vector<16x16xi32>
    %32 = arith.cmpi slt, %30, %31 : vector<16x16xi32>
    %c0_15 = arith.constant 0 : index
    %c0_16 = arith.constant 0 : index
    %33 = vector.load %arg8[%c0_15, %c0_16] : memref<16x96xbf16, #tpu.memory_space<vmem>>, vector<16x8xbf16>
    %c0_17 = arith.constant 0 : index
    %c32 = arith.constant 32 : index
    %34 = vector.load %arg8[%c0_17, %c32] : memref<16x96xbf16, #tpu.memory_space<vmem>>, vector<16x8xbf16>
    %c0_18 = arith.constant 0 : index
    %c64 = arith.constant 64 : index
    %35 = vector.load %arg8[%c0_18, %c64] : memref<16x96xbf16, #tpu.memory_space<vmem>>, vector<16x8xbf16>
    %cst_19 = arith.constant dense<0.000000e+00> : vector<16x16xf32>
    %36 = tpu.matmul %33, %34, %cst_19 {dimension_numbers = #tpu.dot_dimension_numbers<[1], [1], [0], [0], [0, 0, 1, 0], [], []>} : vector<16x8xbf16>, vector<16x8xbf16>, vector<16x16xf32> -> vector<16x16xf32>
    %cst_20 = arith.constant 0.353553385 : f32
    %37 = vector.broadcast %cst_20 : f32 to vector<16x16xf32>
    %38 = arith.mulf %36, %37 : vector<16x16xf32>
    %cst_21 = arith.constant -1.000000e+30 : f32
    %39 = vector.broadcast %cst_21 : f32 to vector<16x16xf32>
    %40 = arith.select %32, %38, %39 : vector<16x16xi1>, vector<16x16xf32>
    %cst_22 = arith.constant dense<0xFF800000> : vector<16xf32>
    %41 = vector.multi_reduction <maximumf>, %40, %cst_22 [1] : vector<16x16xf32> to vector<16xf32>
    %42 = vector.shape_cast %41 : vector<16xf32> to vector<16x1xf32>
    %43 = vector.broadcast %42 : vector<16x1xf32> to vector<16x16xf32>
    %44 = arith.subf %40, %43 : vector<16x16xf32>
    %45 = math.exp %44 : vector<16x16xf32>
    %cst_23 = arith.constant dense<0.000000e+00> : vector<16xf32>
    %46 = vector.multi_reduction <add>, %45, %cst_23 [1] : vector<16x16xf32> to vector<16xf32>
    %47 = vector.shape_cast %46 : vector<16xf32> to vector<16x1xf32>
    %cst_24 = arith.constant 1.000000e+00 : f32
    %48 = vector.broadcast %cst_24 : f32 to vector<16x1xf32>
    %49 = arith.divf %48, %47 : vector<16x1xf32>
    %50 = vector.broadcast %49 : vector<16x1xf32> to vector<16x16xf32>
    %51 = arith.mulf %45, %50 : vector<16x16xf32>
    %52 = arith.truncf %51 : vector<16x16xf32> to vector<16x16xbf16>
    %cst_25 = arith.constant dense<0.000000e+00> : vector<16x8xf32>
    %53 = tpu.matmul %52, %35, %cst_25 {dimension_numbers = #tpu.dot_dimension_numbers<[1], [0], [0], [1], [0, 0, 1, 1], [], []>} : vector<16x16xbf16>, vector<16x8xbf16>, vector<16x8xf32> -> vector<16x8xf32>
    %54 = arith.truncf %53 : vector<16x8xf32> to vector<16x8xbf16>
    %c0_26 = arith.constant 0 : index
    %c0_27 = arith.constant 0 : index
    %55 = vector.load %arg9[%c0_26, %c0_27] : memref<16x32xbf16, #tpu.memory_space<vmem>>, vector<16x8xbf16>
    tpu.vector_store %arg9[%c0_26, %c0_27], %54 {strides = array<i32>} : memref<16x32xbf16, #tpu.memory_space<vmem>>, vector<16x8xbf16>,
    %c0_28 = arith.constant 0 : index
    %c8 = arith.constant 8 : index
    %56 = vector.load %arg8[%c0_28, %c8] : memref<16x96xbf16, #tpu.memory_space<vmem>>, vector<16x8xbf16>
    %c0_29 = arith.constant 0 : index
    %c40 = arith.constant 40 : index
    %57 = vector.load %arg8[%c0_29, %c40] : memref<16x96xbf16, #tpu.memory_space<vmem>>, vector<16x8xbf16>
    %c0_30 = arith.constant 0 : index
    %c72 = arith.constant 72 : index
    %58 = vector.load %arg8[%c0_30, %c72] : memref<16x96xbf16, #tpu.memory_space<vmem>>, vector<16x8xbf16>
    %cst_31 = arith.constant dense<0.000000e+00> : vector<16x16xf32>
    %59 = tpu.matmul %56, %57, %cst_31 {dimension_numbers = #tpu.dot_dimension_numbers<[1], [1], [0], [0], [0, 0, 1, 0], [], []>} : vector<16x8xbf16>, vector<16x8xbf16>, vector<16x16xf32> -> vector<16x16xf32>
    %cst_32 = arith.constant 0.353553385 : f32
    %60 = vector.broadcast %cst_32 : f32 to vector<16x16xf32>
    %61 = arith.mulf %59, %60 : vector<16x16xf32>
    %cst_33 = arith.constant -1.000000e+30 : f32
    %62 = vector.broadcast %cst_33 : f32 to vector<16x16xf32>
    %63 = arith.select %32, %61, %62 : vector<16x16xi1>, vector<16x16xf32>
    %cst_34 = arith.constant dense<0xFF800000> : vector<16xf32>
    %64 = vector.multi_reduction <maximumf>, %63, %cst_34 [1] : vector<16x16xf32> to vector<16xf32>
    %65 = vector.shape_cast %64 : vector<16xf32> to vector<16x1xf32>
    %66 = vector.broadcast %65 : vector<16x1xf32> to vector<16x16xf32>
    %67 = arith.subf %63, %66 : vector<16x16xf32>
    %68 = math.exp %67 : vector<16x16xf32>
    %cst_35 = arith.constant dense<0.000000e+00> : vector<16xf32>
    %69 = vector.multi_reduction <add>, %68, %cst_35 [1] : vector<16x16xf32> to vector<16xf32>
    %70 = vector.shape_cast %69 : vector<16xf32> to vector<16x1xf32>
    %cst_36 = arith.constant 1.000000e+00 : f32
    %71 = vector.broadcast %cst_36 : f32 to vector<16x1xf32>
    %72 = arith.divf %71, %70 : vector<16x1xf32>
    %73 = vector.broadcast %72 : vector<16x1xf32> to vector<16x16xf32>
    %74 = arith.mulf %68, %73 : vector<16x16xf32>
    %75 = arith.truncf %74 : vector<16x16xf32> to vector<16x16xbf16>
    %cst_37 = arith.constant dense<0.000000e+00> : vector<16x8xf32>
    %76 = tpu.matmul %75, %58, %cst_37 {dimension_numbers = #tpu.dot_dimension_numbers<[1], [0], [0], [1], [0, 0, 1, 1], [], []>} : vector<16x16xbf16>, vector<16x8xbf16>, vector<16x8xf32> -> vector<16x8xf32>
    %77 = arith.truncf %76 : vector<16x8xf32> to vector<16x8xbf16>
    %c0_38 = arith.constant 0 : index
    %c8_39 = arith.constant 8 : index
    %78 = vector.load %arg9[%c0_38, %c8_39] : memref<16x32xbf16, #tpu.memory_space<vmem>>, vector<16x8xbf16>
    tpu.vector_store %arg9[%c0_38, %c8_39], %77 {strides = array<i32>} : memref<16x32xbf16, #tpu.memory_space<vmem>>, vector<16x8xbf16>,
    %c0_40 = arith.constant 0 : index
    %c16 = arith.constant 16 : index
    %79 = vector.load %arg8[%c0_40, %c16] : memref<16x96xbf16, #tpu.memory_space<vmem>>, vector<16x8xbf16>
    %c0_41 = arith.constant 0 : index
    %c48 = arith.constant 48 : index
    %80 = vector.load %arg8[%c0_41, %c48] : memref<16x96xbf16, #tpu.memory_space<vmem>>, vector<16x8xbf16>
    %c0_42 = arith.constant 0 : index
    %c80 = arith.constant 80 : index
    %81 = vector.load %arg8[%c0_42, %c80] : memref<16x96xbf16, #tpu.memory_space<vmem>>, vector<16x8xbf16>
    %cst_43 = arith.constant dense<0.000000e+00> : vector<16x16xf32>
    %82 = tpu.matmul %79, %80, %cst_43 {dimension_numbers = #tpu.dot_dimension_numbers<[1], [1], [0], [0], [0, 0, 1, 0], [], []>} : vector<16x8xbf16>, vector<16x8xbf16>, vector<16x16xf32> -> vector<16x16xf32>
    %cst_44 = arith.constant 0.353553385 : f32
    %83 = vector.broadcast %cst_44 : f32 to vector<16x16xf32>
    %84 = arith.mulf %82, %83 : vector<16x16xf32>
    %cst_45 = arith.constant -1.000000e+30 : f32
    %85 = vector.broadcast %cst_45 : f32 to vector<16x16xf32>
    %86 = arith.select %32, %84, %85 : vector<16x16xi1>, vector<16x16xf32>
    %cst_46 = arith.constant dense<0xFF800000> : vector<16xf32>
    %87 = vector.multi_reduction <maximumf>, %86, %cst_46 [1] : vector<16x16xf32> to vector<16xf32>
    %88 = vector.shape_cast %87 : vector<16xf32> to vector<16x1xf32>
    %89 = vector.broadcast %88 : vector<16x1xf32> to vector<16x16xf32>
    %90 = arith.subf %86, %89 : vector<16x16xf32>
    %91 = math.exp %90 : vector<16x16xf32>
    %cst_47 = arith.constant dense<0.000000e+00> : vector<16xf32>
    %92 = vector.multi_reduction <add>, %91, %cst_47 [1] : vector<16x16xf32> to vector<16xf32>
    %93 = vector.shape_cast %92 : vector<16xf32> to vector<16x1xf32>
    %cst_48 = arith.constant 1.000000e+00 : f32
    %94 = vector.broadcast %cst_48 : f32 to vector<16x1xf32>
    %95 = arith.divf %94, %93 : vector<16x1xf32>
    %96 = vector.broadcast %95 : vector<16x1xf32> to vector<16x16xf32>
    %97 = arith.mulf %91, %96 : vector<16x16xf32>
    %98 = arith.truncf %97 : vector<16x16xf32> to vector<16x16xbf16>
    %cst_49 = arith.constant dense<0.000000e+00> : vector<16x8xf32>
    %99 = tpu.matmul %98, %81, %cst_49 {dimension_numbers = #tpu.dot_dimension_numbers<[1], [0], [0], [1], [0, 0, 1, 1], [], []>} : vector<16x16xbf16>, vector<16x8xbf16>, vector<16x8xf32> -> vector<16x8xf32>
    %100 = arith.truncf %99 : vector<16x8xf32> to vector<16x8xbf16>
    %c0_50 = arith.constant 0 : index
    %c16_51 = arith.constant 16 : index
    %101 = vector.load %arg9[%c0_50, %c16_51] : memref<16x32xbf16, #tpu.memory_space<vmem>>, vector<16x8xbf16>
    tpu.vector_store %arg9[%c0_50, %c16_51], %100 {strides = array<i32>} : memref<16x32xbf16, #tpu.memory_space<vmem>>, vector<16x8xbf16>,
    %c0_52 = arith.constant 0 : index
    %c24 = arith.constant 24 : index
    %102 = vector.load %arg8[%c0_52, %c24] : memref<16x96xbf16, #tpu.memory_space<vmem>>, vector<16x8xbf16>
    %c0_53 = arith.constant 0 : index
    %c56 = arith.constant 56 : index
    %103 = vector.load %arg8[%c0_53, %c56] : memref<16x96xbf16, #tpu.memory_space<vmem>>, vector<16x8xbf16>
    %c0_54 = arith.constant 0 : index
    %c88 = arith.constant 88 : index
    %104 = vector.load %arg8[%c0_54, %c88] : memref<16x96xbf16, #tpu.memory_space<vmem>>, vector<16x8xbf16>
    %cst_55 = arith.constant dense<0.000000e+00> : vector<16x16xf32>
    %105 = tpu.matmul %102, %103, %cst_55 {dimension_numbers = #tpu.dot_dimension_numbers<[1], [1], [0], [0], [0, 0, 1, 0], [], []>} : vector<16x8xbf16>, vector<16x8xbf16>, vector<16x16xf32> -> vector<16x16xf32>
    %cst_56 = arith.constant 0.353553385 : f32
    %106 = vector.broadcast %cst_56 : f32 to vector<16x16xf32>
    %107 = arith.mulf %105, %106 : vector<16x16xf32>
    %cst_57 = arith.constant -1.000000e+30 : f32
    %108 = vector.broadcast %cst_57 : f32 to vector<16x16xf32>
    %109 = arith.select %32, %107, %108 : vector<16x16xi1>, vector<16x16xf32>
    %cst_58 = arith.constant dense<0xFF800000> : vector<16xf32>
    %110 = vector.multi_reduction <maximumf>, %109, %cst_58 [1] : vector<16x16xf32> to vector<16xf32>
    %111 = vector.shape_cast %110 : vector<16xf32> to vector<16x1xf32>
    %112 = vector.broadcast %111 : vector<16x1xf32> to vector<16x16xf32>
    %113 = arith.subf %109, %112 : vector<16x16xf32>
    %114 = math.exp %113 : vector<16x16xf32>
    %cst_59 = arith.constant dense<0.000000e+00> : vector<16xf32>
    %115 = vector.multi_reduction <add>, %114, %cst_59 [1] : vector<16x16xf32> to vector<16xf32>
    %116 = vector.shape_cast %115 : vector<16xf32> to vector<16x1xf32>
    %cst_60 = arith.constant 1.000000e+00 : f32
    %117 = vector.broadcast %cst_60 : f32 to vector<16x1xf32>
    %118 = arith.divf %117, %116 : vector<16x1xf32>
    %119 = vector.broadcast %118 : vector<16x1xf32> to vector<16x16xf32>
    %120 = arith.mulf %114, %119 : vector<16x16xf32>
    %121 = arith.truncf %120 : vector<16x16xf32> to vector<16x16xbf16>
    %cst_61 = arith.constant dense<0.000000e+00> : vector<16x8xf32>
    %122 = tpu.matmul %121, %104, %cst_61 {dimension_numbers = #tpu.dot_dimension_numbers<[1], [0], [0], [1], [0, 0, 1, 1], [], []>} : vector<16x16xbf16>, vector<16x8xbf16>, vector<16x8xf32> -> vector<16x8xf32>
    %123 = arith.truncf %122 : vector<16x8xf32> to vector<16x8xbf16>
    %c0_62 = arith.constant 0 : index
    %c24_63 = arith.constant 24 : index
    %124 = vector.load %arg9[%c0_62, %c24_63] : memref<16x32xbf16, #tpu.memory_space<vmem>>, vector<16x8xbf16>
    tpu.vector_store %arg9[%c0_62, %c24_63], %123 {strides = array<i32>} : memref<16x32xbf16, #tpu.memory_space<vmem>>, vector<16x8xbf16>,
    %c0_64 = arith.constant 0 : index
    %c0_65 = arith.constant 0 : index
    %125 = vector.load %arg9[%c0_64, %c0_65] : memref<16x32xbf16, #tpu.memory_space<vmem>>, vector<16x32xbf16>
    %c0_66 = arith.constant 0 : index
    %c0_67 = arith.constant 0 : index
    %126 = vector.load %arg5[%c0_66, %c0_67] : memref<32x32xbf16, #tpu.memory_space<vmem>>, vector<32x32xbf16>
    %cst_68 = arith.constant dense<0.000000e+00> : vector<16x32xf32>
    %127 = tpu.matmul %125, %126, %cst_68 {dimension_numbers = #tpu.dot_dimension_numbers<[1], [0], [0], [1], [0, 0, 1, 1], [], []>} : vector<16x32xbf16>, vector<32x32xbf16>, vector<16x32xf32> -> vector<16x32xf32>
    %c0_69 = arith.constant 0 : index
    %c0_70 = arith.constant 0 : index
    %128 = vector.load %arg6[%c0_69, %c0_70] : memref<1x32xf32, #tpu.memory_space<vmem>>, vector<1x32xf32>
    %129 = vector.broadcast %128 : vector<1x32xf32> to vector<16x32xf32>
    %130 = arith.addf %127, %129 : vector<16x32xf32>
    %c0_71 = arith.constant 0 : index
    %c0_72 = arith.constant 0 : index
    %c0_73 = arith.constant 0 : index
    %131 = vector.load %arg1[%c0_71, %c0_72, %c0_73] : memref<1x16x32xbf16, #tpu.memory_space<vmem>>, vector<1x16x32xbf16>
    %132 = vector.shape_cast %131 : vector<1x16x32xbf16> to vector<16x32xbf16>
    %133 = arith.extf %132 : vector<16x32xbf16> to vector<16x32xf32>
    %134 = arith.addf %130, %133 : vector<16x32xf32>
    %135 = arith.truncf %134 : vector<16x32xf32> to vector<16x32xbf16>
    %c0_74 = arith.constant 0 : index
    %c0_75 = arith.constant 0 : index
    %c0_76 = arith.constant 0 : index
    %136 = vector.load %arg7[%c0_74, %c0_75, %c0_76] : memref<1x16x32xbf16, #tpu.memory_space<vmem>>, vector<1x16x32xbf16>
    %137 = vector.shape_cast %136 : vector<1x16x32xbf16> to vector<16x32xbf16>
    %138 = vector.shape_cast %135 : vector<16x32xbf16> to vector<1x16x32xbf16>
    tpu.vector_store %arg7[%c0_74, %c0_75, %c0_76], %138 {strides = array<i32>} : memref<1x16x32xbf16, #tpu.memory_space<vmem>>, vector<1x16x32xbf16>,
    return
  }
  func.func @transform_0(%arg0: i32) -> (i32, i32, i32) {
    %c0_i32 = arith.constant 0 : i32
    %c0_i32_0 = arith.constant 0 : i32
    %c0_i32_1 = arith.constant 0 : i32
    return %arg0, %c0_i32, %c0_i32_0 : i32, i32, i32
  }
  func.func @transform_1(%arg0: i32) -> (i32, i32) {
    %c0_i32 = arith.constant 0 : i32
    %c0_i32_0 = arith.constant 0 : i32
    %c0_i32_1 = arith.constant 0 : i32
    return %c0_i32, %c0_i32_0 : i32, i32
  }
  func.func @transform_2(%arg0: i32) -> (i32, i32) {
    %c0_i32 = arith.constant 0 : i32
    %c0_i32_0 = arith.constant 0 : i32
    %c0_i32_1 = arith.constant 0 : i32
    return %c0_i32, %c0_i32_0 : i32, i32
  }
  func.func @transform_3(%arg0: i32) -> (i32, i32) {
    %c0_i32 = arith.constant 0 : i32
    %c0_i32_0 = arith.constant 0 : i32
    %c0_i32_1 = arith.constant 0 : i32
    return %c0_i32, %c0_i32_0 : i32, i32
  }
  func.func @transform_4(%arg0: i32) -> (i32, i32) {
    %c0_i32 = arith.constant 0 : i32
    %c0_i32_0 = arith.constant 0 : i32
    %c0_i32_1 = arith.constant 0 : i32
    return %c0_i32, %c0_i32_0 : i32, i32
  }
  func.func @transform_5(%arg0: i32) -> (i32, i32) {
    %c0_i32 = arith.constant 0 : i32
    %c0_i32_0 = arith.constant 0 : i32
    %c0_i32_1 = arith.constant 0 : i32
    return %c0_i32, %c0_i32_0 : i32, i32
  }
  func.func @transform_6(%arg0: i32) -> (i32, i32, i32) {
    %c0_i32 = arith.constant 0 : i32
    %c0_i32_0 = arith.constant 0 : i32
    %c0_i32_1 = arith.constant 0 : i32
    return %arg0, %c0_i32, %c0_i32_0 : i32, i32, i32
  }
}

module attributes {stable_mosaic.version = 11 : i64} {
  func.func @_ln_mm_kernel(%arg0: i32, %arg1: i32, %arg2: memref<16x32xbf16, #tpu.memory_space<vmem>>, %arg3: memref<1x32xf32, #tpu.memory_space<vmem>>, %arg4: memref<1x32xf32, #tpu.memory_space<vmem>>, %arg5: memref<32x256xbf16, #tpu.memory_space<vmem>>, %arg6: memref<1x256xf32, #tpu.memory_space<vmem>>, %arg7: memref<16x256xf32, #tpu.memory_space<vmem>>) attributes {dimension_semantics = [#tpu.dimension_semantics<parallel>, #tpu.dimension_semantics<parallel>], iteration_bounds = array<i64: 1, 1>, scalar_prefetch = 0 : i64, scratch_operands = 0 : i64, tpu.core_type = #tpu.core_type<tc>, window_params = [{transform_indices = @transform_0, window_bounds = array<i64: 16, 32>}, {pipeline_mode = #tpu.pipeline_mode<synchronous>, transform_indices = @transform_1, window_bounds = array<i64: 1, 32>}, {pipeline_mode = #tpu.pipeline_mode<synchronous>, transform_indices = @transform_2, window_bounds = array<i64: 1, 32>}, {transform_indices = @transform_3, window_bounds = array<i64: 32, 256>}, {transform_indices = @transform_4, window_bounds = array<i64: 1, 256>}, {transform_indices = @transform_5, window_bounds = array<i64: 16, 256>}]} {
    %c0 = arith.constant 0 : index
    %c0_0 = arith.constant 0 : index
    %0 = vector.load %arg2[%c0, %c0_0] : memref<16x32xbf16, #tpu.memory_space<vmem>>, vector<16x32xbf16>
    %1 = arith.extf %0 : vector<16x32xbf16> to vector<16x32xf32>
    %cst = arith.constant dense<0.000000e+00> : vector<16xf32>
    %2 = vector.multi_reduction <add>, %1, %cst [1] : vector<16x32xf32> to vector<16xf32>
    %3 = vector.shape_cast %2 : vector<16xf32> to vector<16x1xf32>
    %cst_1 = arith.constant 3.200000e+01 : f32
    %4 = vector.broadcast %cst_1 : f32 to vector<16x1xf32>
    %5 = arith.divf %3, %4 : vector<16x1xf32>
    %6 = vector.broadcast %5 : vector<16x1xf32> to vector<16x32xf32>
    %7 = arith.subf %1, %6 : vector<16x32xf32>
    %8 = arith.mulf %7, %7 : vector<16x32xf32>
    %cst_2 = arith.constant dense<0.000000e+00> : vector<16xf32>
    %9 = vector.multi_reduction <add>, %8, %cst_2 [1] : vector<16x32xf32> to vector<16xf32>
    %10 = vector.shape_cast %9 : vector<16xf32> to vector<16x1xf32>
    %cst_3 = arith.constant 3.200000e+01 : f32
    %11 = vector.broadcast %cst_3 : f32 to vector<16x1xf32>
    %12 = arith.divf %10, %11 : vector<16x1xf32>
    %cst_4 = arith.constant 9.99999997E-7 : f32
    %13 = vector.broadcast %cst_4 : f32 to vector<16x1xf32>
    %14 = arith.addf %12, %13 : vector<16x1xf32>
    %15 = math.rsqrt %14 : vector<16x1xf32>
    %16 = vector.broadcast %15 : vector<16x1xf32> to vector<16x32xf32>
    %17 = arith.mulf %7, %16 : vector<16x32xf32>
    %c0_5 = arith.constant 0 : index
    %c0_6 = arith.constant 0 : index
    %18 = vector.load %arg3[%c0_5, %c0_6] : memref<1x32xf32, #tpu.memory_space<vmem>>, vector<1x32xf32>
    %19 = vector.broadcast %18 : vector<1x32xf32> to vector<16x32xf32>
    %20 = arith.mulf %17, %19 : vector<16x32xf32>
    %c0_7 = arith.constant 0 : index
    %c0_8 = arith.constant 0 : index
    %21 = vector.load %arg4[%c0_7, %c0_8] : memref<1x32xf32, #tpu.memory_space<vmem>>, vector<1x32xf32>
    %22 = vector.broadcast %21 : vector<1x32xf32> to vector<16x32xf32>
    %23 = arith.addf %20, %22 : vector<16x32xf32>
    %24 = arith.truncf %23 : vector<16x32xf32> to vector<16x32xbf16>
    %c0_9 = arith.constant 0 : index
    %c0_10 = arith.constant 0 : index
    %25 = vector.load %arg5[%c0_9, %c0_10] : memref<32x256xbf16, #tpu.memory_space<vmem>>, vector<32x256xbf16>
    %cst_11 = arith.constant dense<0.000000e+00> : vector<16x256xf32>
    %26 = tpu.matmul %24, %25, %cst_11 {dimension_numbers = #tpu.dot_dimension_numbers<[1], [0], [0], [1], [0, 0, 1, 1], [], []>} : vector<16x32xbf16>, vector<32x256xbf16>, vector<16x256xf32> -> vector<16x256xf32>
    %c0_12 = arith.constant 0 : index
    %c0_13 = arith.constant 0 : index
    %27 = vector.load %arg6[%c0_12, %c0_13] : memref<1x256xf32, #tpu.memory_space<vmem>>, vector<1x256xf32>
    %28 = vector.broadcast %27 : vector<1x256xf32> to vector<16x256xf32>
    %29 = arith.addf %26, %28 : vector<16x256xf32>
    %c0_14 = arith.constant 0 : index
    %c0_15 = arith.constant 0 : index
    %30 = vector.load %arg7[%c0_14, %c0_15] : memref<16x256xf32, #tpu.memory_space<vmem>>, vector<16x256xf32>
    tpu.vector_store %arg7[%c0_14, %c0_15], %29 {strides = array<i32>} : memref<16x256xf32, #tpu.memory_space<vmem>>, vector<16x256xf32>,
    return
  }
  func.func @transform_0(%arg0: i32, %arg1: i32) -> (i32, i32) {
    %c0_i32 = arith.constant 0 : i32
    %c0_i32_0 = arith.constant 0 : i32
    return %arg0, %c0_i32 : i32, i32
  }
  func.func @transform_1(%arg0: i32, %arg1: i32) -> (i32, i32) {
    %c0_i32 = arith.constant 0 : i32
    %c0_i32_0 = arith.constant 0 : i32
    %c0_i32_1 = arith.constant 0 : i32
    return %c0_i32, %c0_i32_0 : i32, i32
  }
  func.func @transform_2(%arg0: i32, %arg1: i32) -> (i32, i32) {
    %c0_i32 = arith.constant 0 : i32
    %c0_i32_0 = arith.constant 0 : i32
    %c0_i32_1 = arith.constant 0 : i32
    return %c0_i32, %c0_i32_0 : i32, i32
  }
  func.func @transform_3(%arg0: i32, %arg1: i32) -> (i32, i32) {
    %c0_i32 = arith.constant 0 : i32
    %c0_i32_0 = arith.constant 0 : i32
    return %c0_i32, %arg1 : i32, i32
  }
  func.func @transform_4(%arg0: i32, %arg1: i32) -> (i32, i32) {
    %c0_i32 = arith.constant 0 : i32
    %c0_i32_0 = arith.constant 0 : i32
    return %c0_i32, %arg1 : i32, i32
  }
  func.func @transform_5(%arg0: i32, %arg1: i32) -> (i32, i32) {
    %c0_i32 = arith.constant 0 : i32
    return %arg0, %arg1 : i32, i32
  }
}

</mosaic_0001>

<llo_original>
// kernel: _lambda_.11
$region0: #{_lambda_.11}
  #allocation0 [shape = 'u32[]', space=smem, size = 0x4, offset = 0x4, fixed_abs, tag = 'smem constant byte address 0x4 - core index']
  #allocation1 [shape = 'u32[144,128]{1,0:T(1,128)}', space=vmem, size = 0x12000, scoped, tag = 'internal scratch']
  #allocation2 [shape = 'f32[16,128]{1,0:T(8,128)}', space=vmem, size = 0x2000, scoped, tag = 'scratch operand']
  %s0 = inlined_call_operand.vmem [shape: bf16[16,256], index: 0, kind: input, shape index: {}]
  %s1 = inlined_call_operand.vmem [shape: bf16[256,128], index: 1, kind: input, shape index: {}]
  %s2 = inlined_call_operand.vmem [shape: f32[1,128], index: 2, kind: input, shape index: {}]
  %s3 = inlined_call_operand.vmem [shape: bf16[16,128], index: 3, kind: output, shape index: {}]
  %s4 = sld [smem:[#allocation0]]
  $region30: #{_lambda_.11} parent=0
    _
  %s6 = ssub.s32 1, %s4
  %s7 = scalar_select 0, %s6, %s4
  // Predicated region
  $region2: #{_lambda_.11} parent=0 // pred_check
    _
  $region3: #{_lambda_.11} parent=0 // pred_check_branch
    %9 = sbr.rel (0) target = $region5
  $region4: #{_lambda_.11} parent=0 // pred_region
    _
  $region5: #{_lambda_.11} parent=0 // pred_fallthru
    _
  // Predicated region
  $region6: #{_lambda_.11} parent=0 // pred_check
    _
  $region7: #{_lambda_.11} parent=0 // pred_check_branch
    %11 = sbr.rel (0) target = $region9
  $region8: #{_lambda_.11} parent=0 // pred_region
    _
  $region9: #{_lambda_.11} parent=0 // pred_fallthru
    _
  // Predicated region
  $region10: #{_lambda_.11} parent=0 // pred_check
    _
  $region11: #{_lambda_.11} parent=0 // pred_check_branch
    %13 = sbr.rel (0) target = $region13
  $region12: #{_lambda_.11} parent=0 // pred_region
    _
  $region13: #{_lambda_.11} parent=0 // pred_fallthru
    _
  %p15 = scmp.eq.s32.totalorder 0, 0
  // Predicated region
  $region14: #{_lambda_.11} parent=0 // pred_check
    %p16 = pneg %p15
  $region15: #{_lambda_.11} parent=0 // pred_check_branch
    %18 = sbr.rel (%p16) target = $region17
  $region16: #{_lambda_.11} parent=0 // pred_region
    %19 = vst [vmem:[#allocation2] sm:$0xff] 0.0
    %20 = vst [vmem:[#allocation2 + $0x8] sm:$0xff] 0.0
  $region17: #{_lambda_.11} parent=0 // pred_fallthru
    _
  %v21 = vld [vmem:[#allocation2] sm:$0xff]
  %v22 = vld [vmem:[#allocation2 + $0x8] sm:$0xff]
  %v23 = vld [vmem:[%s0] sm:$0xff]
  %v24 = vld [vmem:[%s0 + $0x8] sm:$0xff]
  %v25 = vld [vmem:[%s1] sm:$0xf]
  %v26 = vld [vmem:[%s1 + $0x4] sm:$0xf]
  %v27 = vld [vmem:[%s1 + $0x8] sm:$0xf]
  %v28 = vld [vmem:[%s1 + $0xc] sm:$0xf]
  %v29 = vld [vmem:[%s1 + $0x10] sm:$0xf]
  %v30 = vld [vmem:[%s1 + $0x14] sm:$0xf]
  %v31 = vld [vmem:[%s1 + $0x18] sm:$0xf]
  %v32 = vld [vmem:[%s1 + $0x1c] sm:$0xf]
  %v33 = vld [vmem:[%s1 + $0x20] sm:$0xf]
  %v34 = vld [vmem:[%s1 + $0x24] sm:$0xf]
  %v35 = vld [vmem:[%s1 + $0x28] sm:$0xf]
  %v36 = vld [vmem:[%s1 + $0x2c] sm:$0xf]
  %v37 = vld [vmem:[%s1 + $0x30] sm:$0xf]
  %v38 = vld [vmem:[%s1 + $0x34] sm:$0xf]
  %v39 = vld [vmem:[%s1 + $0x38] sm:$0xf]
  %v40 = vld [vmem:[%s1 + $0x3c] sm:$0xf]
  %v41 = vld [vmem:[%s1 + $0x40] sm:$0xf]
  %v42 = vld [vmem:[%s1 + $0x44] sm:$0xf]
  %v43 = vld [vmem:[%s1 + $0x48] sm:$0xf]
  %v44 = vld [vmem:[%s1 + $0x4c] sm:$0xf]
  %v45 = vld [vmem:[%s1 + $0x50] sm:$0xf]
  %v46 = vld [vmem:[%s1 + $0x54] sm:$0xf]
  %v47 = vld [vmem:[%s1 + $0x58] sm:$0xf]
  %v48 = vld [vmem:[%s1 + $0x5c] sm:$0xf]
  %v49 = vld [vmem:[%s1 + $0x60] sm:$0xf]
  %v50 = vld [vmem:[%s1 + $0x64] sm:$0xf]
  %v51 = vld [vmem:[%s1 + $0x68] sm:$0xf]
  %v52 = vld [vmem:[%s1 + $0x6c] sm:$0xf]
  %v53 = vld [vmem:[%s1 + $0x70] sm:$0xf]
  %v54 = vld [vmem:[%s1 + $0x74] sm:$0xf]
  %v55 = vld [vmem:[%s1 + $0x78] sm:$0xf]
  %v56 = vld [vmem:[%s1 + $0x7c] sm:$0xf]
  %v59 = vunpack.c.l.b16 %v23
  %v60 = vunpack.c.h.b16 %v23
  %v61 = vunpack.c.l.b16 %v24
  %v62 = vunpack.c.h.b16 %v24
  %v63 = vpack.c.b16 %v61, %v59
  %v64 = vpack.c.b16 %v62, %v60
  %v99 = vunpack.c.l.b16 %v25
  %v100 = vunpack.c.l.b16 %v26
  %v101 = vunpack.c.l.b16 %v27
  %v102 = vunpack.c.l.b16 %v28
  %v103 = vunpack.c.l.b16 %v29
  %v104 = vunpack.c.l.b16 %v30
  %v105 = vunpack.c.l.b16 %v31
  %v106 = vunpack.c.l.b16 %v32
  %v107 = vunpack.c.l.b16 %v33
  %v108 = vunpack.c.l.b16 %v34
  %v109 = vunpack.c.l.b16 %v35
  %v110 = vunpack.c.l.b16 %v36
  %v111 = vunpack.c.l.b16 %v37
  %v112 = vunpack.c.l.b16 %v38
  %v113 = vunpack.c.l.b16 %v39
  %v114 = vunpack.c.l.b16 %v40
  %v115 = vunpack.c.l.b16 %v41
  %v116 = vunpack.c.l.b16 %v42
  %v117 = vunpack.c.l.b16 %v43
  %v118 = vunpack.c.l.b16 %v44
  %v119 = vunpack.c.l.b16 %v45
  %v120 = vunpack.c.l.b16 %v46
  %v121 = vunpack.c.l.b16 %v47
  %v122 = vunpack.c.l.b16 %v48
  %v123 = vunpack.c.l.b16 %v49
  %v124 = vunpack.c.l.b16 %v50
  %v125 = vunpack.c.l.b16 %v51
  %v126 = vunpack.c.l.b16 %v52
  %v127 = vunpack.c.l.b16 %v53
  %v128 = vunpack.c.l.b16 %v54
  %v129 = vunpack.c.l.b16 %v55
  %v130 = vunpack.c.l.b16 %v56
  %v131 = vpack.c.b16 %v100, %v99
  %v132 = vpack.c.b16 %v102, %v101
  %v133 = vpack.c.b16 %v104, %v103
  %v134 = vpack.c.b16 %v106, %v105
  %v135 = vpack.c.b16 %v108, %v107
  %v136 = vpack.c.b16 %v110, %v109
  %v137 = vpack.c.b16 %v112, %v111
  %v138 = vpack.c.b16 %v114, %v113
  %v139 = vpack.c.b16 %v116, %v115
  %v140 = vpack.c.b16 %v118, %v117
  %v141 = vpack.c.b16 %v120, %v119
  %v142 = vpack.c.b16 %v122, %v121
  %v143 = vpack.c.b16 %v124, %v123
  %v144 = vpack.c.b16 %v126, %v125
  %v145 = vpack.c.b16 %v128, %v127
  %v146 = vpack.c.b16 %v130, %v129
  %163 = vmatprep.subr.bf16.mxu0 0
  %164 = vmatpush1.bf16.msra.mxu0 %v131
  %165 = vmatprep.subr.bf16.mxu0 0
  %166 = vmatpush1.bf16.msra.mxu0 %v132
  %167 = vmatprep.subr.bf16.mxu0 0
  %168 = vmatpush1.bf16.msra.mxu0 %v133
  %169 = vmatprep.subr.bf16.mxu0 0
  %170 = vmatpush1.bf16.msra.mxu0 %v134
  %171 = vmatprep.subr.bf16.mxu0 0
  %172 = vmatpush1.bf16.msra.mxu0 %v135
  %173 = vmatprep.subr.bf16.mxu0 0
  %174 = vmatpush1.bf16.msra.mxu0 %v136
  %175 = vmatprep.subr.bf16.mxu0 0
  %176 = vmatpush1.bf16.msra.mxu0 %v137
  %177 = vmatprep.subr.bf16.mxu0 0
  %178 = vmatpush1.bf16.msra.mxu0 %v138
  %179 = vmatprep.subr.bf16.mxu0 0
  %180 = vmatpush1.bf16.msra.mxu0 %v139
  %181 = vmatprep.subr.bf16.mxu0 0
  %182 = vmatpush1.bf16.msra.mxu0 %v140
  %183 = vmatprep.subr.bf16.mxu0 0
  %184 = vmatpush1.bf16.msra.mxu0 %v141
  %185 = vmatprep.subr.bf16.mxu0 0
  %186 = vmatpush1.bf16.msra.mxu0 %v142
  %187 = vmatprep.subr.bf16.mxu0 0
  %188 = vmatpush1.bf16.msra.mxu0 %v143
  %189 = vmatprep.subr.bf16.mxu0 0
  %190 = vmatpush1.bf16.msra.mxu0 %v144
  %191 = vmatprep.subr.bf16.mxu0 0
  %192 = vmatpush1.bf16.msra.mxu0 %v145
  %193 = vmatprep.subr.bf16.mxu0 0
  %194 = vmatpush1.bf16.msra.mxu0 %v146
  %195 = vmatprep.mubr.bf16.mxu0 %v64
  %196 = vmatmul.mubr.bf16.gmra.mrb[0].mxu0 %v63
  %v197 = vpop.f32.mrb[0].mxu0
  %v198 = vadd.f32 0.0, %v197
  %v199 = vpop.f32.mrb[0].mxu0
  %v200 = vpop.f32.mrb[0].mxu0
  %v201 = vadd.f32 0.0, %v200
  %v202 = vpop.f32.mrb[0].mxu0
  %203 = vdwg.mxu0
  %v204 = vadd.f32 %v21, %v198
  %v205 = vadd.f32 %v22, %v201
  %206 = vst [vmem:[#allocation2] sm:$0xff] %v204
  %207 = vst [vmem:[#allocation2 + $0x8] sm:$0xff] %v205
  // Predicated region
  $region18: #{_lambda_.11} parent=0 // pred_check
    %p208 = pneg %p15
  $region19: #{_lambda_.11} parent=0 // pred_check_branch
    %210 = sbr.rel (%p208) target = $region21
  $region20: #{_lambda_.11} parent=0 // pred_region
    %v211 = vld [vmem:[#allocation2] sm:$0xff]
    %v212 = vld [vmem:[#allocation2 + $0x8] sm:$0xff]
    %v213 = vld [vmem:[%s2] sm:$0x1]
    %v215 = vlaneseq
    %v216 = vshrl.u32 %v215, 7
    %v217 = vsub.s32 0, %v216
    %v218 = vrot.slane %v213, %v217
    %v220 = vadd.f32 %v211, %v218
    %v221 = vadd.f32 %v212, %v218
    %v222 = vpack.c.bf16 %v221, %v220
    %v224 = vunpack.c.l.b16 %v222
    %v225 = vunpack.c.h.b16 %v222
    %v226 = vpack.c.b16 %v224, %v224
    %v227 = vpack.c.b16 %v225, %v225
    %230 = vst [vmem:[%s3] sm:$0xf] %v226
    %231 = vst [vmem:[%s3 + $0x4] sm:$0xf] %v227
  $region21: #{_lambda_.11} parent=0 // pred_fallthru
    _
  // Predicated region
  $region22: #{_lambda_.11} parent=0 // pred_check
    _
  $region23: #{_lambda_.11} parent=0 // pred_check_branch
    %233 = sbr.rel (0) target = $region25
  $region24: #{_lambda_.11} parent=0 // pred_region
    _
  $region25: #{_lambda_.11} parent=0 // pred_fallthru
    _
  // Predicated region
  $region26: #{_lambda_.11} parent=0 // pred_check
    _
  $region27: #{_lambda_.11} parent=0 // pred_check_branch
    %235 = sbr.rel (0) target = $region29
  $region28: #{_lambda_.11} parent=0 // pred_region
    _
  $region29: #{_lambda_.11} parent=0 // pred_fallthru
    _

// kernel: _lambda_.16
$region0: #{_lambda_.16}
  #allocation0 [shape = 'u32[]', space=smem, size = 0x4, offset = 0x4, fixed_abs, tag = 'smem constant byte address 0x4 - core index']
  #allocation1 [shape = 'u32[144,128]{1,0:T(1,128)}', space=vmem, size = 0x12000, scoped, tag = 'internal scratch']
  %s0 = inlined_call_operand.vmem [shape: bf16[32,32], index: 0, kind: input, shape index: {}]
  %s1 = inlined_call_operand.vmem [shape: f32[1,32], index: 1, kind: input, shape index: {}]
  %s2 = inlined_call_operand.vmem [shape: f32[1,32], index: 2, kind: input, shape index: {}]
  %s3 = inlined_call_operand.vmem [shape: bf16[32,128], index: 3, kind: input, shape index: {}]
  %s4 = inlined_call_operand.vmem [shape: f32[1,128], index: 4, kind: input, shape index: {}]
  %s5 = inlined_call_operand.vmem [shape: bf16[32,128], index: 5, kind: output, shape index: {}]
  %s6 = sld [smem:[#allocation0]]
  $region30: #{_lambda_.16} parent=0
    _
  %s8 = ssub.s32 1, %s6
  %s9 = scalar_select 0, %s8, %s6
  // Predicated region
  $region2: #{_lambda_.16} parent=0 // pred_check
    _
  $region3: #{_lambda_.16} parent=0 // pred_check_branch
    %11 = sbr.rel (0) target = $region5
  $region4: #{_lambda_.16} parent=0 // pred_region
    _
  $region5: #{_lambda_.16} parent=0 // pred_fallthru
    _
  // Predicated region
  $region6: #{_lambda_.16} parent=0 // pred_check
    _
  $region7: #{_lambda_.16} parent=0 // pred_check_branch
    %13 = sbr.rel (0) target = $region9
  $region8: #{_lambda_.16} parent=0 // pred_region
    _
  $region9: #{_lambda_.16} parent=0 // pred_fallthru
    _
  // Predicated region
  $region10: #{_lambda_.16} parent=0 // pred_check
    _
  $region11: #{_lambda_.16} parent=0 // pred_check_branch
    %15 = sbr.rel (0) target = $region13
  $region12: #{_lambda_.16} parent=0 // pred_region
    _
  $region13: #{_lambda_.16} parent=0 // pred_fallthru
    _
  // Predicated region
  $region14: #{_lambda_.16} parent=0 // pred_check
    _
  $region15: #{_lambda_.16} parent=0 // pred_check_branch
    %17 = sbr.rel (0) target = $region17
  $region16: #{_lambda_.16} parent=0 // pred_region
    _
  $region17: #{_lambda_.16} parent=0 // pred_fallthru
    _
  // Predicated region
  $region18: #{_lambda_.16} parent=0 // pred_check
    _
  $region19: #{_lambda_.16} parent=0 // pred_check_branch
    %19 = sbr.rel (0) target = $region21
  $region20: #{_lambda_.16} parent=0 // pred_region
    _
  $region21: #{_lambda_.16} parent=0 // pred_fallthru
    _
  %v21 = vld [vmem:[%s0] sm:$0xf]
  %v22 = vld [vmem:[%s0 + $0x4] sm:$0xf]
  %v23 = vld [vmem:[%s0 + $0x8] sm:$0xf]
  %v24 = vld [vmem:[%s0 + $0xc] sm:$0xf]
  %v25 = vunpack.c.l.bf16 %v21
  %v26 = vunpack.c.l.bf16 %v22
  %v27 = vunpack.c.l.bf16 %v23
  %v28 = vunpack.c.l.bf16 %v24
  %vm29 = vcmask 261120
  %v30 = vsel %vm29, %v25, 0.0
  %31 = vadd.xlane.f32.xlu0 %v30
  %v32 = vpop.xlane.xlu0 %31
  %v33 = vsel %vm29, %v26, 0.0
  %34 = vadd.xlane.f32.xlu0 %v33
  %v35 = vpop.xlane.xlu0 %34
  %v36 = vsel %vm29, %v27, 0.0
  %37 = vadd.xlane.f32.xlu0 %v36
  %v38 = vpop.xlane.xlu0 %37
  %v39 = vsel %vm29, %v28, 0.0
  %40 = vadd.xlane.f32.xlu0 %v39
  %v41 = vpop.xlane.xlu0 %40
  %v42 = vrcp.pop 32.0
  %v43 = vmul.f32 %v32, %v42
  %v44 = vmul.f32 %v35, %v42
  %v45 = vmul.f32 %v38, %v42
  %v46 = vmul.f32 %v41, %v42
  %v47 = vsub.f32 %v25, %v43
  %v48 = vsub.f32 %v26, %v44
  %v49 = vsub.f32 %v27, %v45
  %v50 = vsub.f32 %v28, %v46
  %v51 = vmul.f32 %v47, %v47
  %v52 = vmul.f32 %v48, %v48
  %v53 = vmul.f32 %v49, %v49
  %v54 = vmul.f32 %v50, %v50
  %v55 = vsel %vm29, %v51, 0.0
  %56 = vadd.xlane.f32.xlu0 %v55
  %v57 = vpop.xlane.xlu0 %56
  %v58 = vsel %vm29, %v52, 0.0
  %59 = vadd.xlane.f32.xlu0 %v58
  %v60 = vpop.xlane.xlu0 %59
  %v61 = vsel %vm29, %v53, 0.0
  %62 = vadd.xlane.f32.xlu0 %v61
  %v63 = vpop.xlane.xlu0 %62
  %v64 = vsel %vm29, %v54, 0.0
  %65 = vadd.xlane.f32.xlu0 %v64
  %v66 = vpop.xlane.xlu0 %65
  %v67 = vmul.f32 %v57, %v42
  %v68 = vmul.f32 %v60, %v42
  %v69 = vmul.f32 %v63, %v42
  %v70 = vmul.f32 %v66, %v42
  %v71 = vadd.f32 %v67, 1e-06
  %v72 = vadd.f32 %v68, 1e-06
  %v73 = vadd.f32 %v69, 1e-06
  %v74 = vadd.f32 %v70, 1e-06
  %v75 = vrsqrt.pop %v71
  %v76 = vrsqrt.pop %v72
  %v77 = vrsqrt.pop %v73
  %v78 = vrsqrt.pop %v74
  %v79 = vmul.f32 %v47, %v75
  %v80 = vmul.f32 %v48, %v76
  %v81 = vmul.f32 %v49, %v77
  %v82 = vmul.f32 %v50, %v78
  %v83 = vld [vmem:[%s1] sm:$0x1]
  %v85 = vlaneseq
  %v86 = vshrl.u32 %v85, 7
  %v87 = vsub.s32 0, %v86
  %v88 = vrot.slane %v83, %v87
  %v90 = vmul.f32 %v79, %v88
  %v91 = vmul.f32 %v80, %v88
  %v92 = vmul.f32 %v81, %v88
  %v93 = vmul.f32 %v82, %v88
  %v94 = vld [vmem:[%s2] sm:$0x1]
  %v96 = vlaneseq
  %v97 = vshrl.u32 %v96, 7
  %v98 = vsub.s32 0, %v97
  %v99 = vrot.slane %v94, %v98
  %v101 = vadd.f32 %v90, %v99
  %v102 = vadd.f32 %v91, %v99
  %v103 = vadd.f32 %v92, %v99
  %v104 = vadd.f32 %v93, %v99
  %v105 = vpack.c.bf16 %v102, %v101
  %v106 = vpack.c.bf16 %v104, %v103
  %v107 = vld [vmem:[%s3] sm:$0xf]
  %v108 = vld [vmem:[%s3 + $0x4] sm:$0xf]
  %v109 = vld [vmem:[%s3 + $0x8] sm:$0xf]
  %v110 = vld [vmem:[%s3 + $0xc] sm:$0xf]
  %v111 = vld [vmem:[%s4] sm:$0x1]
  %v113 = vlaneseq
  %v114 = vshrl.u32 %v113, 7
  %v115 = vsub.s32 0, %v114
  %v116 = vrot.slane %v111, %v115
  %v122 = vunpack.c.l.b16 %v107
  %v123 = vunpack.c.l.b16 %v108
  %v124 = vunpack.c.l.b16 %v109
  %v125 = vunpack.c.l.b16 %v110
  %v126 = vpack.c.b16 %v123, %v122
  %v127 = vpack.c.b16 %v125, %v124
  %v131 = vsel %vm29, %v105, 0
  %v134 = vsel %vm29, %v106, 0
  %136 = vmatprep.subr.bf16.mxu0 0
  %137 = vmatpush1.bf16.msra.mxu0 %v126
  %138 = vmatprep.subr.bf16.mxu0 0
  %139 = vmatpush1.bf16.msra.mxu0 %v127
  %140 = vmatprep.subr.bf16.mxu0 0
  %141 = vmatpush1.bf16.msra.mxu0 0
  %142 = vmatprep.subr.bf16.mxu0 0
  %143 = vmatpush1.bf16.msra.mxu0 0
  %144 = vmatprep.subr.bf16.mxu0 0
  %145 = vmatpush1.bf16.msra.mxu0 0
  %146 = vmatprep.subr.bf16.mxu0 0
  %147 = vmatpush1.bf16.msra.mxu0 0
  %148 = vmatprep.subr.bf16.mxu0 0
  %149 = vmatpush1.bf16.msra.mxu0 0
  %150 = vmatprep.subr.bf16.mxu0 0
  %151 = vmatpush1.bf16.msra.mxu0 0
  %152 = vmatprep.subr.bf16.mxu0 0
  %153 = vmatpush1.bf16.msra.mxu0 0
  %154 = vmatprep.subr.bf16.mxu0 0
  %155 = vmatpush1.bf16.msra.mxu0 0
  %156 = vmatprep.subr.bf16.mxu0 0
  %157 = vmatpush1.bf16.msra.mxu0 0
  %158 = vmatprep.subr.bf16.mxu0 0
  %159 = vmatpush1.bf16.msra.mxu0 0
  %160 = vmatprep.subr.bf16.mxu0 0
  %161 = vmatpush1.bf16.msra.mxu0 0
  %162 = vmatprep.subr.bf16.mxu0 0
  %163 = vmatpush1.bf16.msra.mxu0 0
  %164 = vmatprep.subr.bf16.mxu0 0
  %165 = vmatpush1.bf16.msra.mxu0 0
  %166 = vmatprep.subr.bf16.mxu0 0
  %167 = vmatpush1.bf16.msra.mxu0 0
  %168 = vmatprep.mubr.bf16.mxu0 0
  %169 = vmatmul.mubr.bf16.gmra.mrb[0].mxu0 %v131
  %v170 = vpop.f32.mrb[0].mxu0
  %v171 = vadd.f32 %v116, %v170
  %v172 = vpop.f32.mrb[0].mxu0
  %v173 = vpop.f32.mrb[0].mxu0
  %v174 = vadd.f32 %v116, %v173
  %v175 = vpop.f32.mrb[0].mxu0
  %176 = vmatprep.mubr.bf16.mxu0 0
  %177 = vmatmul.mubr.bf16.gmra.mrb[0].mxu0 %v134
  %v178 = vpop.f32.mrb[0].mxu0
  %v179 = vadd.f32 %v116, %v178
  %v180 = vpop.f32.mrb[0].mxu0
  %v181 = vpop.f32.mrb[0].mxu0
  %v182 = vadd.f32 %v116, %v181
  %v183 = vpop.f32.mrb[0].mxu0
  %184 = vdwg.mxu0
  %v185 = vpack.c.bf16 %v174, %v171
  %v186 = vpack.c.bf16 %v182, %v179
  %v189 = vunpack.c.l.b16 %v185
  %v190 = vunpack.c.h.b16 %v185
  %v191 = vunpack.c.l.b16 %v186
  %v192 = vunpack.c.h.b16 %v186
  %v193 = vpack.c.b16 %v189, %v189
  %v194 = vpack.c.b16 %v190, %v190
  %v195 = vpack.c.b16 %v191, %v191
  %v196 = vpack.c.b16 %v192, %v192
  %201 = vst [vmem:[%s5] sm:$0xf] %v193
  %202 = vst [vmem:[%s5 + $0x4] sm:$0xf] %v194
  %203 = vst [vmem:[%s5 + $0x8] sm:$0xf] %v195
  %204 = vst [vmem:[%s5 + $0xc] sm:$0xf] %v196
  // Predicated region
  $region22: #{_lambda_.16} parent=0 // pred_check
    _
  $region23: #{_lambda_.16} parent=0 // pred_check_branch
    %206 = sbr.rel (0) target = $region25
  $region24: #{_lambda_.16} parent=0 // pred_region
    _
  $region25: #{_lambda_.16} parent=0 // pred_fallthru
    _
  // Predicated region
  $region26: #{_lambda_.16} parent=0 // pred_check
    _
  $region27: #{_lambda_.16} parent=0 // pred_check_branch
    %208 = sbr.rel (0) target = $region29
  $region28: #{_lambda_.16} parent=0 // pred_region
    _
  $region29: #{_lambda_.16} parent=0 // pred_fallthru
    _

// kernel: _lambda_.13
$region0: #{_lambda_.13}
  #allocation0 [shape = 'u32[]', space=smem, size = 0x4, offset = 0x4, fixed_abs, tag = 'smem constant byte address 0x4 - core index']
  #allocation1 [shape = 'u32[144,128]{1,0:T(1,128)}', space=vmem, size = 0x12000, scoped, tag = 'internal scratch']
  #allocation2 [shape = 'f32[32,32]{1,0:T(8,128)}', space=vmem, size = 0x4000, scoped, tag = 'scratch operand']
  %s0 = inlined_call_operand.vmem [shape: bf16[32,32], index: 0, kind: input, shape index: {}]
  %s1 = inlined_call_operand.vmem [shape: f32[1,32], index: 1, kind: input, shape index: {}]
  %s2 = inlined_call_operand.vmem [shape: f32[1,32], index: 2, kind: input, shape index: {}]
  %s3 = inlined_call_operand.vmem [shape: bf16[32,128], index: 3, kind: input, shape index: {}]
  %s4 = inlined_call_operand.vmem [shape: f32[1,128], index: 4, kind: input, shape index: {}]
  %s5 = inlined_call_operand.vmem [shape: bf16[128,32], index: 5, kind: input, shape index: {}]
  %s6 = inlined_call_operand.vmem [shape: f32[1,32], index: 6, kind: input, shape index: {}]
  %s7 = inlined_call_operand.vmem [shape: bf16[32,32], index: 7, kind: output, shape index: {}]
  %s8 = sld [smem:[#allocation0]]
  $region38: #{_lambda_.13} parent=0
    _
  %s10 = ssub.s32 1, %s8
  %s11 = scalar_select 0, %s10, %s8
  // Predicated region
  $region2: #{_lambda_.13} parent=0 // pred_check
    _
  $region3: #{_lambda_.13} parent=0 // pred_check_branch
    %13 = sbr.rel (0) target = $region5
  $region4: #{_lambda_.13} parent=0 // pred_region
    _
  $region5: #{_lambda_.13} parent=0 // pred_fallthru
    _
  // Predicated region
  $region6: #{_lambda_.13} parent=0 // pred_check
    _
  $region7: #{_lambda_.13} parent=0 // pred_check_branch
    %15 = sbr.rel (0) target = $region9
  $region8: #{_lambda_.13} parent=0 // pred_region
    _
  $region9: #{_lambda_.13} parent=0 // pred_fallthru
    _
  // Predicated region
  $region10: #{_lambda_.13} parent=0 // pred_check
    _
  $region11: #{_lambda_.13} parent=0 // pred_check_branch
    %17 = sbr.rel (0) target = $region13
  $region12: #{_lambda_.13} parent=0 // pred_region
    _
  $region13: #{_lambda_.13} parent=0 // pred_fallthru
    _
  // Predicated region
  $region14: #{_lambda_.13} parent=0 // pred_check
    _
  $region15: #{_lambda_.13} parent=0 // pred_check_branch
    %19 = sbr.rel (0) target = $region17
  $region16: #{_lambda_.13} parent=0 // pred_region
    _
  $region17: #{_lambda_.13} parent=0 // pred_fallthru
    _
  // Predicated region
  $region18: #{_lambda_.13} parent=0 // pred_check
    _
  $region19: #{_lambda_.13} parent=0 // pred_check_branch
    %21 = sbr.rel (0) target = $region21
  $region20: #{_lambda_.13} parent=0 // pred_region
    _
  $region21: #{_lambda_.13} parent=0 // pred_fallthru
    _
  // Predicated region
  $region22: #{_lambda_.13} parent=0 // pred_check
    _
  $region23: #{_lambda_.13} parent=0 // pred_check_branch
    %23 = sbr.rel (0) target = $region25
  $region24: #{_lambda_.13} parent=0 // pred_region
    _
  $region25: #{_lambda_.13} parent=0 // pred_fallthru
    _
  // Predicated region
  $region26: #{_lambda_.13} parent=0 // pred_check
    _
  $region27: #{_lambda_.13} parent=0 // pred_check_branch
    %25 = sbr.rel (0) target = $region29
  $region28: #{_lambda_.13} parent=0 // pred_region
    _
  $region29: #{_lambda_.13} parent=0 // pred_fallthru
    _
  %v27 = vld [vmem:[%s0] sm:$0xf]
  %v28 = vld [vmem:[%s0 + $0x4] sm:$0xf]
  %v29 = vld [vmem:[%s0 + $0x8] sm:$0xf]
  %v30 = vld [vmem:[%s0 + $0xc] sm:$0xf]
  %v31 = vunpack.c.l.bf16 %v27
  %v32 = vunpack.c.l.bf16 %v28
  %v33 = vunpack.c.l.bf16 %v29
  %v34 = vunpack.c.l.bf16 %v30
  %vm35 = vcmask 261120
  %v36 = vsel %vm35, %v31, 0.0
  %37 = vadd.xlane.f32.xlu0 %v36
  %v38 = vpop.xlane.xlu0 %37
  %v39 = vsel %vm35, %v32, 0.0
  %40 = vadd.xlane.f32.xlu0 %v39
  %v41 = vpop.xlane.xlu0 %40
  %v42 = vsel %vm35, %v33, 0.0
  %43 = vadd.xlane.f32.xlu0 %v42
  %v44 = vpop.xlane.xlu0 %43
  %v45 = vsel %vm35, %v34, 0.0
  %46 = vadd.xlane.f32.xlu0 %v45
  %v47 = vpop.xlane.xlu0 %46
  %v48 = vrcp.pop 32.0
  %v49 = vmul.f32 %v38, %v48
  %v50 = vmul.f32 %v41, %v48
  %v51 = vmul.f32 %v44, %v48
  %v52 = vmul.f32 %v47, %v48
  %v53 = vsub.f32 %v31, %v49
  %v54 = vsub.f32 %v32, %v50
  %v55 = vsub.f32 %v33, %v51
  %v56 = vsub.f32 %v34, %v52
  %v57 = vmul.f32 %v53, %v53
  %v58 = vmul.f32 %v54, %v54
  %v59 = vmul.f32 %v55, %v55
  %v60 = vmul.f32 %v56, %v56
  %v61 = vsel %vm35, %v57, 0.0
  %62 = vadd.xlane.f32.xlu0 %v61
  %v63 = vpop.xlane.xlu0 %62
  %v64 = vsel %vm35, %v58, 0.0
  %65 = vadd.xlane.f32.xlu0 %v64
  %v66 = vpop.xlane.xlu0 %65
  %v67 = vsel %vm35, %v59, 0.0
  %68 = vadd.xlane.f32.xlu0 %v67
  %v69 = vpop.xlane.xlu0 %68
  %v70 = vsel %vm35, %v60, 0.0
  %71 = vadd.xlane.f32.xlu0 %v70
  %v72 = vpop.xlane.xlu0 %71
  %v73 = vmul.f32 %v63, %v48
  %v74 = vmul.f32 %v66, %v48
  %v75 = vmul.f32 %v69, %v48
  %v76 = vmul.f32 %v72, %v48
  %v77 = vadd.f32 %v73, 1e-06
  %v78 = vadd.f32 %v74, 1e-06
  %v79 = vadd.f32 %v75, 1e-06
  %v80 = vadd.f32 %v76, 1e-06
  %v81 = vrsqrt.pop %v77
  %v82 = vrsqrt.pop %v78
  %v83 = vrsqrt.pop %v79
  %v84 = vrsqrt.pop %v80
  %v85 = vmul.f32 %v53, %v81
  %v86 = vmul.f32 %v54, %v82
  %v87 = vmul.f32 %v55, %v83
  %v88 = vmul.f32 %v56, %v84
  %v89 = vld [vmem:[%s1] sm:$0x1]
  %v91 = vlaneseq
  %v92 = vshrl.u32 %v91, 7
  %v93 = vsub.s32 0, %v92
  %v94 = vrot.slane %v89, %v93
  %v96 = vmul.f32 %v85, %v94
  %v97 = vmul.f32 %v86, %v94
  %v98 = vmul.f32 %v87, %v94
  %v99 = vmul.f32 %v88, %v94
  %v100 = vld [vmem:[%s2] sm:$0x1]
  %v102 = vlaneseq
  %v103 = vshrl.u32 %v102, 7
  %v104 = vsub.s32 0, %v103
  %v105 = vrot.slane %v100, %v104
  %v107 = vadd.f32 %v96, %v105
  %v108 = vadd.f32 %v97, %v105
  %v109 = vadd.f32 %v98, %v105
  %v110 = vadd.f32 %v99, %v105
  %v111 = vpack.c.bf16 %v108, %v107
  %v112 = vpack.c.bf16 %v110, %v109
  %v113 = vld [vmem:[%s6] sm:$0x1]
  %v115 = vlaneseq
  %v116 = vshrl.u32 %v115, 7
  %v117 = vsub.s32 0, %v116
  %v118 = vrot.slane %v113, %v117
  %v120 = vadd.f32 %v31, %v118
  %v121 = vadd.f32 %v32, %v118
  %v122 = vadd.f32 %v33, %v118
  %v123 = vadd.f32 %v34, %v118
  %124 = vst.msk [vmem:[#allocation2] sm:$0xff] %vm35, %v120
  %125 = vst.msk [vmem:[#allocation2 + $0x8] sm:$0xff] %vm35, %v121
  %126 = vst.msk [vmem:[#allocation2 + $0x10] sm:$0xff] %vm35, %v122
  %127 = vst.msk [vmem:[#allocation2 + $0x18] sm:$0xff] %vm35, %v123
  %v128 = vld [vmem:[%s3] sm:$0xf]
  %v129 = vld [vmem:[%s3 + $0x4] sm:$0xf]
  %v130 = vld [vmem:[%s3 + $0x8] sm:$0xf]
  %v131 = vld [vmem:[%s3 + $0xc] sm:$0xf]
  %v132 = vld [vmem:[%s4] sm:$0x1]
  %v134 = vlaneseq
  %v135 = vshrl.u32 %v134, 7
  %v136 = vsub.s32 0, %v135
  %v137 = vrot.slane %v132, %v136
  %v143 = vunpack.c.l.b16 %v128
  %v144 = vunpack.c.l.b16 %v129
  %v145 = vunpack.c.l.b16 %v130
  %v146 = vunpack.c.l.b16 %v131
  %v147 = vpack.c.b16 %v144, %v143
  %v148 = vpack.c.b16 %v146, %v145
  %v152 = vsel %vm35, %v111, 0
  %v155 = vsel %vm35, %v112, 0
  %157 = vmatprep.subr.bf16.mxu0 0
  %158 = vmatpush1.bf16.msra.mxu0 %v147
  %159 = vmatprep.subr.bf16.mxu0 0
  %160 = vmatpush1.bf16.msra.mxu0 %v148
  %161 = vmatprep.subr.bf16.mxu0 0
  %162 = vmatpush1.bf16.msra.mxu0 0
  %163 = vmatprep.subr.bf16.mxu0 0
  %164 = vmatpush1.bf16.msra.mxu0 0
  %165 = vmatprep.subr.bf16.mxu0 0
  %166 = vmatpush1.bf16.msra.mxu0 0
  %167 = vmatprep.subr.bf16.mxu0 0
  %168 = vmatpush1.bf16.msra.mxu0 0
  %169 = vmatprep.subr.bf16.mxu0 0
  %170 = vmatpush1.bf16.msra.mxu0 0
  %171 = vmatprep.subr.bf16.mxu0 0
  %172 = vmatpush1.bf16.msra.mxu0 0
  %173 = vmatprep.subr.bf16.mxu0 0
  %174 = vmatpush1.bf16.msra.mxu0 0
  %175 = vmatprep.subr.bf16.mxu0 0
  %176 = vmatpush1.bf16.msra.mxu0 0
  %177 = vmatprep.subr.bf16.mxu0 0
  %178 = vmatpush1.bf16.msra.mxu0 0
  %179 = vmatprep.subr.bf16.mxu0 0
  %180 = vmatpush1.bf16.msra.mxu0 0
  %181 = vmatprep.subr.bf16.mxu0 0
  %182 = vmatpush1.bf16.msra.mxu0 0
  %183 = vmatprep.subr.bf16.mxu0 0
  %184 = vmatpush1.bf16.msra.mxu0 0
  %185 = vmatprep.subr.bf16.mxu0 0
  %186 = vmatpush1.bf16.msra.mxu0 0
  %187 = vmatprep.subr.bf16.mxu0 0
  %188 = vmatpush1.bf16.msra.mxu0 0
  %189 = vmatprep.mubr.bf16.mxu0 0
  %190 = vmatmul.mubr.bf16.gmra.mrb[0].mxu0 %v152
  %v191 = vpop.f32.mrb[0].mxu0
  %v192 = vadd.f32 %v137, %v191
  %v193 = vpop.f32.mrb[0].mxu0
  %v194 = vpop.f32.mrb[0].mxu0
  %v195 = vadd.f32 %v137, %v194
  %v196 = vpop.f32.mrb[0].mxu0
  %197 = vmatprep.mubr.bf16.mxu0 0
  %198 = vmatmul.mubr.bf16.gmra.mrb[0].mxu0 %v155
  %v199 = vpop.f32.mrb[0].mxu0
  %v200 = vadd.f32 %v137, %v199
  %v201 = vpop.f32.mrb[0].mxu0
  %v202 = vpop.f32.mrb[0].mxu0
  %v203 = vadd.f32 %v137, %v202
  %v204 = vpop.f32.mrb[0].mxu0
  %205 = vdwg.mxu0
  %v206 = vmul.f32 %v192, 0.5
  %v207 = vmul.f32 %v195, 0.5
  %v208 = vmul.f32 %v200, 0.5
  %v209 = vmul.f32 %v203, 0.5
  %v210 = vmul.f32 %v192, 0.70710677
  %v211 = vmul.f32 %v195, 0.70710677
  %v212 = vmul.f32 %v200, 0.70710677
  %v213 = vmul.f32 %v203, 0.70710677
  %v214 = verf.f32.pop %v210
  %v215 = verf.f32.pop %v211
  %v216 = verf.f32.pop %v212
  %v217 = verf.f32.pop %v213
  %v218 = vadd.f32 %v214, 1.0
  %v219 = vadd.f32 %v215, 1.0
  %v220 = vadd.f32 %v216, 1.0
  %v221 = vadd.f32 %v217, 1.0
  %v222 = vmul.f32 %v206, %v218
  %v223 = vmul.f32 %v207, %v219
  %v224 = vmul.f32 %v208, %v220
  %v225 = vmul.f32 %v209, %v221
  %v226 = vld [vmem:[#allocation2] sm:$0xff]
  %v227 = vld [vmem:[#allocation2 + $0x8] sm:$0xff]
  %v228 = vld [vmem:[#allocation2 + $0x10] sm:$0xff]
  %v229 = vld [vmem:[#allocation2 + $0x18] sm:$0xff]
  %v230 = vpack.c.bf16 %v223, %v222
  %v231 = vpack.c.bf16 %v225, %v224
  %v232 = vld [vmem:[%s5] sm:$0xf]
  %v233 = vld [vmem:[%s5 + $0x4] sm:$0xf]
  %v234 = vld [vmem:[%s5 + $0x8] sm:$0xf]
  %v235 = vld [vmem:[%s5 + $0xc] sm:$0xf]
  %v236 = vld [vmem:[%s5 + $0x10] sm:$0xf]
  %v237 = vld [vmem:[%s5 + $0x14] sm:$0xf]
  %v238 = vld [vmem:[%s5 + $0x18] sm:$0xf]
  %v239 = vld [vmem:[%s5 + $0x1c] sm:$0xf]
  %v240 = vld [vmem:[%s5 + $0x20] sm:$0xf]
  %v241 = vld [vmem:[%s5 + $0x24] sm:$0xf]
  %v242 = vld [vmem:[%s5 + $0x28] sm:$0xf]
  %v243 = vld [vmem:[%s5 + $0x2c] sm:$0xf]
  %v244 = vld [vmem:[%s5 + $0x30] sm:$0xf]
  %v245 = vld [vmem:[%s5 + $0x34] sm:$0xf]
  %v246 = vld [vmem:[%s5 + $0x38] sm:$0xf]
  %v247 = vld [vmem:[%s5 + $0x3c] sm:$0xf]
  %v264 = vunpack.c.l.b16 %v232
  %v265 = vunpack.c.l.b16 %v233
  %v266 = vunpack.c.l.b16 %v234
  %v267 = vunpack.c.l.b16 %v235
  %v268 = vunpack.c.l.b16 %v236
  %v269 = vunpack.c.l.b16 %v237
  %v270 = vunpack.c.l.b16 %v238
  %v271 = vunpack.c.l.b16 %v239
  %v272 = vunpack.c.l.b16 %v240
  %v273 = vunpack.c.l.b16 %v241
  %v274 = vunpack.c.l.b16 %v242
  %v275 = vunpack.c.l.b16 %v243
  %v276 = vunpack.c.l.b16 %v244
  %v277 = vunpack.c.l.b16 %v245
  %v278 = vunpack.c.l.b16 %v246
  %v279 = vunpack.c.l.b16 %v247
  %v280 = vpack.c.b16 %v265, %v264
  %v281 = vpack.c.b16 %v267, %v266
  %v282 = vpack.c.b16 %v269, %v268
  %v283 = vpack.c.b16 %v271, %v270
  %v284 = vpack.c.b16 %v273, %v272
  %v285 = vpack.c.b16 %v275, %v274
  %v286 = vpack.c.b16 %v277, %v276
  %v287 = vpack.c.b16 %v279, %v278
  %296 = vmatprep.subr.bf16.mxu0 0
  %297 = vmatpush1.bf16.msra.mxu0 %v280
  %298 = vmatprep.subr.bf16.mxu0 0
  %299 = vmatpush1.bf16.msra.mxu0 %v281
  %300 = vmatprep.subr.bf16.mxu0 0
  %301 = vmatpush1.bf16.msra.mxu0 %v282
  %302 = vmatprep.subr.bf16.mxu0 0
  %303 = vmatpush1.bf16.msra.mxu0 %v283
  %304 = vmatprep.subr.bf16.mxu0 0
  %305 = vmatpush1.bf16.msra.mxu0 %v284
  %306 = vmatprep.subr.bf16.mxu0 0
  %307 = vmatpush1.bf16.msra.mxu0 %v285
  %308 = vmatprep.subr.bf16.mxu0 0
  %309 = vmatpush1.bf16.msra.mxu0 %v286
  %310 = vmatprep.subr.bf16.mxu0 0
  %311 = vmatpush1.bf16.msra.mxu0 %v287
  %312 = vmatprep.subr.bf16.mxu0 0
  %313 = vmatpush1.bf16.msra.mxu0 0
  %314 = vmatprep.subr.bf16.mxu0 0
  %315 = vmatpush1.bf16.msra.mxu0 0
  %316 = vmatprep.subr.bf16.mxu0 0
  %317 = vmatpush1.bf16.msra.mxu0 0
  %318 = vmatprep.subr.bf16.mxu0 0
  %319 = vmatpush1.bf16.msra.mxu0 0
  %320 = vmatprep.subr.bf16.mxu0 0
  %321 = vmatpush1.bf16.msra.mxu0 0
  %322 = vmatprep.subr.bf16.mxu0 0
  %323 = vmatpush1.bf16.msra.mxu0 0
  %324 = vmatprep.subr.bf16.mxu0 0
  %325 = vmatpush1.bf16.msra.mxu0 0
  %326 = vmatprep.subr.bf16.mxu0 0
  %327 = vmatpush1.bf16.msra.mxu0 0
  %328 = vmatprep.mubr.bf16.mxu0 0
  %329 = vmatmul.mubr.bf16.gmra.mrb[0].mxu0 %v230
  %v330 = vpop.f32.mrb[0].mxu0
  %v331 = vadd.f32 0.0, %v330
  %v332 = vpop.f32.mrb[0].mxu0
  %v333 = vpop.f32.mrb[0].mxu0
  %v334 = vadd.f32 0.0, %v333
  %v335 = vpop.f32.mrb[0].mxu0
  %336 = vmatprep.mubr.bf16.mxu0 0
  %337 = vmatmul.mubr.bf16.gmra.mrb[0].mxu0 %v231
  %v338 = vpop.f32.mrb[0].mxu0
  %v339 = vadd.f32 0.0, %v338
  %v340 = vpop.f32.mrb[0].mxu0
  %v341 = vpop.f32.mrb[0].mxu0
  %v342 = vadd.f32 0.0, %v341
  %v343 = vpop.f32.mrb[0].mxu0
  %344 = vdwg.mxu0
  %v345 = vadd.f32 %v226, %v331
  %v346 = vadd.f32 %v227, %v334
  %v347 = vadd.f32 %v228, %v339
  %v348 = vadd.f32 %v229, %v342
  %349 = vst.msk [vmem:[#allocation2] sm:$0xff] %vm35, %v345
  %350 = vst.msk [vmem:[#allocation2 + $0x8] sm:$0xff] %vm35, %v346
  %351 = vst.msk [vmem:[#allocation2 + $0x10] sm:$0xff] %vm35, %v347
  %352 = vst.msk [vmem:[#allocation2 + $0x18] sm:$0xff] %vm35, %v348
  %v353 = vld [vmem:[#allocation2] sm:$0xff]
  %v354 = vld [vmem:[#allocation2 + $0x8] sm:$0xff]
  %v355 = vld [vmem:[#allocation2 + $0x10] sm:$0xff]
  %v356 = vld [vmem:[#allocation2 + $0x18] sm:$0xff]
  %v357 = vpack.c.bf16 %v354, %v353
  %v358 = vpack.c.bf16 %v356, %v355
  %v361 = vunpack.c.l.b16 %v357
  %v362 = vunpack.c.h.b16 %v357
  %v363 = vunpack.c.l.b16 %v358
  %v364 = vunpack.c.h.b16 %v358
  %v365 = vpack.c.b16 %v361, %v361
  %v366 = vpack.c.b16 %v362, %v362
  %v367 = vpack.c.b16 %v363, %v363
  %v368 = vpack.c.b16 %v364, %v364
  %vm373 = vcmask 257024
  %374 = vst.msk [vmem:[%s7] sm:$0xf] %vm373, %v365
  %375 = vst.msk [vmem:[%s7 + $0x4] sm:$0xf] %vm373, %v366
  %376 = vst.msk [vmem:[%s7 + $0x8] sm:$0xf] %vm373, %v367
  %377 = vst.msk [vmem:[%s7 + $0xc] sm:$0xf] %vm373, %v368
  // Predicated region
  $region30: #{_lambda_.13} parent=0 // pred_check
    _
  $region31: #{_lambda_.13} parent=0 // pred_check_branch
    %379 = sbr.rel (0) target = $region33
  $region32: #{_lambda_.13} parent=0 // pred_region
    _
  $region33: #{_lambda_.13} parent=0 // pred_fallthru
    _
  // Predicated region
  $region34: #{_lambda_.13} parent=0 // pred_check
    _
  $region35: #{_lambda_.13} parent=0 // pred_check_branch
    %381 = sbr.rel (0) target = $region37
  $region36: #{_lambda_.13} parent=0 // pred_region
    _
  $region37: #{_lambda_.13} parent=0 // pred_fallthru
    _

// kernel: _lambda_.12
$region0: #{_lambda_.12}
  #allocation0 [shape = 'u32[]', space=smem, size = 0x4, offset = 0x4, fixed_abs, tag = 'smem constant byte address 0x4 - core index']
  #allocation1 [shape = 'u32[144,128]{1,0:T(1,128)}', space=vmem, size = 0x12000, scoped, tag = 'internal scratch']
  #allocation2 [shape = 'bf16[16,96]{1,0:T(16,128)(2,1)}', space=vmem, size = 0x1000, scoped, tag = 'scratch operand']
  #allocation3 [shape = 'bf16[16,32]{1,0:T(16,128)(2,1)}', space=vmem, size = 0x1000, scoped, tag = 'scratch operand']
  %s0 = inlined_call_operand.vmem [shape: bf16[2,16,32], index: 0, kind: input, shape index: {}]
  %s1 = inlined_call_operand.vmem [shape: f32[1,32], index: 1, kind: input, shape index: {}]
  %s2 = inlined_call_operand.vmem [shape: f32[1,32], index: 2, kind: input, shape index: {}]
  %s3 = inlined_call_operand.vmem [shape: bf16[32,96], index: 3, kind: input, shape index: {}]
  %s4 = inlined_call_operand.vmem [shape: bf16[32,32], index: 4, kind: input, shape index: {}]
  %s5 = inlined_call_operand.vmem [shape: f32[1,32], index: 5, kind: input, shape index: {}]
  %s6 = inlined_call_operand.vmem [shape: bf16[2,16,32], index: 6, kind: output, shape index: {}]
  %s7 = sld [smem:[#allocation0]]
  $region57: #{_lambda_.12} parent=0
    _
  %s9 = ssub.s32 1, %s7
  %s10 = scalar_select 0, %s9, %s7
  loop: start=0, step=1, limit=4
  $region2: #{_lambda_.12} parent=0 // loop_pre_header
    _
  $region3: #{_lambda_.12} parent=0 // loop_header
    %s12 = sphi 0, %s16
    %p13 = scmp.ge.s32.totalorder %s12, 4
    %s22 = sphi 0, %s24
    %s25 = sphi 0, %s22
    %s26 = sphi 0, %s25
    %s42 = sphi 0, %s26
    %s46 = sphi 0, %s46
    %s48 = sphi 0, %s46
    %s49 = sphi 0, %s48
    %s63 = sphi 0, %s49
    %s67 = sphi 0, %s67
    %s69 = sphi 0, %s67
    %s70 = sphi 0, %s69
    %s84 = sphi 0, %s70
    %s88 = sphi 0, %s88
    %s90 = sphi 0, %s88
    %s91 = sphi 0, %s90
    %s105 = sphi 0, %s91
    %s109 = sphi 0, %s109
    %s111 = sphi 0, %s109
    %s112 = sphi 0, %s111
    %s126 = sphi 0, %s112
    %s130 = sphi 0, %s130
    %s132 = sphi 0, %s130
    %s133 = sphi 0, %s132
    %s147 = sphi 0, %s133
    %s153 = sphi 0, %s155
    %s156 = sphi 0, %s153
    %s157 = sphi 0, %s156
    %s173 = sphi 0, %s157
  $region4: #{_lambda_.12} parent=0 // loop_header_branch
    %15 = sbr.rel (%p13) target = $region8
  $region5: #{_lambda_.12} parent=0 // loop_body
    %s17 = ssub.s32 %s12, 1
    %s18 = ssub.s32 %s12, 2
    %s19 = sadd.s32 %s12, 1
    %s20 = ssub.s32 %s12, %s19
    %p21 = scmp.eq.s32.totalorder %s20, 0
    %s23 = sadd.s32 %s22, 1
    %s24 = scalar_select %p21, %s22, %s23
    %p27 = pneg %p21
    %p28 = scmp.eq.s32.totalorder %s12, 1
    %p29 = por %p27, %p28
    %p30 = scmp.ne.s32.totalorder %s22, %s25
    %p31 = scmp.eq.s32.totalorder %s12, 0
    %p32 = por %p30, %p31
    %p33 = scmp.ne.s32.totalorder %s22, %s25
    %p34 = scmp.eq.s32.totalorder %s17, 1
    %p35 = por %p33, %p34
    %p36 = scmp.ne.s32.totalorder %s25, %s26
    %p37 = scmp.eq.s32.totalorder %s17, 0
    %p38 = por %p36, %p37
    %p39 = scmp.ne.s32.totalorder %s25, %s26
    %p40 = scmp.eq.s32.totalorder %s18, 1
    %p41 = por %p39, %p40
    %p43 = scmp.ne.s32.totalorder %s26, %s42
    %p44 = scmp.eq.s32.totalorder %s18, 0
    %p45 = por %p43, %p44
    %s47 = sadd.s32 %s46, 1
    %p50 = scmp.eq.s32.totalorder %s12, 1
    %p51 = scmp.ne.s32.totalorder %s46, %s48
    %p52 = scmp.eq.s32.totalorder %s12, 0
    %p53 = por %p51, %p52
    %p54 = scmp.ne.s32.totalorder %s46, %s48
    %p55 = scmp.eq.s32.totalorder %s17, 1
    %p56 = por %p54, %p55
    %p57 = scmp.ne.s32.totalorder %s48, %s49
    %p58 = scmp.eq.s32.totalorder %s17, 0
    %p59 = por %p57, %p58
    %p60 = scmp.ne.s32.totalorder %s48, %s49
    %p61 = scmp.eq.s32.totalorder %s18, 1
    %p62 = por %p60, %p61
    %p64 = scmp.ne.s32.totalorder %s49, %s63
    %p65 = scmp.eq.s32.totalorder %s18, 0
    %p66 = por %p64, %p65
    %s68 = sadd.s32 %s67, 1
    %p71 = scmp.eq.s32.totalorder %s12, 1
    %p72 = scmp.ne.s32.totalorder %s67, %s69
    %p73 = scmp.eq.s32.totalorder %s12, 0
    %p74 = por %p72, %p73
    %p75 = scmp.ne.s32.totalorder %s67, %s69
    %p76 = scmp.eq.s32.totalorder %s17, 1
    %p77 = por %p75, %p76
    %p78 = scmp.ne.s32.totalorder %s69, %s70
    %p79 = scmp.eq.s32.totalorder %s17, 0
    %p80 = por %p78, %p79
    %p81 = scmp.ne.s32.totalorder %s69, %s70
    %p82 = scmp.eq.s32.totalorder %s18, 1
    %p83 = por %p81, %p82
    %p85 = scmp.ne.s32.totalorder %s70, %s84
    %p86 = scmp.eq.s32.totalorder %s18, 0
    %p87 = por %p85, %p86
    %s89 = sadd.s32 %s88, 1
    %p92 = scmp.eq.s32.totalorder %s12, 1
    %p93 = scmp.ne.s32.totalorder %s88, %s90
    %p94 = scmp.eq.s32.totalorder %s12, 0
    %p95 = por %p93, %p94
    %p96 = scmp.ne.s32.totalorder %s88, %s90
    %p97 = scmp.eq.s32.totalorder %s17, 1
    %p98 = por %p96, %p97
    %p99 = scmp.ne.s32.totalorder %s90, %s91
    %p100 = scmp.eq.s32.totalorder %s17, 0
    %p101 = por %p99, %p100
    %p102 = scmp.ne.s32.totalorder %s90, %s91
    %p103 = scmp.eq.s32.totalorder %s18, 1
    %p104 = por %p102, %p103
    %p106 = scmp.ne.s32.totalorder %s91, %s105
    %p107 = scmp.eq.s32.totalorder %s18, 0
    %p108 = por %p106, %p107
    %s110 = sadd.s32 %s109, 1
    %p113 = scmp.eq.s32.totalorder %s12, 1
    %p114 = scmp.ne.s32.totalorder %s109, %s111
    %p115 = scmp.eq.s32.totalorder %s12, 0
    %p116 = por %p114, %p115
    %p117 = scmp.ne.s32.totalorder %s109, %s111
    %p118 = scmp.eq.s32.totalorder %s17, 1
    %p119 = por %p117, %p118
    %p120 = scmp.ne.s32.totalorder %s111, %s112
    %p121 = scmp.eq.s32.totalorder %s17, 0
    %p122 = por %p120, %p121
    %p123 = scmp.ne.s32.totalorder %s111, %s112
    %p124 = scmp.eq.s32.totalorder %s18, 1
    %p125 = por %p123, %p124
    %p127 = scmp.ne.s32.totalorder %s112, %s126
    %p128 = scmp.eq.s32.totalorder %s18, 0
    %p129 = por %p127, %p128
    %s131 = sadd.s32 %s130, 1
    %p134 = scmp.eq.s32.totalorder %s12, 1
    %p135 = scmp.ne.s32.totalorder %s130, %s132
    %p136 = scmp.eq.s32.totalorder %s12, 0
    %p137 = por %p135, %p136
    %p138 = scmp.ne.s32.totalorder %s130, %s132
    %p139 = scmp.eq.s32.totalorder %s17, 1
    %p140 = por %p138, %p139
    %p141 = scmp.ne.s32.totalorder %s132, %s133
    %p142 = scmp.eq.s32.totalorder %s17, 0
    %p143 = por %p141, %p142
    %p144 = scmp.ne.s32.totalorder %s132, %s133
    %p145 = scmp.eq.s32.totalorder %s18, 1
    %p146 = por %p144, %p145
    %p148 = scmp.ne.s32.totalorder %s133, %s147
    %p149 = scmp.eq.s32.totalorder %s18, 0
    %p150 = por %p148, %p149
    %s151 = ssub.s32 %s12, %s19
    %p152 = scmp.eq.s32.totalorder %s151, 0
    %s154 = sadd.s32 %s153, 1
    %s155 = scalar_select %p152, %s153, %s154
    %p158 = pneg %p152
    %p159 = scmp.eq.s32.totalorder %s12, 1
    %p160 = por %p158, %p159
    %p161 = scmp.ne.s32.totalorder %s153, %s156
    %p162 = scmp.eq.s32.totalorder %s12, 0
    %p163 = por %p161, %p162
    %p164 = scmp.ne.s32.totalorder %s153, %s156
    %p165 = scmp.eq.s32.totalorder %s17, 1
    %p166 = por %p164, %p165
    %p167 = scmp.ne.s32.totalorder %s156, %s157
    %p168 = scmp.eq.s32.totalorder %s17, 0
    %p169 = por %p167, %p168
    %p170 = scmp.ne.s32.totalorder %s156, %s157
    %p171 = scmp.eq.s32.totalorder %s18, 1
    %p172 = por %p170, %p171
    %p174 = scmp.ne.s32.totalorder %s157, %s173
    %p175 = scmp.eq.s32.totalorder %s18, 0
    %p176 = por %p174, %p175
    %p177 = scmp.le.s32.totalorder 1, %s12
    %p178 = scmp.lt.s32.totalorder %s12, 3
    %p179 = pnand %p177, %p178
    %p180 = pneg %p179
    // Predicated region
    $region9: #{_lambda_.12} parent=5 // pred_check
      _
    $region10: #{_lambda_.12} parent=5 // pred_check_branch
      %182 = sbr.rel (%p179) target = $region12
    $region11: #{_lambda_.12} parent=5 // pred_region
      %s183 = ssub.s32 %s12, 1
      // Predicated region
      $region13: #{_lambda_.12} parent=11 // pred_check
        %p184 = pneg %p59
      $region14: #{_lambda_.12} parent=11 // pred_check_branch
        %186 = sbr.rel (%p184) target = $region16
      $region15: #{_lambda_.12} parent=11 // pred_region
        _
      $region16: #{_lambda_.12} parent=11 // pred_fallthru
        _
      // Predicated region
      $region17: #{_lambda_.12} parent=11 // pred_check
        %p187 = pneg %p80
      $region18: #{_lambda_.12} parent=11 // pred_check_branch
        %189 = sbr.rel (%p187) target = $region20
      $region19: #{_lambda_.12} parent=11 // pred_region
        _
      $region20: #{_lambda_.12} parent=11 // pred_fallthru
        _
      // Predicated region
      $region21: #{_lambda_.12} parent=11 // pred_check
        %p190 = pneg %p101
      $region22: #{_lambda_.12} parent=11 // pred_check_branch
        %192 = sbr.rel (%p190) target = $region24
      $region23: #{_lambda_.12} parent=11 // pred_region
        _
      $region24: #{_lambda_.12} parent=11 // pred_fallthru
        _
      // Predicated region
      $region25: #{_lambda_.12} parent=11 // pred_check
        %p193 = pneg %p122
      $region26: #{_lambda_.12} parent=11 // pred_check_branch
        %195 = sbr.rel (%p193) target = $region28
      $region27: #{_lambda_.12} parent=11 // pred_region
        _
      $region28: #{_lambda_.12} parent=11 // pred_fallthru
        _
      // Predicated region
      $region29: #{_lambda_.12} parent=11 // pred_check
        %p196 = pneg %p143
      $region30: #{_lambda_.12} parent=11 // pred_check_branch
        %198 = sbr.rel (%p196) target = $region32
      $region31: #{_lambda_.12} parent=11 // pred_region
        _
      $region32: #{_lambda_.12} parent=11 // pred_fallthru
        _
    $region12: #{_lambda_.12} parent=5 // pred_fallthru
      _
    %p199 = scmp.lt.s32.totalorder %s12, 2
    // Predicated region
    $region33: #{_lambda_.12} parent=5 // pred_check
      %p200 = pneg %p199
    $region34: #{_lambda_.12} parent=5 // pred_check_branch
      %202 = sbr.rel (%p200) target = $region36
    $region35: #{_lambda_.12} parent=5 // pred_region
      // Predicated region
      $region37: #{_lambda_.12} parent=35 // pred_check
        %p203 = pneg %p32
      $region38: #{_lambda_.12} parent=35 // pred_check_branch
        %205 = sbr.rel (%p203) target = $region40
      $region39: #{_lambda_.12} parent=35 // pred_region
        %p206 = scmp.lt.s32.totalorder %s12, 1
        %s207 = scalar_select %p206, %s12, 1
        %s208 = smul.addr %s207, 2
        %s209 = smul.addr %s208, 4
        %s210 = scalar_lea.vmem %s0, %s209
      $region40: #{_lambda_.12} parent=35 // pred_fallthru
        _
    $region36: #{_lambda_.12} parent=5 // pred_fallthru
      _
    %p211 = scmp.le.s32.totalorder 1, %s12
    %p212 = scmp.lt.s32.totalorder %s12, 3
    %p213 = pnand %p211, %p212
    %p214 = pneg %p213
    // Predicated region
    $region41: #{_lambda_.12} parent=5 // pred_check
      _
    $region42: #{_lambda_.12} parent=5 // pred_check_branch
      %216 = sbr.rel (%p213) target = $region44
    $region43: #{_lambda_.12} parent=5 // pred_region
      %s217 = ssub.s32 %s12, 1
      %p218 = scmp.lt.s32.totalorder %s17, 1
      %s219 = scalar_select %p218, %s17, 1
      %s220 = smul.addr %s219, 2
      %s221 = smul.addr %s220, 4
      %s222 = scalar_lea.vmem %s0, %s221
      %p223 = pneg %p38
      %p224 = pneg %p35
      %p225 = pneg %p59
      %p226 = pneg %p56
      %p227 = pneg %p80
      %p228 = pneg %p77
      %p229 = pneg %p101
      %p230 = pneg %p98
      %p231 = pneg %p122
      %p232 = pneg %p119
      %p233 = pneg %p143
      %p234 = pneg %p140
      %p235 = pneg %p169
      %p236 = pneg %p166
      %p237 = scmp.lt.s32.totalorder %s17, 1
      %s238 = scalar_select %p237, %s17, 1
      %s239 = smul.addr %s238, 2
      %s240 = smul.addr %s239, 4
      %s241 = scalar_lea.vmem %s6, %s240
      %p242 = scmp.lt.s32.totalorder %s17, 1
      %s243 = scalar_select %p242, %s17, 1
      %s244 = smul.addr %s243, 2
      %s245 = smul.addr %s244, 4
      %s246 = scalar_lea.vmem %s0, %s245
      %p247 = scmp.lt.s32.totalorder %s17, 1
      %s248 = scalar_select %p247, %s17, 1
      %s249 = smul.addr %s248, 2
      %s250 = smul.addr %s249, 4
      %s251 = scalar_lea.vmem %s6, %s250
      %v253 = vld [vmem:[%s246] sm:$0xf]
      %v254 = vld [vmem:[%s246 + $0x4] sm:$0xf]
      %v255 = vunpack.c.l.bf16 %v253
      %v256 = vunpack.c.l.bf16 %v254
      %vm257 = vcmask 261120
      %v258 = vsel %vm257, %v255, 0.0
      %259 = vadd.xlane.f32.xlu0 %v258
      %v260 = vpop.xlane.xlu0 %259
      %v261 = vsel %vm257, %v256, 0.0
      %262 = vadd.xlane.f32.xlu0 %v261
      %v263 = vpop.xlane.xlu0 %262
      %v264 = vrcp.pop 32.0
      %v265 = vmul.f32 %v260, %v264
      %v266 = vmul.f32 %v263, %v264
      %v267 = vsub.f32 %v255, %v265
      %v268 = vsub.f32 %v256, %v266
      %v269 = vmul.f32 %v267, %v267
      %v270 = vmul.f32 %v268, %v268
      %v271 = vsel %vm257, %v269, 0.0
      %272 = vadd.xlane.f32.xlu0 %v271
      %v273 = vpop.xlane.xlu0 %272
      %v274 = vsel %vm257, %v270, 0.0
      %275 = vadd.xlane.f32.xlu0 %v274
      %v276 = vpop.xlane.xlu0 %275
      %v277 = vmul.f32 %v273, %v264
      %v278 = vmul.f32 %v276, %v264
      %v279 = vadd.f32 %v277, 1e-06
      %v280 = vadd.f32 %v278, 1e-06
      %v281 = vrsqrt.pop %v279
      %v282 = vrsqrt.pop %v280
      %v283 = vmul.f32 %v267, %v281
      %v284 = vmul.f32 %v268, %v282
      %v285 = vld [vmem:[%s1] sm:$0x1]
      %v287 = vlaneseq
      %v288 = vshrl.u32 %v287, 7
      %v289 = vsub.s32 0, %v288
      %v290 = vrot.slane %v285, %v289
      %v292 = vmul.f32 %v283, %v290
      %v293 = vmul.f32 %v284, %v290
      %v294 = vld [vmem:[%s2] sm:$0x1]
      %v296 = vlaneseq
      %v297 = vshrl.u32 %v296, 7
      %v298 = vsub.s32 0, %v297
      %v299 = vrot.slane %v294, %v298
      %v301 = vadd.f32 %v292, %v299
      %v302 = vadd.f32 %v293, %v299
      %v303 = vpack.c.bf16 %v302, %v301
      %v304 = vld [vmem:[%s3] sm:$0xf]
      %v305 = vld [vmem:[%s3 + $0x4] sm:$0xf]
      %v306 = vld [vmem:[%s3 + $0x8] sm:$0xf]
      %v307 = vld [vmem:[%s3 + $0xc] sm:$0xf]
      %v312 = vunpack.c.l.b16 %v304
      %v313 = vunpack.c.l.b16 %v305
      %v314 = vunpack.c.l.b16 %v306
      %v315 = vunpack.c.l.b16 %v307
      %v316 = vpack.c.b16 %v313, %v312
      %v317 = vpack.c.b16 %v315, %v314
      %v321 = vsel %vm257, %v303, 0
      %323 = vmatprep.subr.bf16.mxu0 0
      %324 = vmatpush1.bf16.msra.mxu0 %v316
      %325 = vmatprep.subr.bf16.mxu0 0
      %326 = vmatpush1.bf16.msra.mxu0 %v317
      %327 = vmatprep.subr.bf16.mxu0 0
      %328 = vmatpush1.bf16.msra.mxu0 0
      %329 = vmatprep.subr.bf16.mxu0 0
      %330 = vmatpush1.bf16.msra.mxu0 0
      %331 = vmatprep.subr.bf16.mxu0 0
      %332 = vmatpush1.bf16.msra.mxu0 0
      %333 = vmatprep.subr.bf16.mxu0 0
      %334 = vmatpush1.bf16.msra.mxu0 0
      %335 = vmatprep.subr.bf16.mxu0 0
      %336 = vmatpush1.bf16.msra.mxu0 0
      %337 = vmatprep.subr.bf16.mxu0 0
      %338 = vmatpush1.bf16.msra.mxu0 0
      %339 = vmatprep.subr.bf16.mxu0 0
      %340 = vmatpush1.bf16.msra.mxu0 0
      %341 = vmatprep.subr.bf16.mxu0 0
      %342 = vmatpush1.bf16.msra.mxu0 0
      %343 = vmatprep.subr.bf16.mxu0 0
      %344 = vmatpush1.bf16.msra.mxu0 0
      %345 = vmatprep.subr.bf16.mxu0 0
      %346 = vmatpush1.bf16.msra.mxu0 0
      %347 = vmatprep.subr.bf16.mxu0 0
      %348 = vmatpush1.bf16.msra.mxu0 0
      %349 = vmatprep.subr.bf16.mxu0 0
      %350 = vmatpush1.bf16.msra.mxu0 0
      %351 = vmatprep.subr.bf16.mxu0 0
      %352 = vmatpush1.bf16.msra.mxu0 0
      %353 = vmatprep.subr.bf16.mxu0 0
      %354 = vmatpush1.bf16.msra.mxu0 0
      %355 = vmatprep.mubr.bf16.mxu0 0
      %356 = vmatmul.mubr.bf16.gmra.mrb[0].mxu0 %v321
      %v357 = vpop.f32.mrb[0].mxu0
      %v358 = vadd.f32 0.0, %v357
      %v359 = vpop.f32.mrb[0].mxu0
      %v360 = vpop.f32.mrb[0].mxu0
      %v361 = vadd.f32 0.0, %v360
      %v362 = vpop.f32.mrb[0].mxu0
      %363 = vdwg.mxu0
      %v364 = vpack.c.bf16 %v361, %v358
      %vm365 = vcmask 785408
      %366 = vst.msk [vmem:[#allocation2] sm:$0xff] %vm365, %v364
      %v367 = vlaneseq
      %v368 = vand.u32 %v367, 127
      %vm369 = vcmp.lt.s32.totalorder %v368, 3
      %v370 = vld [vmem:[#allocation2] sm:$0xff]
      %372 = vrot.lane.b32.xlu0 %v370, 96
      %v373 = vpop.permute.xlu0 %372
      %vm374 = vcmask 64512
      %v376 = vsel %vm374, %v370, 0
      %v379 = vsel %vm374, %v373, 0
      %381 = vmatprep.subr.bf16.mxu0 0
      %382 = vmatpush1.bf16.xpose.msra.mxu0 %v379
      %383 = vmatprep.subr.bf16.mxu0 0
      %384 = vmatpush1.bf16.xpose.msra.mxu0 0
      %385 = vmatprep.subr.bf16.mxu0 0
      %386 = vmatpush1.bf16.xpose.msra.mxu0 0
      %387 = vmatprep.subr.bf16.mxu0 0
      %388 = vmatpush1.bf16.xpose.msra.mxu0 0
      %389 = vmatprep.subr.bf16.mxu0 0
      %390 = vmatpush1.bf16.xpose.msra.mxu0 0
      %391 = vmatprep.subr.bf16.mxu0 0
      %392 = vmatpush1.bf16.xpose.msra.mxu0 0
      %393 = vmatprep.subr.bf16.mxu0 0
      %394 = vmatpush1.bf16.xpose.msra.mxu0 0
      %395 = vmatprep.subr.bf16.mxu0 0
      %396 = vmatpush1.bf16.xpose.msra.mxu0 0
      %397 = vmatprep.subr.bf16.mxu0 0
      %398 = vmatpush1.bf16.xpose.msra.mxu0 0
      %399 = vmatprep.subr.bf16.mxu0 0
      %400 = vmatpush1.bf16.xpose.msra.mxu0 0
      %401 = vmatprep.subr.bf16.mxu0 0
      %402 = vmatpush1.bf16.xpose.msra.mxu0 0
      %403 = vmatprep.subr.bf16.mxu0 0
      %404 = vmatpush1.bf16.xpose.msra.mxu0 0
      %405 = vmatprep.subr.bf16.mxu0 0
      %406 = vmatpush1.bf16.xpose.msra.mxu0 0
      %407 = vmatprep.subr.bf16.mxu0 0
      %408 = vmatpush1.bf16.xpose.msra.mxu0 0
      %409 = vmatprep.subr.bf16.mxu0 0
      %410 = vmatpush1.bf16.xpose.msra.mxu0 0
      %411 = vmatprep.subr.bf16.mxu0 0
      %412 = vmatpush1.bf16.xpose.msra.mxu0 0
      %413 = vmatprep.mubr.bf16.mxu0 0
      %414 = vmatmul.mubr.bf16.gmra.mrb[0].mxu0 %v376
      %v415 = vpop.f32.mrb[0].mxu0
      %v416 = vadd.f32 0.0, %v415
      %v417 = vpop.f32.mrb[0].mxu0
      %v418 = vpop.f32.mrb[0].mxu0
      %v419 = vadd.f32 0.0, %v418
      %v420 = vpop.f32.mrb[0].mxu0
      %421 = vdwg.mxu0
      %v422 = vmul.f32 %v416, 0.35355338
      %v423 = vmul.f32 %v419, 0.35355338
      %v424 = vsel %vm369, %v422, -1e+30
      %v425 = vsel %vm369, %v423, -1e+30
      %vm426 = vcmask 130048
      %v427 = vsel %vm426, %v424, -inf
      %428 = vmax.xlane.f32.xlu0 %v427
      %v429 = vpop.xlane.xlu0 %428
      %v430 = vsel %vm426, %v425, -inf
      %431 = vmax.xlane.f32.xlu0 %v430
      %v432 = vpop.xlane.xlu0 %431
      %v433 = vsub.f32 %v424, %v429
      %v434 = vsub.f32 %v425, %v432
      %v435 = vmul.f32 %v433, 1.442695
      %v436 = vpow.pop %v435
      %v437 = vmul.f32 %v434, 1.442695
      %v438 = vpow.pop %v437
      %v439 = vsel %vm426, %v436, 0.0
      %440 = vadd.xlane.f32.xlu0 %v439
      %v441 = vpop.xlane.xlu0 %440
      %v442 = vsel %vm426, %v438, 0.0
      %443 = vadd.xlane.f32.xlu0 %v442
      %v444 = vpop.xlane.xlu0 %443
      %v445 = vrcp.pop %v441
      %v446 = vmul.f32 1.0, %v445
      %v447 = vrcp.pop %v444
      %v448 = vmul.f32 1.0, %v447
      %v449 = vmul.f32 %v436, %v446
      %v450 = vmul.f32 %v438, %v448
      %v451 = vpack.c.bf16 %v450, %v449
      %452 = vrot.lane.b32.xlu0 %v370, 64
      %v453 = vpop.permute.xlu0 %452
      %v456 = vsel %vm426, %v451, 0
      %458 = vmatprep.subr.bf16.mxu0 0
      %459 = vmatpush1.bf16.msra.mxu0 %v453
      %460 = vmatprep.subr.bf16.mxu0 0
      %461 = vmatpush1.bf16.msra.mxu0 0
      %462 = vmatprep.subr.bf16.mxu0 0
      %463 = vmatpush1.bf16.msra.mxu0 0
      %464 = vmatprep.subr.bf16.mxu0 0
      %465 = vmatpush1.bf16.msra.mxu0 0
      %466 = vmatprep.subr.bf16.mxu0 0
      %467 = vmatpush1.bf16.msra.mxu0 0
      %468 = vmatprep.subr.bf16.mxu0 0
      %469 = vmatpush1.bf16.msra.mxu0 0
      %470 = vmatprep.subr.bf16.mxu0 0
      %471 = vmatpush1.bf16.msra.mxu0 0
      %472 = vmatprep.subr.bf16.mxu0 0
      %473 = vmatpush1.bf16.msra.mxu0 0
      %474 = vmatprep.subr.bf16.mxu0 0
      %475 = vmatpush1.bf16.msra.mxu0 0
      %476 = vmatprep.subr.bf16.mxu0 0
      %477 = vmatpush1.bf16.msra.mxu0 0
      %478 = vmatprep.subr.bf16.mxu0 0
      %479 = vmatpush1.bf16.msra.mxu0 0
      %480 = vmatprep.subr.bf16.mxu0 0
      %481 = vmatpush1.bf16.msra.mxu0 0
      %482 = vmatprep.subr.bf16.mxu0 0
      %483 = vmatpush1.bf16.msra.mxu0 0
      %484 = vmatprep.subr.bf16.mxu0 0
      %485 = vmatpush1.bf16.msra.mxu0 0
      %486 = vmatprep.subr.bf16.mxu0 0
      %487 = vmatpush1.bf16.msra.mxu0 0
      %488 = vmatprep.subr.bf16.mxu0 0
      %489 = vmatpush1.bf16.msra.mxu0 0
      %490 = vmatprep.mubr.bf16.mxu0 0
      %491 = vmatmul.mubr.bf16.gmra.mrb[0].mxu0 %v456
      %v492 = vpop.f32.mrb[0].mxu0
      %v493 = vadd.f32 0.0, %v492
      %v494 = vpop.f32.mrb[0].mxu0
      %v495 = vpop.f32.mrb[0].mxu0
      %v496 = vadd.f32 0.0, %v495
      %v497 = vpop.f32.mrb[0].mxu0
      %498 = vdwg.mxu0
      %v499 = vpack.c.bf16 %v496, %v493
      %500 = vst.msk [vmem:[#allocation3] sm:$0xff] %vm374, %v499
      %v501 = vld [vmem:[#allocation2] sm:$0xff]
      %503 = vrot.lane.b32.xlu0 %v501, 120
      %v504 = vpop.permute.xlu0 %503
      %505 = vrot.lane.b32.xlu0 %v501, 88
      %v506 = vpop.permute.xlu0 %505
      %v508 = vsel %vm374, %v504, 0
      %v511 = vsel %vm374, %v506, 0
      %513 = vmatprep.subr.bf16.mxu0 0
      %514 = vmatpush1.bf16.xpose.msra.mxu0 %v511
      %515 = vmatprep.subr.bf16.mxu0 0
      %516 = vmatpush1.bf16.xpose.msra.mxu0 0
      %517 = vmatprep.subr.bf16.mxu0 0
      %518 = vmatpush1.bf16.xpose.msra.mxu0 0
      %519 = vmatprep.subr.bf16.mxu0 0
      %520 = vmatpush1.bf16.xpose.msra.mxu0 0
      %521 = vmatprep.subr.bf16.mxu0 0
      %522 = vmatpush1.bf16.xpose.msra.mxu0 0
      %523 = vmatprep.subr.bf16.mxu0 0
      %524 = vmatpush1.bf16.xpose.msra.mxu0 0
      %525 = vmatprep.subr.bf16.mxu0 0
      %526 = vmatpush1.bf16.xpose.msra.mxu0 0
      %527 = vmatprep.subr.bf16.mxu0 0
      %528 = vmatpush1.bf16.xpose.msra.mxu0 0
      %529 = vmatprep.subr.bf16.mxu0 0
      %530 = vmatpush1.bf16.xpose.msra.mxu0 0
      %531 = vmatprep.subr.bf16.mxu0 0
      %532 = vmatpush1.bf16.xpose.msra.mxu0 0
      %533 = vmatprep.subr.bf16.mxu0 0
      %534 = vmatpush1.bf16.xpose.msra.mxu0 0
      %535 = vmatprep.subr.bf16.mxu0 0
      %536 = vmatpush1.bf16.xpose.msra.mxu0 0
      %537 = vmatprep.subr.bf16.mxu0 0
      %538 = vmatpush1.bf16.xpose.msra.mxu0 0
      %539 = vmatprep.subr.bf16.mxu0 0
      %540 = vmatpush1.bf16.xpose.msra.mxu0 0
      %541 = vmatprep.subr.bf16.mxu0 0
      %542 = vmatpush1.bf16.xpose.msra.mxu0 0
      %543 = vmatprep.subr.bf16.mxu0 0
      %544 = vmatpush1.bf16.xpose.msra.mxu0 0
      %545 = vmatprep.mubr.bf16.mxu0 0
      %546 = vmatmul.mubr.bf16.gmra.mrb[0].mxu0 %v508
      %v547 = vpop.f32.mrb[0].mxu0
      %v548 = vadd.f32 0.0, %v547
      %v549 = vpop.f32.mrb[0].mxu0
      %v550 = vpop.f32.mrb[0].mxu0
      %v551 = vadd.f32 0.0, %v550
      %v552 = vpop.f32.mrb[0].mxu0
      %553 = vdwg.mxu0
      %v554 = vmul.f32 %v548, 0.35355338
      %v555 = vmul.f32 %v551, 0.35355338
      %v556 = vsel %vm369, %v554, -1e+30
      %v557 = vsel %vm369, %v555, -1e+30
      %v558 = vsel %vm426, %v556, -inf
      %559 = vmax.xlane.f32.xlu0 %v558
      %v560 = vpop.xlane.xlu0 %559
      %v561 = vsel %vm426, %v557, -inf
      %562 = vmax.xlane.f32.xlu0 %v561
      %v563 = vpop.xlane.xlu0 %562
      %v564 = vsub.f32 %v556, %v560
      %v565 = vsub.f32 %v557, %v563
      %v566 = vmul.f32 %v564, 1.442695
      %v567 = vpow.pop %v566
      %v568 = vmul.f32 %v565, 1.442695
      %v569 = vpow.pop %v568
      %v570 = vsel %vm426, %v567, 0.0
      %571 = vadd.xlane.f32.xlu0 %v570
      %v572 = vpop.xlane.xlu0 %571
      %v573 = vsel %vm426, %v569, 0.0
      %574 = vadd.xlane.f32.xlu0 %v573
      %v575 = vpop.xlane.xlu0 %574
      %v576 = vrcp.pop %v572
      %v577 = vmul.f32 1.0, %v576
      %v578 = vrcp.pop %v575
      %v579 = vmul.f32 1.0, %v578
      %v580 = vmul.f32 %v567, %v577
      %v581 = vmul.f32 %v569, %v579
      %v582 = vpack.c.bf16 %v581, %v580
      %583 = vrot.lane.b32.xlu0 %v501, 56
      %v584 = vpop.permute.xlu0 %583
      %v587 = vsel %vm426, %v582, 0
      %589 = vmatprep.subr.bf16.mxu0 0
      %590 = vmatpush1.bf16.msra.mxu0 %v584
      %591 = vmatprep.subr.bf16.mxu0 0
      %592 = vmatpush1.bf16.msra.mxu0 0
      %593 = vmatprep.subr.bf16.mxu0 0
      %594 = vmatpush1.bf16.msra.mxu0 0
      %595 = vmatprep.subr.bf16.mxu0 0
      %596 = vmatpush1.bf16.msra.mxu0 0
      %597 = vmatprep.subr.bf16.mxu0 0
      %598 = vmatpush1.bf16.msra.mxu0 0
      %599 = vmatprep.subr.bf16.mxu0 0
      %600 = vmatpush1.bf16.msra.mxu0 0
      %601 = vmatprep.subr.bf16.mxu0 0
      %602 = vmatpush1.bf16.msra.mxu0 0
      %603 = vmatprep.subr.bf16.mxu0 0
      %604 = vmatpush1.bf16.msra.mxu0 0
      %605 = vmatprep.subr.bf16.mxu0 0
      %606 = vmatpush1.bf16.msra.mxu0 0
      %607 = vmatprep.subr.bf16.mxu0 0
      %608 = vmatpush1.bf16.msra.mxu0 0
      %609 = vmatprep.subr.bf16.mxu0 0
      %610 = vmatpush1.bf16.msra.mxu0 0
      %611 = vmatprep.subr.bf16.mxu0 0
      %612 = vmatpush1.bf16.msra.mxu0 0
      %613 = vmatprep.subr.bf16.mxu0 0
      %614 = vmatpush1.bf16.msra.mxu0 0
      %615 = vmatprep.subr.bf16.mxu0 0
      %616 = vmatpush1.bf16.msra.mxu0 0
      %617 = vmatprep.subr.bf16.mxu0 0
      %618 = vmatpush1.bf16.msra.mxu0 0
      %619 = vmatprep.subr.bf16.mxu0 0
      %620 = vmatpush1.bf16.msra.mxu0 0
      %621 = vmatprep.mubr.bf16.mxu0 0
      %622 = vmatmul.mubr.bf16.gmra.mrb[0].mxu0 %v587
      %v623 = vpop.f32.mrb[0].mxu0
      %v624 = vadd.f32 0.0, %v623
      %v625 = vpop.f32.mrb[0].mxu0
      %v626 = vpop.f32.mrb[0].mxu0
      %v627 = vadd.f32 0.0, %v626
      %v628 = vpop.f32.mrb[0].mxu0
      %629 = vdwg.mxu0
      %v630 = vpack.c.bf16 %v627, %v624
      %632 = vrot.lane.b32.xlu0 %v630, 8
      %v633 = vpop.permute.xlu0 %632
      %vm635 = vcmask 130112
      %636 = vst.msk [vmem:[#allocation3] sm:$0xff] %vm635, %v633
      %v637 = vld [vmem:[#allocation2] sm:$0xff]
      %639 = vrot.lane.b32.xlu0 %v637, 112
      %v640 = vpop.permute.xlu0 %639
      %641 = vrot.lane.b32.xlu0 %v637, 80
      %v642 = vpop.permute.xlu0 %641
      %v644 = vsel %vm374, %v640, 0
      %v647 = vsel %vm374, %v642, 0
      %649 = vmatprep.subr.bf16.mxu0 0
      %650 = vmatpush1.bf16.xpose.msra.mxu0 %v647
      %651 = vmatprep.subr.bf16.mxu0 0
      %652 = vmatpush1.bf16.xpose.msra.mxu0 0
      %653 = vmatprep.subr.bf16.mxu0 0
      %654 = vmatpush1.bf16.xpose.msra.mxu0 0
      %655 = vmatprep.subr.bf16.mxu0 0
      %656 = vmatpush1.bf16.xpose.msra.mxu0 0
      %657 = vmatprep.subr.bf16.mxu0 0
      %658 = vmatpush1.bf16.xpose.msra.mxu0 0
      %659 = vmatprep.subr.bf16.mxu0 0
      %660 = vmatpush1.bf16.xpose.msra.mxu0 0
      %661 = vmatprep.subr.bf16.mxu0 0
      %662 = vmatpush1.bf16.xpose.msra.mxu0 0
      %663 = vmatprep.subr.bf16.mxu0 0
      %664 = vmatpush1.bf16.xpose.msra.mxu0 0
      %665 = vmatprep.subr.bf16.mxu0 0
      %666 = vmatpush1.bf16.xpose.msra.mxu0 0
      %667 = vmatprep.subr.bf16.mxu0 0
      %668 = vmatpush1.bf16.xpose.msra.mxu0 0
      %669 = vmatprep.subr.bf16.mxu0 0
      %670 = vmatpush1.bf16.xpose.msra.mxu0 0
      %671 = vmatprep.subr.bf16.mxu0 0
      %672 = vmatpush1.bf16.xpose.msra.mxu0 0
      %673 = vmatprep.subr.bf16.mxu0 0
      %674 = vmatpush1.bf16.xpose.msra.mxu0 0
      %675 = vmatprep.subr.bf16.mxu0 0
      %676 = vmatpush1.bf16.xpose.msra.mxu0 0
      %677 = vmatprep.subr.bf16.mxu0 0
      %678 = vmatpush1.bf16.xpose.msra.mxu0 0
      %679 = vmatprep.subr.bf16.mxu0 0
      %680 = vmatpush1.bf16.xpose.msra.mxu0 0
      %681 = vmatprep.mubr.bf16.mxu0 0
      %682 = vmatmul.mubr.bf16.gmra.mrb[0].mxu0 %v644
      %v683 = vpop.f32.mrb[0].mxu0
      %v684 = vadd.f32 0.0, %v683
      %v685 = vpop.f32.mrb[0].mxu0
      %v686 = vpop.f32.mrb[0].mxu0
      %v687 = vadd.f32 0.0, %v686
      %v688 = vpop.f32.mrb[0].mxu0
      %689 = vdwg.mxu0
      %v690 = vmul.f32 %v684, 0.35355338
      %v691 = vmul.f32 %v687, 0.35355338
      %v692 = vsel %vm369, %v690, -1e+30
      %v693 = vsel %vm369, %v691, -1e+30
      %v694 = vsel %vm426, %v692, -inf
      %695 = vmax.xlane.f32.xlu0 %v694
      %v696 = vpop.xlane.xlu0 %695
      %v697 = vsel %vm426, %v693, -inf
      %698 = vmax.xlane.f32.xlu0 %v697
      %v699 = vpop.xlane.xlu0 %698
      %v700 = vsub.f32 %v692, %v696
      %v701 = vsub.f32 %v693, %v699
      %v702 = vmul.f32 %v700, 1.442695
      %v703 = vpow.pop %v702
      %v704 = vmul.f32 %v701, 1.442695
      %v705 = vpow.pop %v704
      %v706 = vsel %vm426, %v703, 0.0
      %707 = vadd.xlane.f32.xlu0 %v706
      %v708 = vpop.xlane.xlu0 %707
      %v709 = vsel %vm426, %v705, 0.0
      %710 = vadd.xlane.f32.xlu0 %v709
      %v711 = vpop.xlane.xlu0 %710
      %v712 = vrcp.pop %v708
      %v713 = vmul.f32 1.0, %v712
      %v714 = vrcp.pop %v711
      %v715 = vmul.f32 1.0, %v714
      %v716 = vmul.f32 %v703, %v713
      %v717 = vmul.f32 %v705, %v715
      %v718 = vpack.c.bf16 %v717, %v716
      %719 = vrot.lane.b32.xlu0 %v637, 48
      %v720 = vpop.permute.xlu0 %719
      %v723 = vsel %vm426, %v718, 0
      %725 = vmatprep.subr.bf16.mxu0 0
      %726 = vmatpush1.bf16.msra.mxu0 %v720
      %727 = vmatprep.subr.bf16.mxu0 0
      %728 = vmatpush1.bf16.msra.mxu0 0
      %729 = vmatprep.subr.bf16.mxu0 0
      %730 = vmatpush1.bf16.msra.mxu0 0
      %731 = vmatprep.subr.bf16.mxu0 0
      %732 = vmatpush1.bf16.msra.mxu0 0
      %733 = vmatprep.subr.bf16.mxu0 0
      %734 = vmatpush1.bf16.msra.mxu0 0
      %735 = vmatprep.subr.bf16.mxu0 0
      %736 = vmatpush1.bf16.msra.mxu0 0
      %737 = vmatprep.subr.bf16.mxu0 0
      %738 = vmatpush1.bf16.msra.mxu0 0
      %739 = vmatprep.subr.bf16.mxu0 0
      %740 = vmatpush1.bf16.msra.mxu0 0
      %741 = vmatprep.subr.bf16.mxu0 0
      %742 = vmatpush1.bf16.msra.mxu0 0
      %743 = vmatprep.subr.bf16.mxu0 0
      %744 = vmatpush1.bf16.msra.mxu0 0
      %745 = vmatprep.subr.bf16.mxu0 0
      %746 = vmatpush1.bf16.msra.mxu0 0
      %747 = vmatprep.subr.bf16.mxu0 0
      %748 = vmatpush1.bf16.msra.mxu0 0
      %749 = vmatprep.subr.bf16.mxu0 0
      %750 = vmatpush1.bf16.msra.mxu0 0
      %751 = vmatprep.subr.bf16.mxu0 0
      %752 = vmatpush1.bf16.msra.mxu0 0
      %753 = vmatprep.subr.bf16.mxu0 0
      %754 = vmatpush1.bf16.msra.mxu0 0
      %755 = vmatprep.subr.bf16.mxu0 0
      %756 = vmatpush1.bf16.msra.mxu0 0
      %757 = vmatprep.mubr.bf16.mxu0 0
      %758 = vmatmul.mubr.bf16.gmra.mrb[0].mxu0 %v723
      %v759 = vpop.f32.mrb[0].mxu0
      %v760 = vadd.f32 0.0, %v759
      %v761 = vpop.f32.mrb[0].mxu0
      %v762 = vpop.f32.mrb[0].mxu0
      %v763 = vadd.f32 0.0, %v762
      %v764 = vpop.f32.mrb[0].mxu0
      %765 = vdwg.mxu0
      %v766 = vpack.c.bf16 %v763, %v760
      %768 = vrot.lane.b32.xlu0 %v766, 16
      %v769 = vpop.permute.xlu0 %768
      %vm771 = vcmask 195712
      %772 = vst.msk [vmem:[#allocation3] sm:$0xff] %vm771, %v769
      %v773 = vld [vmem:[#allocation2] sm:$0xff]
      %775 = vrot.lane.b32.xlu0 %v773, 104
      %v776 = vpop.permute.xlu0 %775
      %777 = vrot.lane.b32.xlu0 %v773, 72
      %v778 = vpop.permute.xlu0 %777
      %v780 = vsel %vm374, %v776, 0
      %v783 = vsel %vm374, %v778, 0
      %785 = vmatprep.subr.bf16.mxu0 0
      %786 = vmatpush1.bf16.xpose.msra.mxu0 %v783
      %787 = vmatprep.subr.bf16.mxu0 0
      %788 = vmatpush1.bf16.xpose.msra.mxu0 0
      %789 = vmatprep.subr.bf16.mxu0 0
      %790 = vmatpush1.bf16.xpose.msra.mxu0 0
      %791 = vmatprep.subr.bf16.mxu0 0
      %792 = vmatpush1.bf16.xpose.msra.mxu0 0
      %793 = vmatprep.subr.bf16.mxu0 0
      %794 = vmatpush1.bf16.xpose.msra.mxu0 0
      %795 = vmatprep.subr.bf16.mxu0 0
      %796 = vmatpush1.bf16.xpose.msra.mxu0 0
      %797 = vmatprep.subr.bf16.mxu0 0
      %798 = vmatpush1.bf16.xpose.msra.mxu0 0
      %799 = vmatprep.subr.bf16.mxu0 0
      %800 = vmatpush1.bf16.xpose.msra.mxu0 0
      %801 = vmatprep.subr.bf16.mxu0 0
      %802 = vmatpush1.bf16.xpose.msra.mxu0 0
      %803 = vmatprep.subr.bf16.mxu0 0
      %804 = vmatpush1.bf16.xpose.msra.mxu0 0
      %805 = vmatprep.subr.bf16.mxu0 0
      %806 = vmatpush1.bf16.xpose.msra.mxu0 0
      %807 = vmatprep.subr.bf16.mxu0 0
      %808 = vmatpush1.bf16.xpose.msra.mxu0 0
      %809 = vmatprep.subr.bf16.mxu0 0
      %810 = vmatpush1.bf16.xpose.msra.mxu0 0
      %811 = vmatprep.subr.bf16.mxu0 0
      %812 = vmatpush1.bf16.xpose.msra.mxu0 0
      %813 = vmatprep.subr.bf16.mxu0 0
      %814 = vmatpush1.bf16.xpose.msra.mxu0 0
      %815 = vmatprep.subr.bf16.mxu0 0
      %816 = vmatpush1.bf16.xpose.msra.mxu0 0
      %817 = vmatprep.mubr.bf16.mxu0 0
      %818 = vmatmul.mubr.bf16.gmra.mrb[0].mxu0 %v780
      %v819 = vpop.f32.mrb[0].mxu0
      %v820 = vadd.f32 0.0, %v819
      %v821 = vpop.f32.mrb[0].mxu0
      %v822 = vpop.f32.mrb[0].mxu0
      %v823 = vadd.f32 0.0, %v822
      %v824 = vpop.f32.mrb[0].mxu0
      %825 = vdwg.mxu0
      %v826 = vmul.f32 %v820, 0.35355338
      %v827 = vmul.f32 %v823, 0.35355338
      %v828 = vsel %vm369, %v826, -1e+30
      %v829 = vsel %vm369, %v827, -1e+30
      %v830 = vsel %vm426, %v828, -inf
      %831 = vmax.xlane.f32.xlu0 %v830
      %v832 = vpop.xlane.xlu0 %831
      %v833 = vsel %vm426, %v829, -inf
      %834 = vmax.xlane.f32.xlu0 %v833
      %v835 = vpop.xlane.xlu0 %834
      %v836 = vsub.f32 %v828, %v832
      %v837 = vsub.f32 %v829, %v835
      %v838 = vmul.f32 %v836, 1.442695
      %v839 = vpow.pop %v838
      %v840 = vmul.f32 %v837, 1.442695
      %v841 = vpow.pop %v840
      %v842 = vsel %vm426, %v839, 0.0
      %843 = vadd.xlane.f32.xlu0 %v842
      %v844 = vpop.xlane.xlu0 %843
      %v845 = vsel %vm426, %v841, 0.0
      %846 = vadd.xlane.f32.xlu0 %v845
      %v847 = vpop.xlane.xlu0 %846
      %v848 = vrcp.pop %v844
      %v849 = vmul.f32 1.0, %v848
      %v850 = vrcp.pop %v847
      %v851 = vmul.f32 1.0, %v850
      %v852 = vmul.f32 %v839, %v849
      %v853 = vmul.f32 %v841, %v851
      %v854 = vpack.c.bf16 %v853, %v852
      %855 = vrot.lane.b32.xlu0 %v773, 40
      %v856 = vpop.permute.xlu0 %855
      %v859 = vsel %vm426, %v854, 0
      %861 = vmatprep.subr.bf16.mxu0 0
      %862 = vmatpush1.bf16.msra.mxu0 %v856
      %863 = vmatprep.subr.bf16.mxu0 0
      %864 = vmatpush1.bf16.msra.mxu0 0
      %865 = vmatprep.subr.bf16.mxu0 0
      %866 = vmatpush1.bf16.msra.mxu0 0
      %867 = vmatprep.subr.bf16.mxu0 0
      %868 = vmatpush1.bf16.msra.mxu0 0
      %869 = vmatprep.subr.bf16.mxu0 0
      %870 = vmatpush1.bf16.msra.mxu0 0
      %871 = vmatprep.subr.bf16.mxu0 0
      %872 = vmatpush1.bf16.msra.mxu0 0
      %873 = vmatprep.subr.bf16.mxu0 0
      %874 = vmatpush1.bf16.msra.mxu0 0
      %875 = vmatprep.subr.bf16.mxu0 0
      %876 = vmatpush1.bf16.msra.mxu0 0
      %877 = vmatprep.subr.bf16.mxu0 0
      %878 = vmatpush1.bf16.msra.mxu0 0
      %879 = vmatprep.subr.bf16.mxu0 0
      %880 = vmatpush1.bf16.msra.mxu0 0
      %881 = vmatprep.subr.bf16.mxu0 0
      %882 = vmatpush1.bf16.msra.mxu0 0
      %883 = vmatprep.subr.bf16.mxu0 0
      %884 = vmatpush1.bf16.msra.mxu0 0
      %885 = vmatprep.subr.bf16.mxu0 0
      %886 = vmatpush1.bf16.msra.mxu0 0
      %887 = vmatprep.subr.bf16.mxu0 0
      %888 = vmatpush1.bf16.msra.mxu0 0
      %889 = vmatprep.subr.bf16.mxu0 0
      %890 = vmatpush1.bf16.msra.mxu0 0
      %891 = vmatprep.subr.bf16.mxu0 0
      %892 = vmatpush1.bf16.msra.mxu0 0
      %893 = vmatprep.mubr.bf16.mxu0 0
      %894 = vmatmul.mubr.bf16.gmra.mrb[0].mxu0 %v859
      %v895 = vpop.f32.mrb[0].mxu0
      %v896 = vadd.f32 0.0, %v895
      %v897 = vpop.f32.mrb[0].mxu0
      %v898 = vpop.f32.mrb[0].mxu0
      %v899 = vadd.f32 0.0, %v898
      %v900 = vpop.f32.mrb[0].mxu0
      %901 = vdwg.mxu0
      %v902 = vpack.c.bf16 %v899, %v896
      %904 = vrot.lane.b32.xlu0 %v902, 24
      %v905 = vpop.permute.xlu0 %904
      %vm907 = vcmask 261312
      %908 = vst.msk [vmem:[#allocation3] sm:$0xff] %vm907, %v905
      %v909 = vld [vmem:[#allocation3] sm:$0xff]
      %v910 = vld [vmem:[%s4] sm:$0xf]
      %v911 = vld [vmem:[%s4 + $0x4] sm:$0xf]
      %v912 = vld [vmem:[%s4 + $0x8] sm:$0xf]
      %v913 = vld [vmem:[%s4 + $0xc] sm:$0xf]
      %v914 = vld [vmem:[%s5] sm:$0x1]
      %v916 = vlaneseq
      %v917 = vshrl.u32 %v916, 7
      %v918 = vsub.s32 0, %v917
      %v919 = vrot.slane %v914, %v918
      %v925 = vunpack.c.l.b16 %v910
      %v926 = vunpack.c.l.b16 %v911
      %v927 = vunpack.c.l.b16 %v912
      %v928 = vunpack.c.l.b16 %v913
      %v929 = vpack.c.b16 %v926, %v925
      %v930 = vpack.c.b16 %v928, %v927
      %v934 = vsel %vm257, %v909, 0
      %936 = vmatprep.subr.bf16.mxu0 0
      %937 = vmatpush1.bf16.msra.mxu0 %v929
      %938 = vmatprep.subr.bf16.mxu0 0
      %939 = vmatpush1.bf16.msra.mxu0 %v930
      %940 = vmatprep.subr.bf16.mxu0 0
      %941 = vmatpush1.bf16.msra.mxu0 0
      %942 = vmatprep.subr.bf16.mxu0 0
      %943 = vmatpush1.bf16.msra.mxu0 0
      %944 = vmatprep.subr.bf16.mxu0 0
      %945 = vmatpush1.bf16.msra.mxu0 0
      %946 = vmatprep.subr.bf16.mxu0 0
      %947 = vmatpush1.bf16.msra.mxu0 0
      %948 = vmatprep.subr.bf16.mxu0 0
      %949 = vmatpush1.bf16.msra.mxu0 0
      %950 = vmatprep.subr.bf16.mxu0 0
      %951 = vmatpush1.bf16.msra.mxu0 0
      %952 = vmatprep.subr.bf16.mxu0 0
      %953 = vmatpush1.bf16.msra.mxu0 0
      %954 = vmatprep.subr.bf16.mxu0 0
      %955 = vmatpush1.bf16.msra.mxu0 0
      %956 = vmatprep.subr.bf16.mxu0 0
      %957 = vmatpush1.bf16.msra.mxu0 0
      %958 = vmatprep.subr.bf16.mxu0 0
      %959 = vmatpush1.bf16.msra.mxu0 0
      %960 = vmatprep.subr.bf16.mxu0 0
      %961 = vmatpush1.bf16.msra.mxu0 0
      %962 = vmatprep.subr.bf16.mxu0 0
      %963 = vmatpush1.bf16.msra.mxu0 0
      %964 = vmatprep.subr.bf16.mxu0 0
      %965 = vmatpush1.bf16.msra.mxu0 0
      %966 = vmatprep.subr.bf16.mxu0 0
      %967 = vmatpush1.bf16.msra.mxu0 0
      %968 = vmatprep.mubr.bf16.mxu0 0
      %969 = vmatmul.mubr.bf16.gmra.mrb[0].mxu0 %v934
      %v970 = vpop.f32.mrb[0].mxu0
      %v971 = vadd.f32 %v919, %v970
      %v972 = vpop.f32.mrb[0].mxu0
      %v973 = vpop.f32.mrb[0].mxu0
      %v974 = vadd.f32 %v919, %v973
      %v975 = vpop.f32.mrb[0].mxu0
      %976 = vdwg.mxu0
      %v977 = vld [vmem:[%s246] sm:$0xf]
      %v978 = vld [vmem:[%s246 + $0x4] sm:$0xf]
      %v979 = vunpack.c.l.bf16 %v977
      %v980 = vunpack.c.l.bf16 %v978
      %v981 = vadd.f32 %v971, %v979
      %v982 = vadd.f32 %v974, %v980
      %v983 = vpack.c.bf16 %v982, %v981
      %v985 = vunpack.c.l.b16 %v983
      %v986 = vunpack.c.h.b16 %v983
      %v987 = vpack.c.b16 %v985, %v985
      %v988 = vpack.c.b16 %v986, %v986
      %vm991 = vcmask 257024
      %992 = vst.msk [vmem:[%s251] sm:$0xf] %vm991, %v987
      %993 = vst.msk [vmem:[%s251 + $0x4] sm:$0xf] %vm991, %v988
      %p994 = scmp.lt.s32.totalorder %s17, 1
      %s995 = scalar_select %p994, %s17, 1
      %s996 = smul.addr %s995, 2
      %s997 = smul.addr %s996, 4
      %s998 = scalar_lea.vmem %s6, %s997
      // Predicated region
      $region45: #{_lambda_.12} parent=43 // pred_check
        %p999 = pneg %p166
      $region46: #{_lambda_.12} parent=43 // pred_check_branch
        %1001 = sbr.rel (%p999) target = $region48
      $region47: #{_lambda_.12} parent=43 // pred_region
        _
      $region48: #{_lambda_.12} parent=43 // pred_fallthru
        _
    $region44: #{_lambda_.12} parent=5 // pred_fallthru
      _
    %p1002 = scmp.le.s32.totalorder 2, %s12
    // Predicated region
    $region49: #{_lambda_.12} parent=5 // pred_check
      %p1003 = pneg %p1002
    $region50: #{_lambda_.12} parent=5 // pred_check_branch
      %1005 = sbr.rel (%p1003) target = $region52
    $region51: #{_lambda_.12} parent=5 // pred_region
      %s1006 = ssub.s32 %s12, 2
      // Predicated region
      $region53: #{_lambda_.12} parent=51 // pred_check
        %p1007 = pneg %p172
      $region54: #{_lambda_.12} parent=51 // pred_check_branch
        %1009 = sbr.rel (%p1007) target = $region56
      $region55: #{_lambda_.12} parent=51 // pred_region
        %p1010 = scmp.lt.s32.totalorder %s18, 1
        %s1011 = scalar_select %p1010, %s18, 1
        %s1012 = smul.addr %s1011, 2
        %s1013 = smul.addr %s1012, 4
        %s1014 = scalar_lea.vmem %s6, %s1013
      $region56: #{_lambda_.12} parent=51 // pred_fallthru
        _
    $region52: #{_lambda_.12} parent=5 // pred_fallthru
      _
  $region6: #{_lambda_.12} parent=0 // loop_footer
    %s16 = sadd.s32 1, %s12
  $region7: #{_lambda_.12} parent=0 // loop_footer_branch
    %11 = sbr.rel target = $region3
  $region8: #{_lambda_.12} parent=0 // loop_exit
    _

// kernel: _lambda_.21
$region0: #{_lambda_.21}
  #allocation0 [shape = 'u32[]', space=smem, size = 0x4, offset = 0x4, fixed_abs, tag = 'smem constant byte address 0x4 - core index']
  #allocation1 [shape = 'u32[144,128]{1,0:T(1,128)}', space=vmem, size = 0x12000, scoped, tag = 'internal scratch']
  %s0 = inlined_call_operand.vmem [shape: bf16[16,32], index: 0, kind: input, shape index: {}]
  %s1 = inlined_call_operand.vmem [shape: f32[1,32], index: 1, kind: input, shape index: {}]
  %s2 = inlined_call_operand.vmem [shape: f32[1,32], index: 2, kind: input, shape index: {}]
  %s3 = inlined_call_operand.vmem [shape: bf16[32,256], index: 3, kind: input, shape index: {}]
  %s4 = inlined_call_operand.vmem [shape: f32[1,256], index: 4, kind: input, shape index: {}]
  %s5 = inlined_call_operand.vmem [shape: f32[16,256], index: 5, kind: output, shape index: {}]
  %s6 = sld [smem:[#allocation0]]
  $region30: #{_lambda_.21} parent=0
    _
  %s8 = ssub.s32 1, %s6
  %s9 = scalar_select 0, %s8, %s6
  // Predicated region
  $region2: #{_lambda_.21} parent=0 // pred_check
    _
  $region3: #{_lambda_.21} parent=0 // pred_check_branch
    %11 = sbr.rel (0) target = $region5
  $region4: #{_lambda_.21} parent=0 // pred_region
    _
  $region5: #{_lambda_.21} parent=0 // pred_fallthru
    _
  // Predicated region
  $region6: #{_lambda_.21} parent=0 // pred_check
    _
  $region7: #{_lambda_.21} parent=0 // pred_check_branch
    %13 = sbr.rel (0) target = $region9
  $region8: #{_lambda_.21} parent=0 // pred_region
    _
  $region9: #{_lambda_.21} parent=0 // pred_fallthru
    _
  // Predicated region
  $region10: #{_lambda_.21} parent=0 // pred_check
    _
  $region11: #{_lambda_.21} parent=0 // pred_check_branch
    %15 = sbr.rel (0) target = $region13
  $region12: #{_lambda_.21} parent=0 // pred_region
    _
  $region13: #{_lambda_.21} parent=0 // pred_fallthru
    _
  // Predicated region
  $region14: #{_lambda_.21} parent=0 // pred_check
    _
  $region15: #{_lambda_.21} parent=0 // pred_check_branch
    %17 = sbr.rel (0) target = $region17
  $region16: #{_lambda_.21} parent=0 // pred_region
    _
  $region17: #{_lambda_.21} parent=0 // pred_fallthru
    _
  // Predicated region
  $region18: #{_lambda_.21} parent=0 // pred_check
    _
  $region19: #{_lambda_.21} parent=0 // pred_check_branch
    %19 = sbr.rel (0) target = $region21
  $region20: #{_lambda_.21} parent=0 // pred_region
    _
  $region21: #{_lambda_.21} parent=0 // pred_fallthru
    _
  %v21 = vld [vmem:[%s0] sm:$0xf]
  %v22 = vld [vmem:[%s0 + $0x4] sm:$0xf]
  %v23 = vunpack.c.l.bf16 %v21
  %v24 = vunpack.c.l.bf16 %v22
  %vm25 = vcmask 261120
  %v26 = vsel %vm25, %v23, 0.0
  %27 = vadd.xlane.f32.xlu0 %v26
  %v28 = vpop.xlane.xlu0 %27
  %v29 = vsel %vm25, %v24, 0.0
  %30 = vadd.xlane.f32.xlu0 %v29
  %v31 = vpop.xlane.xlu0 %30
  %v32 = vrcp.pop 32.0
  %v33 = vmul.f32 %v28, %v32
  %v34 = vmul.f32 %v31, %v32
  %v35 = vsub.f32 %v23, %v33
  %v36 = vsub.f32 %v24, %v34
  %v37 = vmul.f32 %v35, %v35
  %v38 = vmul.f32 %v36, %v36
  %v39 = vsel %vm25, %v37, 0.0
  %40 = vadd.xlane.f32.xlu0 %v39
  %v41 = vpop.xlane.xlu0 %40
  %v42 = vsel %vm25, %v38, 0.0
  %43 = vadd.xlane.f32.xlu0 %v42
  %v44 = vpop.xlane.xlu0 %43
  %v45 = vmul.f32 %v41, %v32
  %v46 = vmul.f32 %v44, %v32
  %v47 = vadd.f32 %v45, 1e-06
  %v48 = vadd.f32 %v46, 1e-06
  %v49 = vrsqrt.pop %v47
  %v50 = vrsqrt.pop %v48
  %v51 = vmul.f32 %v35, %v49
  %v52 = vmul.f32 %v36, %v50
  %v53 = vld [vmem:[%s1] sm:$0x1]
  %v55 = vlaneseq
  %v56 = vshrl.u32 %v55, 7
  %v57 = vsub.s32 0, %v56
  %v58 = vrot.slane %v53, %v57
  %v60 = vmul.f32 %v51, %v58
  %v61 = vmul.f32 %v52, %v58
  %v62 = vld [vmem:[%s2] sm:$0x1]
  %v64 = vlaneseq
  %v65 = vshrl.u32 %v64, 7
  %v66 = vsub.s32 0, %v65
  %v67 = vrot.slane %v62, %v66
  %v69 = vadd.f32 %v60, %v67
  %v70 = vadd.f32 %v61, %v67
  %v71 = vpack.c.bf16 %v70, %v69
  %v72 = vld [vmem:[%s3] sm:$0xff]
  %v73 = vld [vmem:[%s3 + $0x8] sm:$0xff]
  %v74 = vld [vmem:[%s3 + $0x10] sm:$0xff]
  %v75 = vld [vmem:[%s3 + $0x18] sm:$0xff]
  %v76 = vld [vmem:[%s4] sm:$0x3]
  %v78 = vlaneseq
  %v79 = vshrl.u32 %v78, 7
  %v80 = vsub.s32 0, %v79
  %v81 = vrot.slane %v76, %v80
  %v82 = vlaneseq
  %v83 = vshrl.u32 %v82, 7
  %v84 = vsub.s32 1, %v83
  %v85 = vrot.slane %v76, %v84
  %v92 = vunpack.c.l.b16 %v72
  %v93 = vunpack.c.h.b16 %v72
  %v94 = vunpack.c.l.b16 %v73
  %v95 = vunpack.c.h.b16 %v73
  %v96 = vunpack.c.l.b16 %v74
  %v97 = vunpack.c.h.b16 %v74
  %v98 = vunpack.c.l.b16 %v75
  %v99 = vunpack.c.h.b16 %v75
  %v100 = vpack.c.b16 %v94, %v92
  %v101 = vpack.c.b16 %v95, %v93
  %v102 = vpack.c.b16 %v98, %v96
  %v103 = vpack.c.b16 %v99, %v97
  %v109 = vsel %vm25, %v71, 0
  %111 = vmatprep.subr.bf16.mxu0 %v101
  %112 = vmatpush1.bf16.msra.mxu0 %v100
  %113 = vmatprep.subr.bf16.mxu0 %v103
  %114 = vmatpush1.bf16.msra.mxu0 %v102
  %115 = vmatprep.subr.bf16.mxu0 0
  %116 = vmatpush1.bf16.msra.mxu0 0
  %117 = vmatprep.subr.bf16.mxu0 0
  %118 = vmatpush1.bf16.msra.mxu0 0
  %119 = vmatprep.subr.bf16.mxu0 0
  %120 = vmatpush1.bf16.msra.mxu0 0
  %121 = vmatprep.subr.bf16.mxu0 0
  %122 = vmatpush1.bf16.msra.mxu0 0
  %123 = vmatprep.subr.bf16.mxu0 0
  %124 = vmatpush1.bf16.msra.mxu0 0
  %125 = vmatprep.subr.bf16.mxu0 0
  %126 = vmatpush1.bf16.msra.mxu0 0
  %127 = vmatprep.subr.bf16.mxu0 0
  %128 = vmatpush1.bf16.msra.mxu0 0
  %129 = vmatprep.subr.bf16.mxu0 0
  %130 = vmatpush1.bf16.msra.mxu0 0
  %131 = vmatprep.subr.bf16.mxu0 0
  %132 = vmatpush1.bf16.msra.mxu0 0
  %133 = vmatprep.subr.bf16.mxu0 0
  %134 = vmatpush1.bf16.msra.mxu0 0
  %135 = vmatprep.subr.bf16.mxu0 0
  %136 = vmatpush1.bf16.msra.mxu0 0
  %137 = vmatprep.subr.bf16.mxu0 0
  %138 = vmatpush1.bf16.msra.mxu0 0
  %139 = vmatprep.subr.bf16.mxu0 0
  %140 = vmatpush1.bf16.msra.mxu0 0
  %141 = vmatprep.subr.bf16.mxu0 0
  %142 = vmatpush1.bf16.msra.mxu0 0
  %143 = vmatprep.mubr.bf16.mxu0 0
  %144 = vmatmul.mubr.bf16.gmra.mrb[0].mxu0 %v109
  %v145 = vpop.f32.mrb[0].mxu0
  %v146 = vadd.f32 %v81, %v145
  %v147 = vpop.f32.mrb[0].mxu0
  %v148 = vadd.f32 %v85, %v147
  %v149 = vpop.f32.mrb[0].mxu0
  %v150 = vadd.f32 %v81, %v149
  %v151 = vpop.f32.mrb[0].mxu0
  %v152 = vadd.f32 %v85, %v151
  %153 = vdwg.mxu0
  %154 = vst [vmem:[%s5] sm:$0xff] %v146
  %155 = vst [vmem:[%s5 + $0x8] sm:$0xff] %v148
  %156 = vst [vmem:[%s5 + $0x10] sm:$0xff] %v150
  %157 = vst [vmem:[%s5 + $0x18] sm:$0xff] %v152
  // Predicated region
  $region22: #{_lambda_.21} parent=0 // pred_check
    _
  $region23: #{_lambda_.21} parent=0 // pred_check_branch
    %159 = sbr.rel (0) target = $region25
  $region24: #{_lambda_.21} parent=0 // pred_region
    _
  $region25: #{_lambda_.21} parent=0 // pred_fallthru
    _
  // Predicated region
  $region26: #{_lambda_.21} parent=0 // pred_check
    _
  $region27: #{_lambda_.21} parent=0 // pred_check_branch
    %161 = sbr.rel (0) target = $region29
  $region28: #{_lambda_.21} parent=0 // pred_region
    _
  $region29: #{_lambda_.21} parent=0 // pred_fallthru
    _

// kernel: _lambda_.17
$region0: #{_lambda_.17}
  #allocation0 [shape = 'u32[]', space=smem, size = 0x4, offset = 0x4, fixed_abs, tag = 'smem constant byte address 0x4 - core index']
  #allocation1 [shape = 'u32[144,128]{1,0:T(1,128)}', space=vmem, size = 0x12000, scoped, tag = 'internal scratch']
  #allocation2 [shape = 'bf16[16,96]{1,0:T(16,128)(2,1)}', space=vmem, size = 0x1000, scoped, tag = 'scratch operand']
  #allocation3 [shape = 'bf16[16,32]{1,0:T(16,128)(2,1)}', space=vmem, size = 0x1000, scoped, tag = 'scratch operand']
  %s0 = inlined_call_operand.vmem [shape: bf16[2,16,32], index: 0, kind: input, shape index: {}]
  %s1 = inlined_call_operand.vmem [shape: f32[1,32], index: 1, kind: input, shape index: {}]
  %s2 = inlined_call_operand.vmem [shape: f32[1,32], index: 2, kind: input, shape index: {}]
  %s3 = inlined_call_operand.vmem [shape: bf16[32,96], index: 3, kind: input, shape index: {}]
  %s4 = inlined_call_operand.vmem [shape: bf16[32,32], index: 4, kind: input, shape index: {}]
  %s5 = inlined_call_operand.vmem [shape: f32[1,32], index: 5, kind: input, shape index: {}]
  %s6 = inlined_call_operand.vmem [shape: bf16[2,16,32], index: 6, kind: output, shape index: {}]
  %s7 = sld [smem:[#allocation0]]
  $region57: #{_lambda_.17} parent=0
    _
  %s9 = ssub.s32 1, %s7
  %s10 = scalar_select 0, %s9, %s7
  loop: start=0, step=1, limit=4
  $region2: #{_lambda_.17} parent=0 // loop_pre_header
    _
  $region3: #{_lambda_.17} parent=0 // loop_header
    %s12 = sphi 0, %s16
    %p13 = scmp.ge.s32.totalorder %s12, 4
    %s22 = sphi 0, %s24
    %s25 = sphi 0, %s22
    %s26 = sphi 0, %s25
    %s42 = sphi 0, %s26
    %s46 = sphi 0, %s46
    %s48 = sphi 0, %s46
    %s49 = sphi 0, %s48
    %s63 = sphi 0, %s49
    %s67 = sphi 0, %s67
    %s69 = sphi 0, %s67
    %s70 = sphi 0, %s69
    %s84 = sphi 0, %s70
    %s88 = sphi 0, %s88
    %s90 = sphi 0, %s88
    %s91 = sphi 0, %s90
    %s105 = sphi 0, %s91
    %s109 = sphi 0, %s109
    %s111 = sphi 0, %s109
    %s112 = sphi 0, %s111
    %s126 = sphi 0, %s112
    %s130 = sphi 0, %s130
    %s132 = sphi 0, %s130
    %s133 = sphi 0, %s132
    %s147 = sphi 0, %s133
    %s153 = sphi 0, %s155
    %s156 = sphi 0, %s153
    %s157 = sphi 0, %s156
    %s173 = sphi 0, %s157
  $region4: #{_lambda_.17} parent=0 // loop_header_branch
    %15 = sbr.rel (%p13) target = $region8
  $region5: #{_lambda_.17} parent=0 // loop_body
    %s17 = ssub.s32 %s12, 1
    %s18 = ssub.s32 %s12, 2
    %s19 = sadd.s32 %s12, 1
    %s20 = ssub.s32 %s12, %s19
    %p21 = scmp.eq.s32.totalorder %s20, 0
    %s23 = sadd.s32 %s22, 1
    %s24 = scalar_select %p21, %s22, %s23
    %p27 = pneg %p21
    %p28 = scmp.eq.s32.totalorder %s12, 1
    %p29 = por %p27, %p28
    %p30 = scmp.ne.s32.totalorder %s22, %s25
    %p31 = scmp.eq.s32.totalorder %s12, 0
    %p32 = por %p30, %p31
    %p33 = scmp.ne.s32.totalorder %s22, %s25
    %p34 = scmp.eq.s32.totalorder %s17, 1
    %p35 = por %p33, %p34
    %p36 = scmp.ne.s32.totalorder %s25, %s26
    %p37 = scmp.eq.s32.totalorder %s17, 0
    %p38 = por %p36, %p37
    %p39 = scmp.ne.s32.totalorder %s25, %s26
    %p40 = scmp.eq.s32.totalorder %s18, 1
    %p41 = por %p39, %p40
    %p43 = scmp.ne.s32.totalorder %s26, %s42
    %p44 = scmp.eq.s32.totalorder %s18, 0
    %p45 = por %p43, %p44
    %s47 = sadd.s32 %s46, 1
    %p50 = scmp.eq.s32.totalorder %s12, 1
    %p51 = scmp.ne.s32.totalorder %s46, %s48
    %p52 = scmp.eq.s32.totalorder %s12, 0
    %p53 = por %p51, %p52
    %p54 = scmp.ne.s32.totalorder %s46, %s48
    %p55 = scmp.eq.s32.totalorder %s17, 1
    %p56 = por %p54, %p55
    %p57 = scmp.ne.s32.totalorder %s48, %s49
    %p58 = scmp.eq.s32.totalorder %s17, 0
    %p59 = por %p57, %p58
    %p60 = scmp.ne.s32.totalorder %s48, %s49
    %p61 = scmp.eq.s32.totalorder %s18, 1
    %p62 = por %p60, %p61
    %p64 = scmp.ne.s32.totalorder %s49, %s63
    %p65 = scmp.eq.s32.totalorder %s18, 0
    %p66 = por %p64, %p65
    %s68 = sadd.s32 %s67, 1
    %p71 = scmp.eq.s32.totalorder %s12, 1
    %p72 = scmp.ne.s32.totalorder %s67, %s69
    %p73 = scmp.eq.s32.totalorder %s12, 0
    %p74 = por %p72, %p73
    %p75 = scmp.ne.s32.totalorder %s67, %s69
    %p76 = scmp.eq.s32.totalorder %s17, 1
    %p77 = por %p75, %p76
    %p78 = scmp.ne.s32.totalorder %s69, %s70
    %p79 = scmp.eq.s32.totalorder %s17, 0
    %p80 = por %p78, %p79
    %p81 = scmp.ne.s32.totalorder %s69, %s70
    %p82 = scmp.eq.s32.totalorder %s18, 1
    %p83 = por %p81, %p82
    %p85 = scmp.ne.s32.totalorder %s70, %s84
    %p86 = scmp.eq.s32.totalorder %s18, 0
    %p87 = por %p85, %p86
    %s89 = sadd.s32 %s88, 1
    %p92 = scmp.eq.s32.totalorder %s12, 1
    %p93 = scmp.ne.s32.totalorder %s88, %s90
    %p94 = scmp.eq.s32.totalorder %s12, 0
    %p95 = por %p93, %p94
    %p96 = scmp.ne.s32.totalorder %s88, %s90
    %p97 = scmp.eq.s32.totalorder %s17, 1
    %p98 = por %p96, %p97
    %p99 = scmp.ne.s32.totalorder %s90, %s91
    %p100 = scmp.eq.s32.totalorder %s17, 0
    %p101 = por %p99, %p100
    %p102 = scmp.ne.s32.totalorder %s90, %s91
    %p103 = scmp.eq.s32.totalorder %s18, 1
    %p104 = por %p102, %p103
    %p106 = scmp.ne.s32.totalorder %s91, %s105
    %p107 = scmp.eq.s32.totalorder %s18, 0
    %p108 = por %p106, %p107
    %s110 = sadd.s32 %s109, 1
    %p113 = scmp.eq.s32.totalorder %s12, 1
    %p114 = scmp.ne.s32.totalorder %s109, %s111
    %p115 = scmp.eq.s32.totalorder %s12, 0
    %p116 = por %p114, %p115
    %p117 = scmp.ne.s32.totalorder %s109, %s111
    %p118 = scmp.eq.s32.totalorder %s17, 1
    %p119 = por %p117, %p118
    %p120 = scmp.ne.s32.totalorder %s111, %s112
    %p121 = scmp.eq.s32.totalorder %s17, 0
    %p122 = por %p120, %p121
    %p123 = scmp.ne.s32.totalorder %s111, %s112
    %p124 = scmp.eq.s32.totalorder %s18, 1
    %p125 = por %p123, %p124
    %p127 = scmp.ne.s32.totalorder %s112, %s126
    %p128 = scmp.eq.s32.totalorder %s18, 0
    %p129 = por %p127, %p128
    %s131 = sadd.s32 %s130, 1
    %p134 = scmp.eq.s32.totalorder %s12, 1
    %p135 = scmp.ne.s32.totalorder %s130, %s132
    %p136 = scmp.eq.s32.totalorder %s12, 0
    %p137 = por %p135, %p136
    %p138 = scmp.ne.s32.totalorder %s130, %s132
    %p139 = scmp.eq.s32.totalorder %s17, 1
    %p140 = por %p138, %p139
    %p141 = scmp.ne.s32.totalorder %s132, %s133
    %p142 = scmp.eq.s32.totalorder %s17, 0
    %p143 = por %p141, %p142
    %p144 = scmp.ne.s32.totalorder %s132, %s133
    %p145 = scmp.eq.s32.totalorder %s18, 1
    %p146 = por %p144, %p145
    %p148 = scmp.ne.s32.totalorder %s133, %s147
    %p149 = scmp.eq.s32.totalorder %s18, 0
    %p150 = por %p148, %p149
    %s151 = ssub.s32 %s12, %s19
    %p152 = scmp.eq.s32.totalorder %s151, 0
    %s154 = sadd.s32 %s153, 1
    %s155 = scalar_select %p152, %s153, %s154
    %p158 = pneg %p152
    %p159 = scmp.eq.s32.totalorder %s12, 1
    %p160 = por %p158, %p159
    %p161 = scmp.ne.s32.totalorder %s153, %s156
    %p162 = scmp.eq.s32.totalorder %s12, 0
    %p163 = por %p161, %p162
    %p164 = scmp.ne.s32.totalorder %s153, %s156
    %p165 = scmp.eq.s32.totalorder %s17, 1
    %p166 = por %p164, %p165
    %p167 = scmp.ne.s32.totalorder %s156, %s157
    %p168 = scmp.eq.s32.totalorder %s17, 0
    %p169 = por %p167, %p168
    %p170 = scmp.ne.s32.totalorder %s156, %s157
    %p171 = scmp.eq.s32.totalorder %s18, 1
    %p172 = por %p170, %p171
    %p174 = scmp.ne.s32.totalorder %s157, %s173
    %p175 = scmp.eq.s32.totalorder %s18, 0
    %p176 = por %p174, %p175
    %p177 = scmp.le.s32.totalorder 1, %s12
    %p178 = scmp.lt.s32.totalorder %s12, 3
    %p179 = pnand %p177, %p178
    %p180 = pneg %p179
    // Predicated region
    $region9: #{_lambda_.17} parent=5 // pred_check
      _
    $region10: #{_lambda_.17} parent=5 // pred_check_branch
      %182 = sbr.rel (%p179) target = $region12
    $region11: #{_lambda_.17} parent=5 // pred_region
      %s183 = ssub.s32 %s12, 1
      // Predicated region
      $region13: #{_lambda_.17} parent=11 // pred_check
        %p184 = pneg %p59
      $region14: #{_lambda_.17} parent=11 // pred_check_branch
        %186 = sbr.rel (%p184) target = $region16
      $region15: #{_lambda_.17} parent=11 // pred_region
        _
      $region16: #{_lambda_.17} parent=11 // pred_fallthru
        _
      // Predicated region
      $region17: #{_lambda_.17} parent=11 // pred_check
        %p187 = pneg %p80
      $region18: #{_lambda_.17} parent=11 // pred_check_branch
        %189 = sbr.rel (%p187) target = $region20
      $region19: #{_lambda_.17} parent=11 // pred_region
        _
      $region20: #{_lambda_.17} parent=11 // pred_fallthru
        _
      // Predicated region
      $region21: #{_lambda_.17} parent=11 // pred_check
        %p190 = pneg %p101
      $region22: #{_lambda_.17} parent=11 // pred_check_branch
        %192 = sbr.rel (%p190) target = $region24
      $region23: #{_lambda_.17} parent=11 // pred_region
        _
      $region24: #{_lambda_.17} parent=11 // pred_fallthru
        _
      // Predicated region
      $region25: #{_lambda_.17} parent=11 // pred_check
        %p193 = pneg %p122
      $region26: #{_lambda_.17} parent=11 // pred_check_branch
        %195 = sbr.rel (%p193) target = $region28
      $region27: #{_lambda_.17} parent=11 // pred_region
        _
      $region28: #{_lambda_.17} parent=11 // pred_fallthru
        _
      // Predicated region
      $region29: #{_lambda_.17} parent=11 // pred_check
        %p196 = pneg %p143
      $region30: #{_lambda_.17} parent=11 // pred_check_branch
        %198 = sbr.rel (%p196) target = $region32
      $region31: #{_lambda_.17} parent=11 // pred_region
        _
      $region32: #{_lambda_.17} parent=11 // pred_fallthru
        _
    $region12: #{_lambda_.17} parent=5 // pred_fallthru
      _
    %p199 = scmp.lt.s32.totalorder %s12, 2
    // Predicated region
    $region33: #{_lambda_.17} parent=5 // pred_check
      %p200 = pneg %p199
    $region34: #{_lambda_.17} parent=5 // pred_check_branch
      %202 = sbr.rel (%p200) target = $region36
    $region35: #{_lambda_.17} parent=5 // pred_region
      // Predicated region
      $region37: #{_lambda_.17} parent=35 // pred_check
        %p203 = pneg %p32
      $region38: #{_lambda_.17} parent=35 // pred_check_branch
        %205 = sbr.rel (%p203) target = $region40
      $region39: #{_lambda_.17} parent=35 // pred_region
        %p206 = scmp.lt.s32.totalorder %s12, 1
        %s207 = scalar_select %p206, %s12, 1
        %s208 = smul.addr %s207, 2
        %s209 = smul.addr %s208, 4
        %s210 = scalar_lea.vmem %s0, %s209
      $region40: #{_lambda_.17} parent=35 // pred_fallthru
        _
    $region36: #{_lambda_.17} parent=5 // pred_fallthru
      _
    %p211 = scmp.le.s32.totalorder 1, %s12
    %p212 = scmp.lt.s32.totalorder %s12, 3
    %p213 = pnand %p211, %p212
    %p214 = pneg %p213
    // Predicated region
    $region41: #{_lambda_.17} parent=5 // pred_check
      _
    $region42: #{_lambda_.17} parent=5 // pred_check_branch
      %216 = sbr.rel (%p213) target = $region44
    $region43: #{_lambda_.17} parent=5 // pred_region
      %s217 = ssub.s32 %s12, 1
      %p218 = scmp.lt.s32.totalorder %s17, 1
      %s219 = scalar_select %p218, %s17, 1
      %s220 = smul.addr %s219, 2
      %s221 = smul.addr %s220, 4
      %s222 = scalar_lea.vmem %s0, %s221
      %p223 = pneg %p38
      %p224 = pneg %p35
      %p225 = pneg %p59
      %p226 = pneg %p56
      %p227 = pneg %p80
      %p228 = pneg %p77
      %p229 = pneg %p101
      %p230 = pneg %p98
      %p231 = pneg %p122
      %p232 = pneg %p119
      %p233 = pneg %p143
      %p234 = pneg %p140
      %p235 = pneg %p169
      %p236 = pneg %p166
      %p237 = scmp.lt.s32.totalorder %s17, 1
      %s238 = scalar_select %p237, %s17, 1
      %s239 = smul.addr %s238, 2
      %s240 = smul.addr %s239, 4
      %s241 = scalar_lea.vmem %s6, %s240
      %p242 = scmp.lt.s32.totalorder %s17, 1
      %s243 = scalar_select %p242, %s17, 1
      %s244 = smul.addr %s243, 2
      %s245 = smul.addr %s244, 4
      %s246 = scalar_lea.vmem %s0, %s245
      %p247 = scmp.lt.s32.totalorder %s17, 1
      %s248 = scalar_select %p247, %s17, 1
      %s249 = smul.addr %s248, 2
      %s250 = smul.addr %s249, 4
      %s251 = scalar_lea.vmem %s6, %s250
      %v253 = vld [vmem:[%s246] sm:$0xf]
      %v254 = vld [vmem:[%s246 + $0x4] sm:$0xf]
      %v255 = vunpack.c.l.bf16 %v253
      %v256 = vunpack.c.l.bf16 %v254
      %vm257 = vcmask 261120
      %v258 = vsel %vm257, %v255, 0.0
      %259 = vadd.xlane.f32.xlu0 %v258
      %v260 = vpop.xlane.xlu0 %259
      %v261 = vsel %vm257, %v256, 0.0
      %262 = vadd.xlane.f32.xlu0 %v261
      %v263 = vpop.xlane.xlu0 %262
      %v264 = vrcp.pop 32.0
      %v265 = vmul.f32 %v260, %v264
      %v266 = vmul.f32 %v263, %v264
      %v267 = vsub.f32 %v255, %v265
      %v268 = vsub.f32 %v256, %v266
      %v269 = vmul.f32 %v267, %v267
      %v270 = vmul.f32 %v268, %v268
      %v271 = vsel %vm257, %v269, 0.0
      %272 = vadd.xlane.f32.xlu0 %v271
      %v273 = vpop.xlane.xlu0 %272
      %v274 = vsel %vm257, %v270, 0.0
      %275 = vadd.xlane.f32.xlu0 %v274
      %v276 = vpop.xlane.xlu0 %275
      %v277 = vmul.f32 %v273, %v264
      %v278 = vmul.f32 %v276, %v264
      %v279 = vadd.f32 %v277, 1e-06
      %v280 = vadd.f32 %v278, 1e-06
      %v281 = vrsqrt.pop %v279
      %v282 = vrsqrt.pop %v280
      %v283 = vmul.f32 %v267, %v281
      %v284 = vmul.f32 %v268, %v282
      %v285 = vld [vmem:[%s1] sm:$0x1]
      %v287 = vlaneseq
      %v288 = vshrl.u32 %v287, 7
      %v289 = vsub.s32 0, %v288
      %v290 = vrot.slane %v285, %v289
      %v292 = vmul.f32 %v283, %v290
      %v293 = vmul.f32 %v284, %v290
      %v294 = vld [vmem:[%s2] sm:$0x1]
      %v296 = vlaneseq
      %v297 = vshrl.u32 %v296, 7
      %v298 = vsub.s32 0, %v297
      %v299 = vrot.slane %v294, %v298
      %v301 = vadd.f32 %v292, %v299
      %v302 = vadd.f32 %v293, %v299
      %v303 = vpack.c.bf16 %v302, %v301
      %v304 = vld [vmem:[%s3] sm:$0xf]
      %v305 = vld [vmem:[%s3 + $0x4] sm:$0xf]
      %v306 = vld [vmem:[%s3 + $0x8] sm:$0xf]
      %v307 = vld [vmem:[%s3 + $0xc] sm:$0xf]
      %v312 = vunpack.c.l.b16 %v304
      %v313 = vunpack.c.l.b16 %v305
      %v314 = vunpack.c.l.b16 %v306
      %v315 = vunpack.c.l.b16 %v307
      %v316 = vpack.c.b16 %v313, %v312
      %v317 = vpack.c.b16 %v315, %v314
      %v321 = vsel %vm257, %v303, 0
      %323 = vmatprep.subr.bf16.mxu0 0
      %324 = vmatpush1.bf16.msra.mxu0 %v316
      %325 = vmatprep.subr.bf16.mxu0 0
      %326 = vmatpush1.bf16.msra.mxu0 %v317
      %327 = vmatprep.subr.bf16.mxu0 0
      %328 = vmatpush1.bf16.msra.mxu0 0
      %329 = vmatprep.subr.bf16.mxu0 0
      %330 = vmatpush1.bf16.msra.mxu0 0
      %331 = vmatprep.subr.bf16.mxu0 0
      %332 = vmatpush1.bf16.msra.mxu0 0
      %333 = vmatprep.subr.bf16.mxu0 0
      %334 = vmatpush1.bf16.msra.mxu0 0
      %335 = vmatprep.subr.bf16.mxu0 0
      %336 = vmatpush1.bf16.msra.mxu0 0
      %337 = vmatprep.subr.bf16.mxu0 0
      %338 = vmatpush1.bf16.msra.mxu0 0
      %339 = vmatprep.subr.bf16.mxu0 0
      %340 = vmatpush1.bf16.msra.mxu0 0
      %341 = vmatprep.subr.bf16.mxu0 0
      %342 = vmatpush1.bf16.msra.mxu0 0
      %343 = vmatprep.subr.bf16.mxu0 0
      %344 = vmatpush1.bf16.msra.mxu0 0
      %345 = vmatprep.subr.bf16.mxu0 0
      %346 = vmatpush1.bf16.msra.mxu0 0
      %347 = vmatprep.subr.bf16.mxu0 0
      %348 = vmatpush1.bf16.msra.mxu0 0
      %349 = vmatprep.subr.bf16.mxu0 0
      %350 = vmatpush1.bf16.msra.mxu0 0
      %351 = vmatprep.subr.bf16.mxu0 0
      %352 = vmatpush1.bf16.msra.mxu0 0
      %353 = vmatprep.subr.bf16.mxu0 0
      %354 = vmatpush1.bf16.msra.mxu0 0
      %355 = vmatprep.mubr.bf16.mxu0 0
      %356 = vmatmul.mubr.bf16.gmra.mrb[0].mxu0 %v321
      %v357 = vpop.f32.mrb[0].mxu0
      %v358 = vadd.f32 0.0, %v357
      %v359 = vpop.f32.mrb[0].mxu0
      %v360 = vpop.f32.mrb[0].mxu0
      %v361 = vadd.f32 0.0, %v360
      %v362 = vpop.f32.mrb[0].mxu0
      %363 = vdwg.mxu0
      %v364 = vpack.c.bf16 %v361, %v358
      %vm365 = vcmask 785408
      %366 = vst.msk [vmem:[#allocation2] sm:$0xff] %vm365, %v364
      %v367 = vlaneseq
      %v368 = vand.u32 %v367, 127
      %vm369 = vcmp.lt.s32.totalorder %v368, 4
      %v370 = vld [vmem:[#allocation2] sm:$0xff]
      %372 = vrot.lane.b32.xlu0 %v370, 96
      %v373 = vpop.permute.xlu0 %372
      %vm374 = vcmask 64512
      %v376 = vsel %vm374, %v370, 0
      %v379 = vsel %vm374, %v373, 0
      %381 = vmatprep.subr.bf16.mxu0 0
      %382 = vmatpush1.bf16.xpose.msra.mxu0 %v379
      %383 = vmatprep.subr.bf16.mxu0 0
      %384 = vmatpush1.bf16.xpose.msra.mxu0 0
      %385 = vmatprep.subr.bf16.mxu0 0
      %386 = vmatpush1.bf16.xpose.msra.mxu0 0
      %387 = vmatprep.subr.bf16.mxu0 0
      %388 = vmatpush1.bf16.xpose.msra.mxu0 0
      %389 = vmatprep.subr.bf16.mxu0 0
      %390 = vmatpush1.bf16.xpose.msra.mxu0 0
      %391 = vmatprep.subr.bf16.mxu0 0
      %392 = vmatpush1.bf16.xpose.msra.mxu0 0
      %393 = vmatprep.subr.bf16.mxu0 0
      %394 = vmatpush1.bf16.xpose.msra.mxu0 0
      %395 = vmatprep.subr.bf16.mxu0 0
      %396 = vmatpush1.bf16.xpose.msra.mxu0 0
      %397 = vmatprep.subr.bf16.mxu0 0
      %398 = vmatpush1.bf16.xpose.msra.mxu0 0
      %399 = vmatprep.subr.bf16.mxu0 0
      %400 = vmatpush1.bf16.xpose.msra.mxu0 0
      %401 = vmatprep.subr.bf16.mxu0 0
      %402 = vmatpush1.bf16.xpose.msra.mxu0 0
      %403 = vmatprep.subr.bf16.mxu0 0
      %404 = vmatpush1.bf16.xpose.msra.mxu0 0
      %405 = vmatprep.subr.bf16.mxu0 0
      %406 = vmatpush1.bf16.xpose.msra.mxu0 0
      %407 = vmatprep.subr.bf16.mxu0 0
      %408 = vmatpush1.bf16.xpose.msra.mxu0 0
      %409 = vmatprep.subr.bf16.mxu0 0
      %410 = vmatpush1.bf16.xpose.msra.mxu0 0
      %411 = vmatprep.subr.bf16.mxu0 0
      %412 = vmatpush1.bf16.xpose.msra.mxu0 0
      %413 = vmatprep.mubr.bf16.mxu0 0
      %414 = vmatmul.mubr.bf16.gmra.mrb[0].mxu0 %v376
      %v415 = vpop.f32.mrb[0].mxu0
      %v416 = vadd.f32 0.0, %v415
      %v417 = vpop.f32.mrb[0].mxu0
      %v418 = vpop.f32.mrb[0].mxu0
      %v419 = vadd.f32 0.0, %v418
      %v420 = vpop.f32.mrb[0].mxu0
      %421 = vdwg.mxu0
      %v422 = vmul.f32 %v416, 0.35355338
      %v423 = vmul.f32 %v419, 0.35355338
      %v424 = vsel %vm369, %v422, -1e+30
      %v425 = vsel %vm369, %v423, -1e+30
      %vm426 = vcmask 130048
      %v427 = vsel %vm426, %v424, -inf
      %428 = vmax.xlane.f32.xlu0 %v427
      %v429 = vpop.xlane.xlu0 %428
      %v430 = vsel %vm426, %v425, -inf
      %431 = vmax.xlane.f32.xlu0 %v430
      %v432 = vpop.xlane.xlu0 %431
      %v433 = vsub.f32 %v424, %v429
      %v434 = vsub.f32 %v425, %v432
      %v435 = vmul.f32 %v433, 1.442695
      %v436 = vpow.pop %v435
      %v437 = vmul.f32 %v434, 1.442695
      %v438 = vpow.pop %v437
      %v439 = vsel %vm426, %v436, 0.0
      %440 = vadd.xlane.f32.xlu0 %v439
      %v441 = vpop.xlane.xlu0 %440
      %v442 = vsel %vm426, %v438, 0.0
      %443 = vadd.xlane.f32.xlu0 %v442
      %v444 = vpop.xlane.xlu0 %443
      %v445 = vrcp.pop %v441
      %v446 = vmul.f32 1.0, %v445
      %v447 = vrcp.pop %v444
      %v448 = vmul.f32 1.0, %v447
      %v449 = vmul.f32 %v436, %v446
      %v450 = vmul.f32 %v438, %v448
      %v451 = vpack.c.bf16 %v450, %v449
      %452 = vrot.lane.b32.xlu0 %v370, 64
      %v453 = vpop.permute.xlu0 %452
      %v456 = vsel %vm426, %v451, 0
      %458 = vmatprep.subr.bf16.mxu0 0
      %459 = vmatpush1.bf16.msra.mxu0 %v453
      %460 = vmatprep.subr.bf16.mxu0 0
      %461 = vmatpush1.bf16.msra.mxu0 0
      %462 = vmatprep.subr.bf16.mxu0 0
      %463 = vmatpush1.bf16.msra.mxu0 0
      %464 = vmatprep.subr.bf16.mxu0 0
      %465 = vmatpush1.bf16.msra.mxu0 0
      %466 = vmatprep.subr.bf16.mxu0 0
      %467 = vmatpush1.bf16.msra.mxu0 0
      %468 = vmatprep.subr.bf16.mxu0 0
      %469 = vmatpush1.bf16.msra.mxu0 0
      %470 = vmatprep.subr.bf16.mxu0 0
      %471 = vmatpush1.bf16.msra.mxu0 0
      %472 = vmatprep.subr.bf16.mxu0 0
      %473 = vmatpush1.bf16.msra.mxu0 0
      %474 = vmatprep.subr.bf16.mxu0 0
      %475 = vmatpush1.bf16.msra.mxu0 0
      %476 = vmatprep.subr.bf16.mxu0 0
      %477 = vmatpush1.bf16.msra.mxu0 0
      %478 = vmatprep.subr.bf16.mxu0 0
      %479 = vmatpush1.bf16.msra.mxu0 0
      %480 = vmatprep.subr.bf16.mxu0 0
      %481 = vmatpush1.bf16.msra.mxu0 0
      %482 = vmatprep.subr.bf16.mxu0 0
      %483 = vmatpush1.bf16.msra.mxu0 0
      %484 = vmatprep.subr.bf16.mxu0 0
      %485 = vmatpush1.bf16.msra.mxu0 0
      %486 = vmatprep.subr.bf16.mxu0 0
      %487 = vmatpush1.bf16.msra.mxu0 0
      %488 = vmatprep.subr.bf16.mxu0 0
      %489 = vmatpush1.bf16.msra.mxu0 0
      %490 = vmatprep.mubr.bf16.mxu0 0
      %491 = vmatmul.mubr.bf16.gmra.mrb[0].mxu0 %v456
      %v492 = vpop.f32.mrb[0].mxu0
      %v493 = vadd.f32 0.0, %v492
      %v494 = vpop.f32.mrb[0].mxu0
      %v495 = vpop.f32.mrb[0].mxu0
      %v496 = vadd.f32 0.0, %v495
      %v497 = vpop.f32.mrb[0].mxu0
      %498 = vdwg.mxu0
      %v499 = vpack.c.bf16 %v496, %v493
      %500 = vst.msk [vmem:[#allocation3] sm:$0xff] %vm374, %v499
      %v501 = vld [vmem:[#allocation2] sm:$0xff]
      %503 = vrot.lane.b32.xlu0 %v501, 120
      %v504 = vpop.permute.xlu0 %503
      %505 = vrot.lane.b32.xlu0 %v501, 88
      %v506 = vpop.permute.xlu0 %505
      %v508 = vsel %vm374, %v504, 0
      %v511 = vsel %vm374, %v506, 0
      %513 = vmatprep.subr.bf16.mxu0 0
      %514 = vmatpush1.bf16.xpose.msra.mxu0 %v511
      %515 = vmatprep.subr.bf16.mxu0 0
      %516 = vmatpush1.bf16.xpose.msra.mxu0 0
      %517 = vmatprep.subr.bf16.mxu0 0
      %518 = vmatpush1.bf16.xpose.msra.mxu0 0
      %519 = vmatprep.subr.bf16.mxu0 0
      %520 = vmatpush1.bf16.xpose.msra.mxu0 0
      %521 = vmatprep.subr.bf16.mxu0 0
      %522 = vmatpush1.bf16.xpose.msra.mxu0 0
      %523 = vmatprep.subr.bf16.mxu0 0
      %524 = vmatpush1.bf16.xpose.msra.mxu0 0
      %525 = vmatprep.subr.bf16.mxu0 0
      %526 = vmatpush1.bf16.xpose.msra.mxu0 0
      %527 = vmatprep.subr.bf16.mxu0 0
      %528 = vmatpush1.bf16.xpose.msra.mxu0 0
      %529 = vmatprep.subr.bf16.mxu0 0
      %530 = vmatpush1.bf16.xpose.msra.mxu0 0
      %531 = vmatprep.subr.bf16.mxu0 0
      %532 = vmatpush1.bf16.xpose.msra.mxu0 0
      %533 = vmatprep.subr.bf16.mxu0 0
      %534 = vmatpush1.bf16.xpose.msra.mxu0 0
      %535 = vmatprep.subr.bf16.mxu0 0
      %536 = vmatpush1.bf16.xpose.msra.mxu0 0
      %537 = vmatprep.subr.bf16.mxu0 0
      %538 = vmatpush1.bf16.xpose.msra.mxu0 0
      %539 = vmatprep.subr.bf16.mxu0 0
      %540 = vmatpush1.bf16.xpose.msra.mxu0 0
      %541 = vmatprep.subr.bf16.mxu0 0
      %542 = vmatpush1.bf16.xpose.msra.mxu0 0
      %543 = vmatprep.subr.bf16.mxu0 0
      %544 = vmatpush1.bf16.xpose.msra.mxu0 0
      %545 = vmatprep.mubr.bf16.mxu0 0
      %546 = vmatmul.mubr.bf16.gmra.mrb[0].mxu0 %v508
      %v547 = vpop.f32.mrb[0].mxu0
      %v548 = vadd.f32 0.0, %v547
      %v549 = vpop.f32.mrb[0].mxu0
      %v550 = vpop.f32.mrb[0].mxu0
      %v551 = vadd.f32 0.0, %v550
      %v552 = vpop.f32.mrb[0].mxu0
      %553 = vdwg.mxu0
      %v554 = vmul.f32 %v548, 0.35355338
      %v555 = vmul.f32 %v551, 0.35355338
      %v556 = vsel %vm369, %v554, -1e+30
      %v557 = vsel %vm369, %v555, -1e+30
      %v558 = vsel %vm426, %v556, -inf
      %559 = vmax.xlane.f32.xlu0 %v558
      %v560 = vpop.xlane.xlu0 %559
      %v561 = vsel %vm426, %v557, -inf
      %562 = vmax.xlane.f32.xlu0 %v561
      %v563 = vpop.xlane.xlu0 %562
      %v564 = vsub.f32 %v556, %v560
      %v565 = vsub.f32 %v557, %v563
      %v566 = vmul.f32 %v564, 1.442695
      %v567 = vpow.pop %v566
      %v568 = vmul.f32 %v565, 1.442695
      %v569 = vpow.pop %v568
      %v570 = vsel %vm426, %v567, 0.0
      %571 = vadd.xlane.f32.xlu0 %v570
      %v572 = vpop.xlane.xlu0 %571
      %v573 = vsel %vm426, %v569, 0.0
      %574 = vadd.xlane.f32.xlu0 %v573
      %v575 = vpop.xlane.xlu0 %574
      %v576 = vrcp.pop %v572
      %v577 = vmul.f32 1.0, %v576
      %v578 = vrcp.pop %v575
      %v579 = vmul.f32 1.0, %v578
      %v580 = vmul.f32 %v567, %v577
      %v581 = vmul.f32 %v569, %v579
      %v582 = vpack.c.bf16 %v581, %v580
      %583 = vrot.lane.b32.xlu0 %v501, 56
      %v584 = vpop.permute.xlu0 %583
      %v587 = vsel %vm426, %v582, 0
      %589 = vmatprep.subr.bf16.mxu0 0
      %590 = vmatpush1.bf16.msra.mxu0 %v584
      %591 = vmatprep.subr.bf16.mxu0 0
      %592 = vmatpush1.bf16.msra.mxu0 0
      %593 = vmatprep.subr.bf16.mxu0 0
      %594 = vmatpush1.bf16.msra.mxu0 0
      %595 = vmatprep.subr.bf16.mxu0 0
      %596 = vmatpush1.bf16.msra.mxu0 0
      %597 = vmatprep.subr.bf16.mxu0 0
      %598 = vmatpush1.bf16.msra.mxu0 0
      %599 = vmatprep.subr.bf16.mxu0 0
      %600 = vmatpush1.bf16.msra.mxu0 0
      %601 = vmatprep.subr.bf16.mxu0 0
      %602 = vmatpush1.bf16.msra.mxu0 0
      %603 = vmatprep.subr.bf16.mxu0 0
      %604 = vmatpush1.bf16.msra.mxu0 0
      %605 = vmatprep.subr.bf16.mxu0 0
      %606 = vmatpush1.bf16.msra.mxu0 0
      %607 = vmatprep.subr.bf16.mxu0 0
      %608 = vmatpush1.bf16.msra.mxu0 0
      %609 = vmatprep.subr.bf16.mxu0 0
      %610 = vmatpush1.bf16.msra.mxu0 0
      %611 = vmatprep.subr.bf16.mxu0 0
      %612 = vmatpush1.bf16.msra.mxu0 0
      %613 = vmatprep.subr.bf16.mxu0 0
      %614 = vmatpush1.bf16.msra.mxu0 0
      %615 = vmatprep.subr.bf16.mxu0 0
      %616 = vmatpush1.bf16.msra.mxu0 0
      %617 = vmatprep.subr.bf16.mxu0 0
      %618 = vmatpush1.bf16.msra.mxu0 0
      %619 = vmatprep.subr.bf16.mxu0 0
      %620 = vmatpush1.bf16.msra.mxu0 0
      %621 = vmatprep.mubr.bf16.mxu0 0
      %622 = vmatmul.mubr.bf16.gmra.mrb[0].mxu0 %v587
      %v623 = vpop.f32.mrb[0].mxu0
      %v624 = vadd.f32 0.0, %v623
      %v625 = vpop.f32.mrb[0].mxu0
      %v626 = vpop.f32.mrb[0].mxu0
      %v627 = vadd.f32 0.0, %v626
      %v628 = vpop.f32.mrb[0].mxu0
      %629 = vdwg.mxu0
      %v630 = vpack.c.bf16 %v627, %v624
      %632 = vrot.lane.b32.xlu0 %v630, 8
      %v633 = vpop.permute.xlu0 %632
      %vm635 = vcmask 130112
      %636 = vst.msk [vmem:[#allocation3] sm:$0xff] %vm635, %v633
      %v637 = vld [vmem:[#allocation2] sm:$0xff]
      %639 = vrot.lane.b32.xlu0 %v637, 112
      %v640 = vpop.permute.xlu0 %639
      %641 = vrot.lane.b32.xlu0 %v637, 80
      %v642 = vpop.permute.xlu0 %641
      %v644 = vsel %vm374, %v640, 0
      %v647 = vsel %vm374, %v642, 0
      %649 = vmatprep.subr.bf16.mxu0 0
      %650 = vmatpush1.bf16.xpose.msra.mxu0 %v647
      %651 = vmatprep.subr.bf16.mxu0 0
      %652 = vmatpush1.bf16.xpose.msra.mxu0 0
      %653 = vmatprep.subr.bf16.mxu0 0
      %654 = vmatpush1.bf16.xpose.msra.mxu0 0
      %655 = vmatprep.subr.bf16.mxu0 0
      %656 = vmatpush1.bf16.xpose.msra.mxu0 0
      %657 = vmatprep.subr.bf16.mxu0 0
      %658 = vmatpush1.bf16.xpose.msra.mxu0 0
      %659 = vmatprep.subr.bf16.mxu0 0
      %660 = vmatpush1.bf16.xpose.msra.mxu0 0
      %661 = vmatprep.subr.bf16.mxu0 0
      %662 = vmatpush1.bf16.xpose.msra.mxu0 0
      %663 = vmatprep.subr.bf16.mxu0 0
      %664 = vmatpush1.bf16.xpose.msra.mxu0 0
      %665 = vmatprep.subr.bf16.mxu0 0
      %666 = vmatpush1.bf16.xpose.msra.mxu0 0
      %667 = vmatprep.subr.bf16.mxu0 0
      %668 = vmatpush1.bf16.xpose.msra.mxu0 0
      %669 = vmatprep.subr.bf16.mxu0 0
      %670 = vmatpush1.bf16.xpose.msra.mxu0 0
      %671 = vmatprep.subr.bf16.mxu0 0
      %672 = vmatpush1.bf16.xpose.msra.mxu0 0
      %673 = vmatprep.subr.bf16.mxu0 0
      %674 = vmatpush1.bf16.xpose.msra.mxu0 0
      %675 = vmatprep.subr.bf16.mxu0 0
      %676 = vmatpush1.bf16.xpose.msra.mxu0 0
      %677 = vmatprep.subr.bf16.mxu0 0
      %678 = vmatpush1.bf16.xpose.msra.mxu0 0
      %679 = vmatprep.subr.bf16.mxu0 0
      %680 = vmatpush1.bf16.xpose.msra.mxu0 0
      %681 = vmatprep.mubr.bf16.mxu0 0
      %682 = vmatmul.mubr.bf16.gmra.mrb[0].mxu0 %v644
      %v683 = vpop.f32.mrb[0].mxu0
      %v684 = vadd.f32 0.0, %v683
      %v685 = vpop.f32.mrb[0].mxu0
      %v686 = vpop.f32.mrb[0].mxu0
      %v687 = vadd.f32 0.0, %v686
      %v688 = vpop.f32.mrb[0].mxu0
      %689 = vdwg.mxu0
      %v690 = vmul.f32 %v684, 0.35355338
      %v691 = vmul.f32 %v687, 0.35355338
      %v692 = vsel %vm369, %v690, -1e+30
      %v693 = vsel %vm369, %v691, -1e+30
      %v694 = vsel %vm426, %v692, -inf
      %695 = vmax.xlane.f32.xlu0 %v694
      %v696 = vpop.xlane.xlu0 %695
      %v697 = vsel %vm426, %v693, -inf
      %698 = vmax.xlane.f32.xlu0 %v697
      %v699 = vpop.xlane.xlu0 %698
      %v700 = vsub.f32 %v692, %v696
      %v701 = vsub.f32 %v693, %v699
      %v702 = vmul.f32 %v700, 1.442695
      %v703 = vpow.pop %v702
      %v704 = vmul.f32 %v701, 1.442695
      %v705 = vpow.pop %v704
      %v706 = vsel %vm426, %v703, 0.0
      %707 = vadd.xlane.f32.xlu0 %v706
      %v708 = vpop.xlane.xlu0 %707
      %v709 = vsel %vm426, %v705, 0.0
      %710 = vadd.xlane.f32.xlu0 %v709
      %v711 = vpop.xlane.xlu0 %710
      %v712 = vrcp.pop %v708
      %v713 = vmul.f32 1.0, %v712
      %v714 = vrcp.pop %v711
      %v715 = vmul.f32 1.0, %v714
      %v716 = vmul.f32 %v703, %v713
      %v717 = vmul.f32 %v705, %v715
      %v718 = vpack.c.bf16 %v717, %v716
      %719 = vrot.lane.b32.xlu0 %v637, 48
      %v720 = vpop.permute.xlu0 %719
      %v723 = vsel %vm426, %v718, 0
      %725 = vmatprep.subr.bf16.mxu0 0
      %726 = vmatpush1.bf16.msra.mxu0 %v720
      %727 = vmatprep.subr.bf16.mxu0 0
      %728 = vmatpush1.bf16.msra.mxu0 0
      %729 = vmatprep.subr.bf16.mxu0 0
      %730 = vmatpush1.bf16.msra.mxu0 0
      %731 = vmatprep.subr.bf16.mxu0 0
      %732 = vmatpush1.bf16.msra.mxu0 0
      %733 = vmatprep.subr.bf16.mxu0 0
      %734 = vmatpush1.bf16.msra.mxu0 0
      %735 = vmatprep.subr.bf16.mxu0 0
      %736 = vmatpush1.bf16.msra.mxu0 0
      %737 = vmatprep.subr.bf16.mxu0 0
      %738 = vmatpush1.bf16.msra.mxu0 0
      %739 = vmatprep.subr.bf16.mxu0 0
      %740 = vmatpush1.bf16.msra.mxu0 0
      %741 = vmatprep.subr.bf16.mxu0 0
      %742 = vmatpush1.bf16.msra.mxu0 0
      %743 = vmatprep.subr.bf16.mxu0 0
      %744 = vmatpush1.bf16.msra.mxu0 0
      %745 = vmatprep.subr.bf16.mxu0 0
      %746 = vmatpush1.bf16.msra.mxu0 0
      %747 = vmatprep.subr.bf16.mxu0 0
      %748 = vmatpush1.bf16.msra.mxu0 0
      %749 = vmatprep.subr.bf16.mxu0 0
      %750 = vmatpush1.bf16.msra.mxu0 0
      %751 = vmatprep.subr.bf16.mxu0 0
      %752 = vmatpush1.bf16.msra.mxu0 0
      %753 = vmatprep.subr.bf16.mxu0 0
      %754 = vmatpush1.bf16.msra.mxu0 0
      %755 = vmatprep.subr.bf16.mxu0 0
      %756 = vmatpush1.bf16.msra.mxu0 0
      %757 = vmatprep.mubr.bf16.mxu0 0
      %758 = vmatmul.mubr.bf16.gmra.mrb[0].mxu0 %v723
      %v759 = vpop.f32.mrb[0].mxu0
      %v760 = vadd.f32 0.0, %v759
      %v761 = vpop.f32.mrb[0].mxu0
      %v762 = vpop.f32.mrb[0].mxu0
      %v763 = vadd.f32 0.0, %v762
      %v764 = vpop.f32.mrb[0].mxu0
      %765 = vdwg.mxu0
      %v766 = vpack.c.bf16 %v763, %v760
      %768 = vrot.lane.b32.xlu0 %v766, 16
      %v769 = vpop.permute.xlu0 %768
      %vm771 = vcmask 195712
      %772 = vst.msk [vmem:[#allocation3] sm:$0xff] %vm771, %v769
      %v773 = vld [vmem:[#allocation2] sm:$0xff]
      %775 = vrot.lane.b32.xlu0 %v773, 104
      %v776 = vpop.permute.xlu0 %775
      %777 = vrot.lane.b32.xlu0 %v773, 72
      %v778 = vpop.permute.xlu0 %777
      %v780 = vsel %vm374, %v776, 0
      %v783 = vsel %vm374, %v778, 0
      %785 = vmatprep.subr.bf16.mxu0 0
      %786 = vmatpush1.bf16.xpose.msra.mxu0 %v783
      %787 = vmatprep.subr.bf16.mxu0 0
      %788 = vmatpush1.bf16.xpose.msra.mxu0 0
      %789 = vmatprep.subr.bf16.mxu0 0
      %790 = vmatpush1.bf16.xpose.msra.mxu0 0
      %791 = vmatprep.subr.bf16.mxu0 0
      %792 = vmatpush1.bf16.xpose.msra.mxu0 0
      %793 = vmatprep.subr.bf16.mxu0 0
      %794 = vmatpush1.bf16.xpose.msra.mxu0 0
      %795 = vmatprep.subr.bf16.mxu0 0
      %796 = vmatpush1.bf16.xpose.msra.mxu0 0
      %797 = vmatprep.subr.bf16.mxu0 0
      %798 = vmatpush1.bf16.xpose.msra.mxu0 0
      %799 = vmatprep.subr.bf16.mxu0 0
      %800 = vmatpush1.bf16.xpose.msra.mxu0 0
      %801 = vmatprep.subr.bf16.mxu0 0
      %802 = vmatpush1.bf16.xpose.msra.mxu0 0
      %803 = vmatprep.subr.bf16.mxu0 0
      %804 = vmatpush1.bf16.xpose.msra.mxu0 0
      %805 = vmatprep.subr.bf16.mxu0 0
      %806 = vmatpush1.bf16.xpose.msra.mxu0 0
      %807 = vmatprep.subr.bf16.mxu0 0
      %808 = vmatpush1.bf16.xpose.msra.mxu0 0
      %809 = vmatprep.subr.bf16.mxu0 0
      %810 = vmatpush1.bf16.xpose.msra.mxu0 0
      %811 = vmatprep.subr.bf16.mxu0 0
      %812 = vmatpush1.bf16.xpose.msra.mxu0 0
      %813 = vmatprep.subr.bf16.mxu0 0
      %814 = vmatpush1.bf16.xpose.msra.mxu0 0
      %815 = vmatprep.subr.bf16.mxu0 0
      %816 = vmatpush1.bf16.xpose.msra.mxu0 0
      %817 = vmatprep.mubr.bf16.mxu0 0
      %818 = vmatmul.mubr.bf16.gmra.mrb[0].mxu0 %v780
      %v819 = vpop.f32.mrb[0].mxu0
      %v820 = vadd.f32 0.0, %v819
      %v821 = vpop.f32.mrb[0].mxu0
      %v822 = vpop.f32.mrb[0].mxu0
      %v823 = vadd.f32 0.0, %v822
      %v824 = vpop.f32.mrb[0].mxu0
      %825 = vdwg.mxu0
      %v826 = vmul.f32 %v820, 0.35355338
      %v827 = vmul.f32 %v823, 0.35355338
      %v828 = vsel %vm369, %v826, -1e+30
      %v829 = vsel %vm369, %v827, -1e+30
      %v830 = vsel %vm426, %v828, -inf
      %831 = vmax.xlane.f32.xlu0 %v830
      %v832 = vpop.xlane.xlu0 %831
      %v833 = vsel %vm426, %v829, -inf
      %834 = vmax.xlane.f32.xlu0 %v833
      %v835 = vpop.xlane.xlu0 %834
      %v836 = vsub.f32 %v828, %v832
      %v837 = vsub.f32 %v829, %v835
      %v838 = vmul.f32 %v836, 1.442695
      %v839 = vpow.pop %v838
      %v840 = vmul.f32 %v837, 1.442695
      %v841 = vpow.pop %v840
      %v842 = vsel %vm426, %v839, 0.0
      %843 = vadd.xlane.f32.xlu0 %v842
      %v844 = vpop.xlane.xlu0 %843
      %v845 = vsel %vm426, %v841, 0.0
      %846 = vadd.xlane.f32.xlu0 %v845
      %v847 = vpop.xlane.xlu0 %846
      %v848 = vrcp.pop %v844
      %v849 = vmul.f32 1.0, %v848
      %v850 = vrcp.pop %v847
      %v851 = vmul.f32 1.0, %v850
      %v852 = vmul.f32 %v839, %v849
      %v853 = vmul.f32 %v841, %v851
      %v854 = vpack.c.bf16 %v853, %v852
      %855 = vrot.lane.b32.xlu0 %v773, 40
      %v856 = vpop.permute.xlu0 %855
      %v859 = vsel %vm426, %v854, 0
      %861 = vmatprep.subr.bf16.mxu0 0
      %862 = vmatpush1.bf16.msra.mxu0 %v856
      %863 = vmatprep.subr.bf16.mxu0 0
      %864 = vmatpush1.bf16.msra.mxu0 0
      %865 = vmatprep.subr.bf16.mxu0 0
      %866 = vmatpush1.bf16.msra.mxu0 0
      %867 = vmatprep.subr.bf16.mxu0 0
      %868 = vmatpush1.bf16.msra.mxu0 0
      %869 = vmatprep.subr.bf16.mxu0 0
      %870 = vmatpush1.bf16.msra.mxu0 0
      %871 = vmatprep.subr.bf16.mxu0 0
      %872 = vmatpush1.bf16.msra.mxu0 0
      %873 = vmatprep.subr.bf16.mxu0 0
      %874 = vmatpush1.bf16.msra.mxu0 0
      %875 = vmatprep.subr.bf16.mxu0 0
      %876 = vmatpush1.bf16.msra.mxu0 0
      %877 = vmatprep.subr.bf16.mxu0 0
      %878 = vmatpush1.bf16.msra.mxu0 0
      %879 = vmatprep.subr.bf16.mxu0 0
      %880 = vmatpush1.bf16.msra.mxu0 0
      %881 = vmatprep.subr.bf16.mxu0 0
      %882 = vmatpush1.bf16.msra.mxu0 0
      %883 = vmatprep.subr.bf16.mxu0 0
      %884 = vmatpush1.bf16.msra.mxu0 0
      %885 = vmatprep.subr.bf16.mxu0 0
      %886 = vmatpush1.bf16.msra.mxu0 0
      %887 = vmatprep.subr.bf16.mxu0 0
      %888 = vmatpush1.bf16.msra.mxu0 0
      %889 = vmatprep.subr.bf16.mxu0 0
      %890 = vmatpush1.bf16.msra.mxu0 0
      %891 = vmatprep.subr.bf16.mxu0 0
      %892 = vmatpush1.bf16.msra.mxu0 0
      %893 = vmatprep.mubr.bf16.mxu0 0
      %894 = vmatmul.mubr.bf16.gmra.mrb[0].mxu0 %v859
      %v895 = vpop.f32.mrb[0].mxu0
      %v896 = vadd.f32 0.0, %v895
      %v897 = vpop.f32.mrb[0].mxu0
      %v898 = vpop.f32.mrb[0].mxu0
      %v899 = vadd.f32 0.0, %v898
      %v900 = vpop.f32.mrb[0].mxu0
      %901 = vdwg.mxu0
      %v902 = vpack.c.bf16 %v899, %v896
      %904 = vrot.lane.b32.xlu0 %v902, 24
      %v905 = vpop.permute.xlu0 %904
      %vm907 = vcmask 261312
      %908 = vst.msk [vmem:[#allocation3] sm:$0xff] %vm907, %v905
      %v909 = vld [vmem:[#allocation3] sm:$0xff]
      %v910 = vld [vmem:[%s4] sm:$0xf]
      %v911 = vld [vmem:[%s4 + $0x4] sm:$0xf]
      %v912 = vld [vmem:[%s4 + $0x8] sm:$0xf]
      %v913 = vld [vmem:[%s4 + $0xc] sm:$0xf]
      %v914 = vld [vmem:[%s5] sm:$0x1]
      %v916 = vlaneseq
      %v917 = vshrl.u32 %v916, 7
      %v918 = vsub.s32 0, %v917
      %v919 = vrot.slane %v914, %v918
      %v925 = vunpack.c.l.b16 %v910
      %v926 = vunpack.c.l.b16 %v911
      %v927 = vunpack.c.l.b16 %v912
      %v928 = vunpack.c.l.b16 %v913
      %v929 = vpack.c.b16 %v926, %v925
      %v930 = vpack.c.b16 %v928, %v927
      %v934 = vsel %vm257, %v909, 0
      %936 = vmatprep.subr.bf16.mxu0 0
      %937 = vmatpush1.bf16.msra.mxu0 %v929
      %938 = vmatprep.subr.bf16.mxu0 0
      %939 = vmatpush1.bf16.msra.mxu0 %v930
      %940 = vmatprep.subr.bf16.mxu0 0
      %941 = vmatpush1.bf16.msra.mxu0 0
      %942 = vmatprep.subr.bf16.mxu0 0
      %943 = vmatpush1.bf16.msra.mxu0 0
      %944 = vmatprep.subr.bf16.mxu0 0
      %945 = vmatpush1.bf16.msra.mxu0 0
      %946 = vmatprep.subr.bf16.mxu0 0
      %947 = vmatpush1.bf16.msra.mxu0 0
      %948 = vmatprep.subr.bf16.mxu0 0
      %949 = vmatpush1.bf16.msra.mxu0 0
      %950 = vmatprep.subr.bf16.mxu0 0
      %951 = vmatpush1.bf16.msra.mxu0 0
      %952 = vmatprep.subr.bf16.mxu0 0
      %953 = vmatpush1.bf16.msra.mxu0 0
      %954 = vmatprep.subr.bf16.mxu0 0
      %955 = vmatpush1.bf16.msra.mxu0 0
      %956 = vmatprep.subr.bf16.mxu0 0
      %957 = vmatpush1.bf16.msra.mxu0 0
      %958 = vmatprep.subr.bf16.mxu0 0
      %959 = vmatpush1.bf16.msra.mxu0 0
      %960 = vmatprep.subr.bf16.mxu0 0
      %961 = vmatpush1.bf16.msra.mxu0 0
      %962 = vmatprep.subr.bf16.mxu0 0
      %963 = vmatpush1.bf16.msra.mxu0 0
      %964 = vmatprep.subr.bf16.mxu0 0
      %965 = vmatpush1.bf16.msra.mxu0 0
      %966 = vmatprep.subr.bf16.mxu0 0
      %967 = vmatpush1.bf16.msra.mxu0 0
      %968 = vmatprep.mubr.bf16.mxu0 0
      %969 = vmatmul.mubr.bf16.gmra.mrb[0].mxu0 %v934
      %v970 = vpop.f32.mrb[0].mxu0
      %v971 = vadd.f32 %v919, %v970
      %v972 = vpop.f32.mrb[0].mxu0
      %v973 = vpop.f32.mrb[0].mxu0
      %v974 = vadd.f32 %v919, %v973
      %v975 = vpop.f32.mrb[0].mxu0
      %976 = vdwg.mxu0
      %v977 = vld [vmem:[%s246] sm:$0xf]
      %v978 = vld [vmem:[%s246 + $0x4] sm:$0xf]
      %v979 = vunpack.c.l.bf16 %v977
      %v980 = vunpack.c.l.bf16 %v978
      %v981 = vadd.f32 %v971, %v979
      %v982 = vadd.f32 %v974, %v980
      %v983 = vpack.c.bf16 %v982, %v981
      %v985 = vunpack.c.l.b16 %v983
      %v986 = vunpack.c.h.b16 %v983
      %v987 = vpack.c.b16 %v985, %v985
      %v988 = vpack.c.b16 %v986, %v986
      %vm991 = vcmask 257024
      %992 = vst.msk [vmem:[%s251] sm:$0xf] %vm991, %v987
      %993 = vst.msk [vmem:[%s251 + $0x4] sm:$0xf] %vm991, %v988
      %p994 = scmp.lt.s32.totalorder %s17, 1
      %s995 = scalar_select %p994, %s17, 1
      %s996 = smul.addr %s995, 2
      %s997 = smul.addr %s996, 4
      %s998 = scalar_lea.vmem %s6, %s997
      // Predicated region
      $region45: #{_lambda_.17} parent=43 // pred_check
        %p999 = pneg %p166
      $region46: #{_lambda_.17} parent=43 // pred_check_branch
        %1001 = sbr.rel (%p999) target = $region48
      $region47: #{_lambda_.17} parent=43 // pred_region
        _
      $region48: #{_lambda_.17} parent=43 // pred_fallthru
        _
    $region44: #{_lambda_.17} parent=5 // pred_fallthru
      _
    %p1002 = scmp.le.s32.totalorder 2, %s12
    // Predicated region
    $region49: #{_lambda_.17} parent=5 // pred_check
      %p1003 = pneg %p1002
    $region50: #{_lambda_.17} parent=5 // pred_check_branch
      %1005 = sbr.rel (%p1003) target = $region52
    $region51: #{_lambda_.17} parent=5 // pred_region
      %s1006 = ssub.s32 %s12, 2
      // Predicated region
      $region53: #{_lambda_.17} parent=51 // pred_check
        %p1007 = pneg %p172
      $region54: #{_lambda_.17} parent=51 // pred_check_branch
        %1009 = sbr.rel (%p1007) target = $region56
      $region55: #{_lambda_.17} parent=51 // pred_region
        %p1010 = scmp.lt.s32.totalorder %s18, 1
        %s1011 = scalar_select %p1010, %s18, 1
        %s1012 = smul.addr %s1011, 2
        %s1013 = smul.addr %s1012, 4
        %s1014 = scalar_lea.vmem %s6, %s1013
      $region56: #{_lambda_.17} parent=51 // pred_fallthru
        _
    $region52: #{_lambda_.17} parent=5 // pred_fallthru
      _
  $region6: #{_lambda_.17} parent=0 // loop_footer
    %s16 = sadd.s32 1, %s12
  $region7: #{_lambda_.17} parent=0 // loop_footer_branch
    %11 = sbr.rel target = $region3
  $region8: #{_lambda_.17} parent=0 // loop_exit
    _

</llo_original>
